<compile_context>
chip_gen: v7x
topology: tpu7x:2x2x1
jax: 0.10.0
libtpu: 0.0.40
codegen_flags: <defaults>
</compile_context>

<pallas_src>
import jax
import jax.numpy as jnp
from jax.experimental import pallas as pl
from jax.experimental.pallas import tpu as pltpu

# ----------------------- synthetic (scaled-down) config -----------------------
D = 32            # transformer width          (real ViT-H-14 text: 1024)
H = 4             # attention heads            (real: 16)
DH = D // H       # head dim
S = 8             # tokenizer.model_max_length (real: 77 -> pad to 80 at real scale)
N_CHUNKS = 3      # number of 77-token chunks  (real: 3)
MAX_LEN = N_CHUNKS * (S - 2) + 2   # = 20      (real: 227)
MLP = 4 * D       # mlp hidden
N_LAYERS = 2      # resblocks                  (real: 24)
VOCAB = 512
PAD_ID = 0        # pad_token='!' -> id 0 in CLIP BPE (pad != eos branch)
EOS_ID = VOCAB - 1
SOT_ID = VOCAB - 2
LN_EPS = 1e-5


# ------------------------------- Pallas kernel --------------------------------
def _layernorm(x, g, b):
    # f32 math on the VPU (v5e has no bf16 VPU).
    mu = jnp.mean(x, axis=-1, keepdims=True)
    var = jnp.mean((x - mu) * (x - mu), axis=-1, keepdims=True)
    return (x - mu) * jax.lax.rsqrt(var + LN_EPS) * g + b


def _encoder_kernel(x_ref, ln1g_ref, ln1b_ref, wqkv_ref, bqkv_ref,
                    wo_ref, bo_ref, ln2g_ref, ln2b_ref,
                    w1_ref, b1_ref, w2_ref, b2_ref,
                    lnfg_ref, lnfb_ref, mask_ref, o_ref, x_vmem):
    """One OpenCLIP ResidualAttentionBlock per (batch_block, layer) grid step.

    Activations live in x_vmem across the trailing 'arbitrary' layer axis; the
    per-layer weight blocks are streamed (double-buffered) by the pipeline so
    only ~2 layers of weights are ever VMEM-resident.
    """
    l = pl.program_id(1)
    tb, s, d = x_ref.shape
    rows = tb * s

    @pl.when(l == 0)
    def _():
        x_vmem[...] = x_ref[...].reshape(rows, d)

    x = x_vmem[...]                                            # (rows, D) f32

    # ---- attention branch: x + attn(ln_1(x), attn_mask) ----
    h = _layernorm(x, ln1g_ref[...], ln1b_ref[...])
    qkv = (jnp.dot(h.astype(jnp.bfloat16), wqkv_ref[...],
                   preferred_element_type=jnp.float32) + bqkv_ref[...])  # (rows, 3D) f32
    qkv = qkv.astype(jnp.bfloat16)                             # cast once (not per head)

    # Additive causal mask, pre-broadcast once per layer step.  Diagonal stays 0
    # so exp never sees an all -inf row; at real scale (S padded 77->80) mask the
    # padded key columns but keep padded query rows' diagonal finite.
    mask = jnp.broadcast_to(mask_ref[...][None, :, :], (tb, s, s))

    # Per-head scores / context as tb-batched 3-D einsums.  A fully head-batched
    # 4-D einsum (two batch dims) or a (tb,s,H,DH)->(tb,H,s,DH) sublane transpose
    # is not guaranteed to lower in Mosaic, so heads remain a small static loop;
    # at real scale (DH=64) slice heads in 128-lane-aligned pairs or feed
    # head-major q/k/v from HBM.
    ctx_heads = []
    for hh in range(H):
        # 1/sqrt(DH) is already folded into the q columns of w_qkv/b_qkv.
        q = qkv[:, 0 * d + hh * DH: 0 * d + (hh + 1) * DH].reshape(tb, s, DH)
        k = qkv[:, 1 * d + hh * DH: 1 * d + (hh + 1) * DH].reshape(tb, s, DH)
        v = qkv[:, 2 * d + hh * DH: 2 * d + (hh + 1) * DH].reshape(tb, s, DH)

        sc = jnp.einsum('bqd,bkd->bqk', q, k,
                        preferred_element_type=jnp.float32) + mask     # (tb, s, s)
        sc_max = jnp.max(sc, axis=-1, keepdims=True)
        e = jnp.exp(sc - sc_max)
        p = (e / jnp.sum(e, axis=-1, keepdims=True)).astype(jnp.bfloat16)  # exact recip
        ctx = jnp.einsum('bqk,bkd->bqd', p, v,
                         preferred_element_type=jnp.float32)            # (tb, s, DH)
        ctx_heads.append(ctx.reshape(rows, DH))

    # Single full-K output projection on a lane-contiguous context:
    # one lane concat per layer instead of H K=DH matmuls (MXU-fill fix).
    ctx_all = jnp.concatenate(ctx_heads, axis=-1).astype(jnp.bfloat16)   # (rows, D)
    attn = (jnp.dot(ctx_all, wo_ref[...],
                    preferred_element_type=jnp.float32) + bo_ref[...])
    x = x + attn

    # ---- mlp branch: x + mlp(ln_2(x)) ----
    h2 = _layernorm(x, ln2g_ref[...], ln2b_ref[...])
    m = (jnp.dot(h2.astype(jnp.bfloat16), w1_ref[...],
                 preferred_element_type=jnp.float32) + b1_ref[...])
    # TODO(synk): open_clip uses exact erf-based nn.GELU; tanh approximation used
    # here because erf has no guaranteed Mosaic lowering.
    m = jax.nn.gelu(m, approximate=True)
    m = (jnp.dot(m.astype(jnp.bfloat16), w2_ref[...],
                 preferred_element_type=jnp.float32) + b2_ref[...])
    x = x + m

    x_vmem[...] = x

    # layer='last' + legacy=True: ln_final on the last resblock output, then the
    # single (lane-dense at real D=1024) HBM store of this batch block.
    @pl.when(l == pl.num_programs(1) - 1)
    def _():
        y = _layernorm(x, lnfg_ref[...], lnfb_ref[...])
        o_ref[...] = y.reshape(tb, s, d).astype(o_ref.dtype)


# ------------------------------ wrapper helpers -------------------------------
def _num_tensorcores():
    """Best-effort TensorCore count: v7x has 2 TCs per chip, v5e/v6e have 1."""
    try:
        return max(1, int(getattr(jax.devices()[0], "num_cores", 1)))
    except Exception:
        return 1


def _pick_tb(bn, n_cores):
    """Largest batch block dividing Bn while keeping >= n_cores grid steps.
    On single-core parts (v5e/v6e) this gives ONE big batch block (max M dim,
    no per-step overhead); on v7x it keeps >=2 parallel steps for megacore."""
    best = 1
    for tb in range(1, bn + 1):
        if bn % tb == 0 and bn // tb >= max(1, n_cores):
            best = tb
    return best


def _vmem_limit_bytes():
    """~7/8 of physical VMEM: ~112 MiB on v5e/v6e (128 MiB), ~56 MiB on v7x (64 MiB)."""
    try:
        cap = int(pltpu.get_tpu_info().vmem_capacity_bytes)
    except Exception:
        cap = 128 * 1024 * 1024
    return int(min((cap * 7) // 8, 112 * 1024 * 1024))


def encode_with_transformer(x, params):
    """x: (Bn, S, D) f32 embedded tokens -> (Bn, S, D) f32.  One fused pallas_call
    with a (batch, layer) grid: batch 'parallel', layer 'arbitrary' (streamed)."""
    Bn, s, d = x.shape
    tb = _pick_tb(Bn, _num_tensorcores())
    nb = Bn // tb

    layer_keys = ("ln1_g", "ln1_b", "w_qkv", "b_qkv", "w_out", "b_out",
                  "ln2_g", "ln2_b", "w_fc1", "b_fc1", "w_fc2", "b_fc2")
    const_keys = ("ln_final_g", "ln_final_b", "attn_mask")

    def layer_spec(arr):
        # Leading layer dim squeezed out; index map picks the current layer ->
        # the pipeline double-buffers one layer of weights ahead (streaming).
        nd = arr.ndim
        return pl.BlockSpec((None,) + arr.shape[1:],
                            lambda b, l, _nd=nd: (l,) + (0,) * (_nd - 1))

    def const_spec(arr):
        nd = arr.ndim
        return pl.BlockSpec(arr.shape, lambda b, l, _nd=nd: (0,) * _nd)

    in_specs = [pl.BlockSpec((tb, s, d), lambda b, l: (b, 0, 0))]
    in_specs += [layer_spec(params[k]) for k in layer_keys]
    in_specs += [const_spec(params[k]) for k in const_keys]

    return pl.pallas_call(
        _encoder_kernel,
        out_shape=jax.ShapeDtypeStruct((Bn, s, d), jnp.float32),
        grid=(nb, N_LAYERS),
        in_specs=in_specs,
        out_specs=pl.BlockSpec((tb, s, d), lambda b, l: (b, 0, 0)),
        scratch_shapes=[pltpu.VMEM((tb * s, d), jnp.float32)],   # resident activations
        compiler_params=pltpu.CompilerParams(
            dimension_semantics=("parallel", "arbitrary"),
            vmem_limit_bytes=_vmem_limit_bytes(),
        ),
    )(x, *[params[k] for k in layer_keys], *[params[k] for k in const_keys])


# -------------------------------- parameters ----------------------------------
def init_params(key):
    def nrm(k, shape, scale=0.02):
        return (scale * jax.random.normal(k, shape)).astype(jnp.float32)

    keys = jax.random.split(key, 2 + N_LAYERS)
    q_scale = 1.0 / (DH ** 0.5)

    w_qkv, b_qkv, w_out, w_fc1, w_fc2 = [], [], [], [], []
    for li in range(N_LAYERS):
        ks = jax.random.split(keys[2 + li], 4)
        wq = nrm(ks[0], (D, 3 * D))
        bq = jnp.zeros((1, 3 * D), jnp.float32)
        # fold the 1/sqrt(DH) attention scale into the q projection (free at runtime)
        wq = wq.at[:, :D].multiply(q_scale)
        bq = bq.at[:, :D].multiply(q_scale)
        w_qkv.append(wq)
        b_qkv.append(bq)
        w_out.append(nrm(ks[1], (D, D)))          # full (D, D) -> single full-K matmul
        w_fc1.append(nrm(ks[2], (D, MLP)))
        w_fc2.append(nrm(ks[3], (MLP, D)))

    params = {
        "token_embedding": nrm(keys[0], (VOCAB, D)),
        "positional_embedding": nrm(keys[1], (S, D), 0.01),
        # Per-layer params stacked with a leading layer dim: each layer's block is
        # streamed through VMEM by the (batch, layer) grid.  Matmul weights bf16
        # (f32 accumulation in-kernel); LN params / biases stay f32.
        "ln1_g": jnp.ones((N_LAYERS, 1, D), jnp.float32),
        "ln1_b": jnp.zeros((N_LAYERS, 1, D), jnp.float32),
        "w_qkv": jnp.stack(w_qkv).astype(jnp.bfloat16),          # (L, D, 3D)
        "b_qkv": jnp.stack(b_qkv),                               # (L, 1, 3D) f32
        "w_out": jnp.stack(w_out).astype(jnp.bfloat16),          # (L, D, D)
        "b_out": jnp.zeros((N_LAYERS, 1, D), jnp.float32),
        "ln2_g": jnp.ones((N_LAYERS, 1, D), jnp.float32),
        "ln2_b": jnp.zeros((N_LAYERS, 1, D), jnp.float32),
        "w_fc1": jnp.stack(w_fc1).astype(jnp.bfloat16),          # (L, D, MLP)
        "b_fc1": jnp.zeros((N_LAYERS, 1, MLP), jnp.float32),
        "w_fc2": jnp.stack(w_fc2).astype(jnp.bfloat16),          # (L, MLP, D)
        "b_fc2": jnp.zeros((N_LAYERS, 1, D), jnp.float32),
        "ln_final_g": jnp.ones((1, D), jnp.float32),
        "ln_final_b": jnp.zeros((1, D), jnp.float32),
        # open_clip build_attention_mask: upper triangle (above diag) = -inf
        "attn_mask": jnp.triu(jnp.full((S, S), -jnp.inf, jnp.float32), k=1),
    }
    return params


# ---------------------------- forward (module glue) ----------------------------
def process_input_ids(input_ids):
    """Chunk (B, MAX_LEN) ids into (B, N_CHUNKS, S) with sot/eos re-framing
    (pad_token_id != eos_token_id branch)."""
    chunks = []
    for i in range(1, MAX_LEN - S + 2, S - 2):
        c = jnp.concatenate(
            [input_ids[:, :1], input_ids[:, i:i + S - 2], input_ids[:, -1:]],
            axis=1)                                   # (B, S)
        last2 = c[:, -2]
        new_last = jnp.where((last2 != EOS_ID) & (last2 != PAD_ID), EOS_ID, c[:, -1])
        c = c.at[:, -1].set(new_last)
        new_1 = jnp.where(c[:, 1] == PAD_ID, EOS_ID, c[:, 1])
        c = c.at[:, 1].set(new_1)
        chunks.append(c)
    return jnp.stack(chunks, axis=1)                  # (B, N_CHUNKS, S)


def process_hidden_state(z, batch_size):
    hs = z.reshape((batch_size, -1, z.shape[-1]))     # (B, N_CHUNKS*S, D)
    parts = [hs[:, 0:1]]
    for i in range(1, MAX_LEN, S):
        parts.append(hs[:, i:i + S - 2])
    parts.append(hs[:, -1:])
    return jnp.concatenate(parts, axis=1)             # (B, MAX_LEN, D)


def frozen_openclip_embedder2_forward(input_ids, params):
    """input_ids: int32 (B, MAX_LEN) pre-tokenized ids (the CLIP BPE tokenizer
    has no kernel equivalent).  Returns (B, MAX_LEN, D) — layer='last', legacy=True."""
    B = input_ids.shape[0]
    ids = process_input_ids(input_ids).reshape(-1, S)            # (B*N_CHUNKS, S)

    # token_embedding lookup + positional_embedding (glue: gather + add)
    x = jnp.take(params["token_embedding"], ids, axis=0)
    x = x + params["positional_embedding"][None, :, :]           # (B*N, S, D) f32

    # transformer resblocks + ln_final: single fused Pallas kernel
    z = encode_with_transformer(x, params)

    return process_hidden_state(z, B)


# ------------------------------------ main -------------------------------------
if __name__ == "__main__":
    key = jax.random.PRNGKey(0)
    pkey, tkey = jax.random.split(key)
    params = init_params(pkey)

    B = 2
    input_ids = jax.random.randint(tkey, (B, MAX_LEN), 1, VOCAB - 2, dtype=jnp.int32)
    input_ids = input_ids.at[:, 0].set(SOT_ID)       # sot token
    input_ids = input_ids.at[:, 10:].set(PAD_ID)     # trailing padding
    input_ids = input_ids.at[:, 9].set(EOS_ID)       # eos
    input_ids = input_ids.at[:, -1].set(EOS_ID)

    out = frozen_openclip_embedder2_forward(input_ids, params)
    out = jax.block_until_ready(out)

    assert out.shape == (B, MAX_LEN, D), out.shape
    assert out.dtype == jnp.float32
    assert bool(jnp.all(jnp.isfinite(out)))
    print("KERNEL_OK")
</pallas_src>

<mosaic_0001>
module attributes {stable_mosaic.version = 11 : i64} {
  func.func @_encoder_kernel(%arg0: i32, %arg1: i32, %arg2: memref<6x8x32xf32, #tpu.memory_space<vmem>>, %arg3: memref<1x1x32xf32, #tpu.memory_space<vmem>>, %arg4: memref<1x1x32xf32, #tpu.memory_space<vmem>>, %arg5: memref<1x32x96xbf16, #tpu.memory_space<vmem>>, %arg6: memref<1x1x96xf32, #tpu.memory_space<vmem>>, %arg7: memref<1x32x32xbf16, #tpu.memory_space<vmem>>, %arg8: memref<1x1x32xf32, #tpu.memory_space<vmem>>, %arg9: memref<1x1x32xf32, #tpu.memory_space<vmem>>, %arg10: memref<1x1x32xf32, #tpu.memory_space<vmem>>, %arg11: memref<1x32x128xbf16, #tpu.memory_space<vmem>>, %arg12: memref<1x1x128xf32, #tpu.memory_space<vmem>>, %arg13: memref<1x128x32xbf16, #tpu.memory_space<vmem>>, %arg14: memref<1x1x32xf32, #tpu.memory_space<vmem>>, %arg15: memref<1x32xf32, #tpu.memory_space<vmem>>, %arg16: memref<1x32xf32, #tpu.memory_space<vmem>>, %arg17: memref<8x8xf32, #tpu.memory_space<vmem>>, %arg18: memref<6x8x32xf32, #tpu.memory_space<vmem>>, %arg19: memref<48x32xf32, #tpu.memory_space<vmem>>) attributes {dimension_semantics = [#tpu.dimension_semantics<parallel>, #tpu.dimension_semantics<arbitrary>], iteration_bounds = array<i64: 1, 2>, scalar_prefetch = 0 : i64, scratch_operands = 1 : i64, tpu.core_type = #tpu.core_type<tc>, window_params = [{transform_indices = @transform_0, window_bounds = array<i64: 6, 8, 32>}, {transform_indices = @transform_1, window_bounds = array<i64: 1, 1, 32>}, {transform_indices = @transform_2, window_bounds = array<i64: 1, 1, 32>}, {transform_indices = @transform_3, window_bounds = array<i64: 1, 32, 96>}, {transform_indices = @transform_4, window_bounds = array<i64: 1, 1, 96>}, {transform_indices = @transform_5, window_bounds = array<i64: 1, 32, 32>}, {transform_indices = @transform_6, window_bounds = array<i64: 1, 1, 32>}, {transform_indices = @transform_7, window_bounds = array<i64: 1, 1, 32>}, {transform_indices = @transform_8, window_bounds = array<i64: 1, 1, 32>}, {transform_indices = @transform_9, window_bounds = array<i64: 1, 32, 128>}, {transform_indices = @transform_10, window_bounds = array<i64: 1, 1, 128>}, {transform_indices = @transform_11, window_bounds = array<i64: 1, 128, 32>}, {transform_indices = @transform_12, window_bounds = array<i64: 1, 1, 32>}, {pipeline_mode = #tpu.pipeline_mode<synchronous>, transform_indices = @transform_13, window_bounds = array<i64: 1, 32>}, {pipeline_mode = #tpu.pipeline_mode<synchronous>, transform_indices = @transform_14, window_bounds = array<i64: 1, 32>}, {pipeline_mode = #tpu.pipeline_mode<synchronous>, transform_indices = @transform_15, window_bounds = array<i64: 8, 8>}, {transform_indices = @transform_16, window_bounds = array<i64: 6, 8, 32>}]} {
    %c0_i32 = arith.constant 0 : i32
    %0 = arith.cmpi eq, %arg1, %c0_i32 : i32
    %1 = arith.extui %0 : i1 to i32
    %c0_i32_0 = arith.constant 0 : i32
    %2 = arith.cmpi ne, %1, %c0_i32_0 : i32
    scf.if %2 {
      %c0_76 = arith.constant 0 : index
      %c0_77 = arith.constant 0 : index
      %c0_78 = arith.constant 0 : index
      %197 = vector.load %arg2[%c0_76, %c0_77, %c0_78] : memref<6x8x32xf32, #tpu.memory_space<vmem>>, vector<6x8x32xf32>
      %198 = vector.shape_cast %197 : vector<6x8x32xf32> to vector<48x32xf32>
      %c0_79 = arith.constant 0 : index
      %c0_80 = arith.constant 0 : index
      %199 = vector.load %arg19[%c0_79, %c0_80] : memref<48x32xf32, #tpu.memory_space<vmem>>, vector<48x32xf32>
      tpu.vector_store %arg19[%c0_79, %c0_80], %198 {strides = array<i32>} : memref<48x32xf32, #tpu.memory_space<vmem>>, vector<48x32xf32>,
    } else {
    }
    %c0 = arith.constant 0 : index
    %c0_1 = arith.constant 0 : index
    %3 = vector.load %arg19[%c0, %c0_1] : memref<48x32xf32, #tpu.memory_space<vmem>>, vector<48x32xf32>
    %c0_2 = arith.constant 0 : index
    %c0_3 = arith.constant 0 : index
    %c0_4 = arith.constant 0 : index
    %4 = vector.load %arg3[%c0_2, %c0_3, %c0_4] : memref<1x1x32xf32, #tpu.memory_space<vmem>>, vector<1x1x32xf32>
    %5 = vector.shape_cast %4 : vector<1x1x32xf32> to vector<1x32xf32>
    %c0_5 = arith.constant 0 : index
    %c0_6 = arith.constant 0 : index
    %c0_7 = arith.constant 0 : index
    %6 = vector.load %arg4[%c0_5, %c0_6, %c0_7] : memref<1x1x32xf32, #tpu.memory_space<vmem>>, vector<1x1x32xf32>
    %7 = vector.shape_cast %6 : vector<1x1x32xf32> to vector<1x32xf32>
    %cst = arith.constant dense<0.000000e+00> : vector<48xf32>
    %8 = vector.multi_reduction <add>, %3, %cst [1] : vector<48x32xf32> to vector<48xf32>
    %9 = vector.shape_cast %8 : vector<48xf32> to vector<48x1xf32>
    %cst_8 = arith.constant 3.200000e+01 : f32
    %10 = vector.broadcast %cst_8 : f32 to vector<48x1xf32>
    %11 = arith.divf %9, %10 : vector<48x1xf32>
    %12 = vector.broadcast %11 : vector<48x1xf32> to vector<48x32xf32>
    %13 = arith.subf %3, %12 : vector<48x32xf32>
    %14 = vector.broadcast %11 : vector<48x1xf32> to vector<48x32xf32>
    %15 = arith.subf %3, %14 : vector<48x32xf32>
    %16 = arith.mulf %13, %15 : vector<48x32xf32>
    %cst_9 = arith.constant dense<0.000000e+00> : vector<48xf32>
    %17 = vector.multi_reduction <add>, %16, %cst_9 [1] : vector<48x32xf32> to vector<48xf32>
    %18 = vector.shape_cast %17 : vector<48xf32> to vector<48x1xf32>
    %cst_10 = arith.constant 3.200000e+01 : f32
    %19 = vector.broadcast %cst_10 : f32 to vector<48x1xf32>
    %20 = arith.divf %18, %19 : vector<48x1xf32>
    %21 = vector.broadcast %11 : vector<48x1xf32> to vector<48x32xf32>
    %22 = arith.subf %3, %21 : vector<48x32xf32>
    %cst_11 = arith.constant 9.99999974E-6 : f32
    %23 = vector.broadcast %cst_11 : f32 to vector<48x1xf32>
    %24 = arith.addf %20, %23 : vector<48x1xf32>
    %25 = math.rsqrt %24 : vector<48x1xf32>
    %26 = vector.broadcast %25 : vector<48x1xf32> to vector<48x32xf32>
    %27 = arith.mulf %22, %26 : vector<48x32xf32>
    %28 = vector.broadcast %5 : vector<1x32xf32> to vector<48x32xf32>
    %29 = arith.mulf %27, %28 : vector<48x32xf32>
    %30 = vector.broadcast %7 : vector<1x32xf32> to vector<48x32xf32>
    %31 = arith.addf %29, %30 : vector<48x32xf32>
    %32 = arith.truncf %31 : vector<48x32xf32> to vector<48x32xbf16>
    %c0_12 = arith.constant 0 : index
    %c0_13 = arith.constant 0 : index
    %c0_14 = arith.constant 0 : index
    %33 = vector.load %arg5[%c0_12, %c0_13, %c0_14] : memref<1x32x96xbf16, #tpu.memory_space<vmem>>, vector<1x32x96xbf16>
    %34 = vector.shape_cast %33 : vector<1x32x96xbf16> to vector<32x96xbf16>
    %cst_15 = arith.constant dense<0.000000e+00> : vector<48x96xf32>
    %35 = tpu.matmul %32, %34, %cst_15 {dimension_numbers = #tpu.dot_dimension_numbers<[1], [0], [0], [1], [0, 0, 1, 1], [], []>} : vector<48x32xbf16>, vector<32x96xbf16>, vector<48x96xf32> -> vector<48x96xf32>
    %c0_16 = arith.constant 0 : index
    %c0_17 = arith.constant 0 : index
    %c0_18 = arith.constant 0 : index
    %36 = vector.load %arg6[%c0_16, %c0_17, %c0_18] : memref<1x1x96xf32, #tpu.memory_space<vmem>>, vector<1x1x96xf32>
    %37 = vector.shape_cast %36 : vector<1x1x96xf32> to vector<1x96xf32>
    %38 = vector.broadcast %37 : vector<1x96xf32> to vector<48x96xf32>
    %39 = arith.addf %35, %38 : vector<48x96xf32>
    %40 = arith.truncf %39 : vector<48x96xf32> to vector<48x96xbf16>
    %c0_19 = arith.constant 0 : index
    %c0_20 = arith.constant 0 : index
    %41 = vector.load %arg17[%c0_19, %c0_20] : memref<8x8xf32, #tpu.memory_space<vmem>>, vector<8x8xf32>
    %42 = vector.shape_cast %41 : vector<8x8xf32> to vector<1x8x8xf32>
    %43 = vector.shape_cast %42 : vector<1x8x8xf32> to vector<1x8x8xf32>
    %44 = vector.broadcast %43 : vector<1x8x8xf32> to vector<6x8x8xf32>
    %45 = vector.extract_strided_slice %40 {offsets = [0, 0], sizes = [48, 8], strides = [1, 1]} : vector<48x96xbf16> to vector<48x8xbf16>
    %46 = vector.shape_cast %45 : vector<48x8xbf16> to vector<6x8x8xbf16>
    %47 = vector.extract_strided_slice %40 {offsets = [0, 32], sizes = [48, 8], strides = [1, 1]} : vector<48x96xbf16> to vector<48x8xbf16>
    %48 = vector.shape_cast %47 : vector<48x8xbf16> to vector<6x8x8xbf16>
    %49 = vector.extract_strided_slice %40 {offsets = [0, 64], sizes = [48, 8], strides = [1, 1]} : vector<48x96xbf16> to vector<48x8xbf16>
    %50 = vector.shape_cast %49 : vector<48x8xbf16> to vector<6x8x8xbf16>
    "tpu.trace_start"() <{level = 10 : i32, message = "bqd,bkd->bqk"}> : () -> ()
    %cst_21 = arith.constant dense<0.000000e+00> : vector<6x8x8xf32>
    %51 = tpu.matmul %46, %48, %cst_21 {dimension_numbers = #tpu.dot_dimension_numbers<[2], [2], [1], [1], [0, 0, 0, 1, 1, 1], [0], [0]>} : vector<6x8x8xbf16>, vector<6x8x8xbf16>, vector<6x8x8xf32> -> vector<6x8x8xf32>
    "tpu.trace_stop"() : () -> ()
    %52 = arith.addf %51, %44 : vector<6x8x8xf32>
    %cst_22 = arith.constant dense<0xFF800000> : vector<6x8xf32>
    %53 = vector.multi_reduction <maximumf>, %52, %cst_22 [2] : vector<6x8x8xf32> to vector<6x8xf32>
    %54 = vector.shape_cast %53 : vector<6x8xf32> to vector<6x8x1xf32>
    %55 = vector.broadcast %54 : vector<6x8x1xf32> to vector<6x8x8xf32>
    %56 = arith.subf %52, %55 : vector<6x8x8xf32>
    %57 = math.exp %56 : vector<6x8x8xf32>
    %cst_23 = arith.constant dense<0.000000e+00> : vector<6x8xf32>
    %58 = vector.multi_reduction <add>, %57, %cst_23 [2] : vector<6x8x8xf32> to vector<6x8xf32>
    %59 = vector.shape_cast %58 : vector<6x8xf32> to vector<6x8x1xf32>
    %60 = vector.broadcast %59 : vector<6x8x1xf32> to vector<6x8x8xf32>
    %61 = arith.divf %57, %60 : vector<6x8x8xf32>
    %62 = arith.truncf %61 : vector<6x8x8xf32> to vector<6x8x8xbf16>
    "tpu.trace_start"() <{level = 10 : i32, message = "bqk,bkd->bqd"}> : () -> ()
    %cst_24 = arith.constant dense<0.000000e+00> : vector<6x8x8xf32>
    %63 = tpu.matmul %62, %50, %cst_24 {dimension_numbers = #tpu.dot_dimension_numbers<[2], [1], [1], [2], [0, 0, 0, 1, 1, 2], [0], [0]>} : vector<6x8x8xbf16>, vector<6x8x8xbf16>, vector<6x8x8xf32> -> vector<6x8x8xf32>
    "tpu.trace_stop"() : () -> ()
    %64 = vector.shape_cast %63 : vector<6x8x8xf32> to vector<48x8xf32>
    %65 = vector.extract_strided_slice %40 {offsets = [0, 8], sizes = [48, 8], strides = [1, 1]} : vector<48x96xbf16> to vector<48x8xbf16>
    %66 = vector.shape_cast %65 : vector<48x8xbf16> to vector<6x8x8xbf16>
    %67 = vector.extract_strided_slice %40 {offsets = [0, 40], sizes = [48, 8], strides = [1, 1]} : vector<48x96xbf16> to vector<48x8xbf16>
    %68 = vector.shape_cast %67 : vector<48x8xbf16> to vector<6x8x8xbf16>
    %69 = vector.extract_strided_slice %40 {offsets = [0, 72], sizes = [48, 8], strides = [1, 1]} : vector<48x96xbf16> to vector<48x8xbf16>
    %70 = vector.shape_cast %69 : vector<48x8xbf16> to vector<6x8x8xbf16>
    "tpu.trace_start"() <{level = 10 : i32, message = "bqd,bkd->bqk"}> : () -> ()
    %cst_25 = arith.constant dense<0.000000e+00> : vector<6x8x8xf32>
    %71 = tpu.matmul %66, %68, %cst_25 {dimension_numbers = #tpu.dot_dimension_numbers<[2], [2], [1], [1], [0, 0, 0, 1, 1, 1], [0], [0]>} : vector<6x8x8xbf16>, vector<6x8x8xbf16>, vector<6x8x8xf32> -> vector<6x8x8xf32>
    "tpu.trace_stop"() : () -> ()
    %72 = arith.addf %71, %44 : vector<6x8x8xf32>
    %cst_26 = arith.constant dense<0xFF800000> : vector<6x8xf32>
    %73 = vector.multi_reduction <maximumf>, %72, %cst_26 [2] : vector<6x8x8xf32> to vector<6x8xf32>
    %74 = vector.shape_cast %73 : vector<6x8xf32> to vector<6x8x1xf32>
    %75 = vector.broadcast %74 : vector<6x8x1xf32> to vector<6x8x8xf32>
    %76 = arith.subf %72, %75 : vector<6x8x8xf32>
    %77 = math.exp %76 : vector<6x8x8xf32>
    %cst_27 = arith.constant dense<0.000000e+00> : vector<6x8xf32>
    %78 = vector.multi_reduction <add>, %77, %cst_27 [2] : vector<6x8x8xf32> to vector<6x8xf32>
    %79 = vector.shape_cast %78 : vector<6x8xf32> to vector<6x8x1xf32>
    %80 = vector.broadcast %79 : vector<6x8x1xf32> to vector<6x8x8xf32>
    %81 = arith.divf %77, %80 : vector<6x8x8xf32>
    %82 = arith.truncf %81 : vector<6x8x8xf32> to vector<6x8x8xbf16>
    "tpu.trace_start"() <{level = 10 : i32, message = "bqk,bkd->bqd"}> : () -> ()
    %cst_28 = arith.constant dense<0.000000e+00> : vector<6x8x8xf32>
    %83 = tpu.matmul %82, %70, %cst_28 {dimension_numbers = #tpu.dot_dimension_numbers<[2], [1], [1], [2], [0, 0, 0, 1, 1, 2], [0], [0]>} : vector<6x8x8xbf16>, vector<6x8x8xbf16>, vector<6x8x8xf32> -> vector<6x8x8xf32>
    "tpu.trace_stop"() : () -> ()
    %84 = vector.shape_cast %83 : vector<6x8x8xf32> to vector<48x8xf32>
    %85 = vector.extract_strided_slice %40 {offsets = [0, 16], sizes = [48, 8], strides = [1, 1]} : vector<48x96xbf16> to vector<48x8xbf16>
    %86 = vector.shape_cast %85 : vector<48x8xbf16> to vector<6x8x8xbf16>
    %87 = vector.extract_strided_slice %40 {offsets = [0, 48], sizes = [48, 8], strides = [1, 1]} : vector<48x96xbf16> to vector<48x8xbf16>
    %88 = vector.shape_cast %87 : vector<48x8xbf16> to vector<6x8x8xbf16>
    %89 = vector.extract_strided_slice %40 {offsets = [0, 80], sizes = [48, 8], strides = [1, 1]} : vector<48x96xbf16> to vector<48x8xbf16>
    %90 = vector.shape_cast %89 : vector<48x8xbf16> to vector<6x8x8xbf16>
    "tpu.trace_start"() <{level = 10 : i32, message = "bqd,bkd->bqk"}> : () -> ()
    %cst_29 = arith.constant dense<0.000000e+00> : vector<6x8x8xf32>
    %91 = tpu.matmul %86, %88, %cst_29 {dimension_numbers = #tpu.dot_dimension_numbers<[2], [2], [1], [1], [0, 0, 0, 1, 1, 1], [0], [0]>} : vector<6x8x8xbf16>, vector<6x8x8xbf16>, vector<6x8x8xf32> -> vector<6x8x8xf32>
    "tpu.trace_stop"() : () -> ()
    %92 = arith.addf %91, %44 : vector<6x8x8xf32>
    %cst_30 = arith.constant dense<0xFF800000> : vector<6x8xf32>
    %93 = vector.multi_reduction <maximumf>, %92, %cst_30 [2] : vector<6x8x8xf32> to vector<6x8xf32>
    %94 = vector.shape_cast %93 : vector<6x8xf32> to vector<6x8x1xf32>
    %95 = vector.broadcast %94 : vector<6x8x1xf32> to vector<6x8x8xf32>
    %96 = arith.subf %92, %95 : vector<6x8x8xf32>
    %97 = math.exp %96 : vector<6x8x8xf32>
    %cst_31 = arith.constant dense<0.000000e+00> : vector<6x8xf32>
    %98 = vector.multi_reduction <add>, %97, %cst_31 [2] : vector<6x8x8xf32> to vector<6x8xf32>
    %99 = vector.shape_cast %98 : vector<6x8xf32> to vector<6x8x1xf32>
    %100 = vector.broadcast %99 : vector<6x8x1xf32> to vector<6x8x8xf32>
    %101 = arith.divf %97, %100 : vector<6x8x8xf32>
    %102 = arith.truncf %101 : vector<6x8x8xf32> to vector<6x8x8xbf16>
    "tpu.trace_start"() <{level = 10 : i32, message = "bqk,bkd->bqd"}> : () -> ()
    %cst_32 = arith.constant dense<0.000000e+00> : vector<6x8x8xf32>
    %103 = tpu.matmul %102, %90, %cst_32 {dimension_numbers = #tpu.dot_dimension_numbers<[2], [1], [1], [2], [0, 0, 0, 1, 1, 2], [0], [0]>} : vector<6x8x8xbf16>, vector<6x8x8xbf16>, vector<6x8x8xf32> -> vector<6x8x8xf32>
    "tpu.trace_stop"() : () -> ()
    %104 = vector.shape_cast %103 : vector<6x8x8xf32> to vector<48x8xf32>
    %105 = vector.extract_strided_slice %40 {offsets = [0, 24], sizes = [48, 8], strides = [1, 1]} : vector<48x96xbf16> to vector<48x8xbf16>
    %106 = vector.shape_cast %105 : vector<48x8xbf16> to vector<6x8x8xbf16>
    %107 = vector.extract_strided_slice %40 {offsets = [0, 56], sizes = [48, 8], strides = [1, 1]} : vector<48x96xbf16> to vector<48x8xbf16>
    %108 = vector.shape_cast %107 : vector<48x8xbf16> to vector<6x8x8xbf16>
    %109 = vector.extract_strided_slice %40 {offsets = [0, 88], sizes = [48, 8], strides = [1, 1]} : vector<48x96xbf16> to vector<48x8xbf16>
    %110 = vector.shape_cast %109 : vector<48x8xbf16> to vector<6x8x8xbf16>
    "tpu.trace_start"() <{level = 10 : i32, message = "bqd,bkd->bqk"}> : () -> ()
    %cst_33 = arith.constant dense<0.000000e+00> : vector<6x8x8xf32>
    %111 = tpu.matmul %106, %108, %cst_33 {dimension_numbers = #tpu.dot_dimension_numbers<[2], [2], [1], [1], [0, 0, 0, 1, 1, 1], [0], [0]>} : vector<6x8x8xbf16>, vector<6x8x8xbf16>, vector<6x8x8xf32> -> vector<6x8x8xf32>
    "tpu.trace_stop"() : () -> ()
    %112 = arith.addf %111, %44 : vector<6x8x8xf32>
    %cst_34 = arith.constant dense<0xFF800000> : vector<6x8xf32>
    %113 = vector.multi_reduction <maximumf>, %112, %cst_34 [2] : vector<6x8x8xf32> to vector<6x8xf32>
    %114 = vector.shape_cast %113 : vector<6x8xf32> to vector<6x8x1xf32>
    %115 = vector.broadcast %114 : vector<6x8x1xf32> to vector<6x8x8xf32>
    %116 = arith.subf %112, %115 : vector<6x8x8xf32>
    %117 = math.exp %116 : vector<6x8x8xf32>
    %cst_35 = arith.constant dense<0.000000e+00> : vector<6x8xf32>
    %118 = vector.multi_reduction <add>, %117, %cst_35 [2] : vector<6x8x8xf32> to vector<6x8xf32>
    %119 = vector.shape_cast %118 : vector<6x8xf32> to vector<6x8x1xf32>
    %120 = vector.broadcast %119 : vector<6x8x1xf32> to vector<6x8x8xf32>
    %121 = arith.divf %117, %120 : vector<6x8x8xf32>
    %122 = arith.truncf %121 : vector<6x8x8xf32> to vector<6x8x8xbf16>
    "tpu.trace_start"() <{level = 10 : i32, message = "bqk,bkd->bqd"}> : () -> ()
    %cst_36 = arith.constant dense<0.000000e+00> : vector<6x8x8xf32>
    %123 = tpu.matmul %122, %110, %cst_36 {dimension_numbers = #tpu.dot_dimension_numbers<[2], [1], [1], [2], [0, 0, 0, 1, 1, 2], [0], [0]>} : vector<6x8x8xbf16>, vector<6x8x8xbf16>, vector<6x8x8xf32> -> vector<6x8x8xf32>
    "tpu.trace_stop"() : () -> ()
    %124 = vector.shape_cast %123 : vector<6x8x8xf32> to vector<48x8xf32>
    %125 = tpu.concatenate %64, %84, %104, %124 in 1 : vector<48x8xf32>, vector<48x8xf32>, vector<48x8xf32>, vector<48x8xf32> -> vector<48x32xf32>
    %126 = arith.truncf %125 : vector<48x32xf32> to vector<48x32xbf16>
    %c0_37 = arith.constant 0 : index
    %c0_38 = arith.constant 0 : index
    %c0_39 = arith.constant 0 : index
    %127 = vector.load %arg7[%c0_37, %c0_38, %c0_39] : memref<1x32x32xbf16, #tpu.memory_space<vmem>>, vector<1x32x32xbf16>
    %128 = vector.shape_cast %127 : vector<1x32x32xbf16> to vector<32x32xbf16>
    %cst_40 = arith.constant dense<0.000000e+00> : vector<48x32xf32>
    %129 = tpu.matmul %126, %128, %cst_40 {dimension_numbers = #tpu.dot_dimension_numbers<[1], [0], [0], [1], [0, 0, 1, 1], [], []>} : vector<48x32xbf16>, vector<32x32xbf16>, vector<48x32xf32> -> vector<48x32xf32>
    %c0_41 = arith.constant 0 : index
    %c0_42 = arith.constant 0 : index
    %c0_43 = arith.constant 0 : index
    %130 = vector.load %arg8[%c0_41, %c0_42, %c0_43] : memref<1x1x32xf32, #tpu.memory_space<vmem>>, vector<1x1x32xf32>
    %131 = vector.shape_cast %130 : vector<1x1x32xf32> to vector<1x32xf32>
    %132 = vector.broadcast %131 : vector<1x32xf32> to vector<48x32xf32>
    %133 = arith.addf %129, %132 : vector<48x32xf32>
    %134 = arith.addf %3, %133 : vector<48x32xf32>
    %c0_44 = arith.constant 0 : index
    %c0_45 = arith.constant 0 : index
    %c0_46 = arith.constant 0 : index
    %135 = vector.load %arg9[%c0_44, %c0_45, %c0_46] : memref<1x1x32xf32, #tpu.memory_space<vmem>>, vector<1x1x32xf32>
    %136 = vector.shape_cast %135 : vector<1x1x32xf32> to vector<1x32xf32>
    %c0_47 = arith.constant 0 : index
    %c0_48 = arith.constant 0 : index
    %c0_49 = arith.constant 0 : index
    %137 = vector.load %arg10[%c0_47, %c0_48, %c0_49] : memref<1x1x32xf32, #tpu.memory_space<vmem>>, vector<1x1x32xf32>
    %138 = vector.shape_cast %137 : vector<1x1x32xf32> to vector<1x32xf32>
    %cst_50 = arith.constant dense<0.000000e+00> : vector<48xf32>
    %139 = vector.multi_reduction <add>, %134, %cst_50 [1] : vector<48x32xf32> to vector<48xf32>
    %140 = vector.shape_cast %139 : vector<48xf32> to vector<48x1xf32>
    %cst_51 = arith.constant 3.200000e+01 : f32
    %141 = vector.broadcast %cst_51 : f32 to vector<48x1xf32>
    %142 = arith.divf %140, %141 : vector<48x1xf32>
    %143 = vector.broadcast %142 : vector<48x1xf32> to vector<48x32xf32>
    %144 = arith.subf %134, %143 : vector<48x32xf32>
    %145 = vector.broadcast %142 : vector<48x1xf32> to vector<48x32xf32>
    %146 = arith.subf %134, %145 : vector<48x32xf32>
    %147 = arith.mulf %144, %146 : vector<48x32xf32>
    %cst_52 = arith.constant dense<0.000000e+00> : vector<48xf32>
    %148 = vector.multi_reduction <add>, %147, %cst_52 [1] : vector<48x32xf32> to vector<48xf32>
    %149 = vector.shape_cast %148 : vector<48xf32> to vector<48x1xf32>
    %cst_53 = arith.constant 3.200000e+01 : f32
    %150 = vector.broadcast %cst_53 : f32 to vector<48x1xf32>
    %151 = arith.divf %149, %150 : vector<48x1xf32>
    %152 = vector.broadcast %142 : vector<48x1xf32> to vector<48x32xf32>
    %153 = arith.subf %134, %152 : vector<48x32xf32>
    %cst_54 = arith.constant 9.99999974E-6 : f32
    %154 = vector.broadcast %cst_54 : f32 to vector<48x1xf32>
    %155 = arith.addf %151, %154 : vector<48x1xf32>
    %156 = math.rsqrt %155 : vector<48x1xf32>
    %157 = vector.broadcast %156 : vector<48x1xf32> to vector<48x32xf32>
    %158 = arith.mulf %153, %157 : vector<48x32xf32>
    %159 = vector.broadcast %136 : vector<1x32xf32> to vector<48x32xf32>
    %160 = arith.mulf %158, %159 : vector<48x32xf32>
    %161 = vector.broadcast %138 : vector<1x32xf32> to vector<48x32xf32>
    %162 = arith.addf %160, %161 : vector<48x32xf32>
    %163 = arith.truncf %162 : vector<48x32xf32> to vector<48x32xbf16>
    %c0_55 = arith.constant 0 : index
    %c0_56 = arith.constant 0 : index
    %c0_57 = arith.constant 0 : index
    %164 = vector.load %arg11[%c0_55, %c0_56, %c0_57] : memref<1x32x128xbf16, #tpu.memory_space<vmem>>, vector<1x32x128xbf16>
    %165 = vector.shape_cast %164 : vector<1x32x128xbf16> to vector<32x128xbf16>
    %cst_58 = arith.constant dense<0.000000e+00> : vector<48x128xf32>
    %166 = tpu.matmul %163, %165, %cst_58 {dimension_numbers = #tpu.dot_dimension_numbers<[1], [0], [0], [1], [0, 0, 1, 1], [], []>} : vector<48x32xbf16>, vector<32x128xbf16>, vector<48x128xf32> -> vector<48x128xf32>
    %c0_59 = arith.constant 0 : index
    %c0_60 = arith.constant 0 : index
    %c0_61 = arith.constant 0 : index
    %167 = vector.load %arg12[%c0_59, %c0_60, %c0_61] : memref<1x1x128xf32, #tpu.memory_space<vmem>>, vector<1x1x128xf32>
    %168 = vector.shape_cast %167 : vector<1x1x128xf32> to vector<1x128xf32>
    %169 = vector.broadcast %168 : vector<1x128xf32> to vector<48x128xf32>
    %170 = arith.addf %166, %169 : vector<48x128xf32>
    %171 = arith.mulf %170, %170 : vector<48x128xf32>
    %172 = arith.mulf %170, %171 : vector<48x128xf32>
    %cst_62 = arith.constant 4.471500e-02 : f32
    %173 = vector.broadcast %cst_62 : f32 to vector<48x128xf32>
    %174 = arith.mulf %173, %172 : vector<48x128xf32>
    %175 = arith.addf %170, %174 : vector<48x128xf32>
    %cst_63 = arith.constant 0.797884583 : f32
    %176 = vector.broadcast %cst_63 : f32 to vector<48x128xf32>
    %177 = arith.mulf %176, %175 : vector<48x128xf32>
    %178 = math.tanh %177 : vector<48x128xf32>
    %cst_64 = arith.constant 1.000000e+00 : f32
    %179 = vector.broadcast %cst_64 : f32 to vector<48x128xf32>
    %180 = arith.addf %179, %178 : vector<48x128xf32>
    %cst_65 = arith.constant 5.000000e-01 : f32
    %181 = vector.broadcast %cst_65 : f32 to vector<48x128xf32>
    %182 = arith.mulf %181, %180 : vector<48x128xf32>
    %183 = arith.mulf %170, %182 : vector<48x128xf32>
    %184 = arith.truncf %183 : vector<48x128xf32> to vector<48x128xbf16>
    %c0_66 = arith.constant 0 : index
    %c0_67 = arith.constant 0 : index
    %c0_68 = arith.constant 0 : index
    %185 = vector.load %arg13[%c0_66, %c0_67, %c0_68] : memref<1x128x32xbf16, #tpu.memory_space<vmem>>, vector<1x128x32xbf16>
    %186 = vector.shape_cast %185 : vector<1x128x32xbf16> to vector<128x32xbf16>
    %cst_69 = arith.constant dense<0.000000e+00> : vector<48x32xf32>
    %187 = tpu.matmul %184, %186, %cst_69 {dimension_numbers = #tpu.dot_dimension_numbers<[1], [0], [0], [1], [0, 0, 1, 1], [], []>} : vector<48x128xbf16>, vector<128x32xbf16>, vector<48x32xf32> -> vector<48x32xf32>
    %c0_70 = arith.constant 0 : index
    %c0_71 = arith.constant 0 : index
    %c0_72 = arith.constant 0 : index
    %188 = vector.load %arg14[%c0_70, %c0_71, %c0_72] : memref<1x1x32xf32, #tpu.memory_space<vmem>>, vector<1x1x32xf32>
    %189 = vector.shape_cast %188 : vector<1x1x32xf32> to vector<1x32xf32>
    %190 = vector.broadcast %189 : vector<1x32xf32> to vector<48x32xf32>
    %191 = arith.addf %187, %190 : vector<48x32xf32>
    %192 = arith.addf %134, %191 : vector<48x32xf32>
    %c0_73 = arith.constant 0 : index
    %c0_74 = arith.constant 0 : index
    %193 = vector.load %arg19[%c0_73, %c0_74] : memref<48x32xf32, #tpu.memory_space<vmem>>, vector<48x32xf32>
    tpu.vector_store %arg19[%c0_73, %c0_74], %192 {strides = array<i32>} : memref<48x32xf32, #tpu.memory_space<vmem>>, vector<48x32xf32>,
    %c1_i32 = arith.constant 1 : i32
    %194 = arith.cmpi eq, %arg1, %c1_i32 : i32
    %195 = arith.extui %194 : i1 to i32
    %c0_i32_75 = arith.constant 0 : i32
    %196 = arith.cmpi ne, %195, %c0_i32_75 : i32
    scf.if %196 {
      %c0_76 = arith.constant 0 : index
      %c0_77 = arith.constant 0 : index
      %197 = vector.load %arg15[%c0_76, %c0_77] : memref<1x32xf32, #tpu.memory_space<vmem>>, vector<1x32xf32>
      %c0_78 = arith.constant 0 : index
      %c0_79 = arith.constant 0 : index
      %198 = vector.load %arg16[%c0_78, %c0_79] : memref<1x32xf32, #tpu.memory_space<vmem>>, vector<1x32xf32>
      %cst_80 = arith.constant dense<0.000000e+00> : vector<48xf32>
      %199 = vector.multi_reduction <add>, %192, %cst_80 [1] : vector<48x32xf32> to vector<48xf32>
      %200 = vector.shape_cast %199 : vector<48xf32> to vector<48x1xf32>
      %cst_81 = arith.constant 3.200000e+01 : f32
      %201 = vector.broadcast %cst_81 : f32 to vector<48x1xf32>
      %202 = arith.divf %200, %201 : vector<48x1xf32>
      %203 = vector.broadcast %202 : vector<48x1xf32> to vector<48x32xf32>
      %204 = arith.subf %192, %203 : vector<48x32xf32>
      %205 = vector.broadcast %202 : vector<48x1xf32> to vector<48x32xf32>
      %206 = arith.subf %192, %205 : vector<48x32xf32>
      %207 = arith.mulf %204, %206 : vector<48x32xf32>
      %cst_82 = arith.constant dense<0.000000e+00> : vector<48xf32>
      %208 = vector.multi_reduction <add>, %207, %cst_82 [1] : vector<48x32xf32> to vector<48xf32>
      %209 = vector.shape_cast %208 : vector<48xf32> to vector<48x1xf32>
      %cst_83 = arith.constant 3.200000e+01 : f32
      %210 = vector.broadcast %cst_83 : f32 to vector<48x1xf32>
      %211 = arith.divf %209, %210 : vector<48x1xf32>
      %212 = vector.broadcast %202 : vector<48x1xf32> to vector<48x32xf32>
      %213 = arith.subf %192, %212 : vector<48x32xf32>
      %cst_84 = arith.constant 9.99999974E-6 : f32
      %214 = vector.broadcast %cst_84 : f32 to vector<48x1xf32>
      %215 = arith.addf %211, %214 : vector<48x1xf32>
      %216 = math.rsqrt %215 : vector<48x1xf32>
      %217 = vector.broadcast %216 : vector<48x1xf32> to vector<48x32xf32>
      %218 = arith.mulf %213, %217 : vector<48x32xf32>
      %219 = vector.broadcast %197 : vector<1x32xf32> to vector<48x32xf32>
      %220 = arith.mulf %218, %219 : vector<48x32xf32>
      %221 = vector.broadcast %198 : vector<1x32xf32> to vector<48x32xf32>
      %222 = arith.addf %220, %221 : vector<48x32xf32>
      %223 = vector.shape_cast %222 : vector<48x32xf32> to vector<6x8x32xf32>
      %c0_85 = arith.constant 0 : index
      %c0_86 = arith.constant 0 : index
      %c0_87 = arith.constant 0 : index
      %224 = vector.load %arg18[%c0_85, %c0_86, %c0_87] : memref<6x8x32xf32, #tpu.memory_space<vmem>>, vector<6x8x32xf32>
      tpu.vector_store %arg18[%c0_85, %c0_86, %c0_87], %223 {strides = array<i32>} : memref<6x8x32xf32, #tpu.memory_space<vmem>>, vector<6x8x32xf32>,
    } else {
    }
    return
  }
  func.func @transform_0(%arg0: i32, %arg1: i32) -> (i32, i32, i32) {
    %c0_i32 = arith.constant 0 : i32
    %c0_i32_0 = arith.constant 0 : i32
    %c0_i32_1 = arith.constant 0 : i32
    return %arg0, %c0_i32, %c0_i32_0 : i32, i32, i32
  }
  func.func @transform_1(%arg0: i32, %arg1: i32) -> (i32, i32, i32) {
    %c0_i32 = arith.constant 0 : i32
    %c0_i32_0 = arith.constant 0 : i32
    %c0_i32_1 = arith.constant 0 : i32
    return %arg1, %c0_i32, %c0_i32_0 : i32, i32, i32
  }
  func.func @transform_2(%arg0: i32, %arg1: i32) -> (i32, i32, i32) {
    %c0_i32 = arith.constant 0 : i32
    %c0_i32_0 = arith.constant 0 : i32
    %c0_i32_1 = arith.constant 0 : i32
    return %arg1, %c0_i32, %c0_i32_0 : i32, i32, i32
  }
  func.func @transform_3(%arg0: i32, %arg1: i32) -> (i32, i32, i32) {
    %c0_i32 = arith.constant 0 : i32
    %c0_i32_0 = arith.constant 0 : i32
    %c0_i32_1 = arith.constant 0 : i32
    return %arg1, %c0_i32, %c0_i32_0 : i32, i32, i32
  }
  func.func @transform_4(%arg0: i32, %arg1: i32) -> (i32, i32, i32) {
    %c0_i32 = arith.constant 0 : i32
    %c0_i32_0 = arith.constant 0 : i32
    %c0_i32_1 = arith.constant 0 : i32
    return %arg1, %c0_i32, %c0_i32_0 : i32, i32, i32
  }
  func.func @transform_5(%arg0: i32, %arg1: i32) -> (i32, i32, i32) {
    %c0_i32 = arith.constant 0 : i32
    %c0_i32_0 = arith.constant 0 : i32
    %c0_i32_1 = arith.constant 0 : i32
    return %arg1, %c0_i32, %c0_i32_0 : i32, i32, i32
  }
  func.func @transform_6(%arg0: i32, %arg1: i32) -> (i32, i32, i32) {
    %c0_i32 = arith.constant 0 : i32
    %c0_i32_0 = arith.constant 0 : i32
    %c0_i32_1 = arith.constant 0 : i32
    return %arg1, %c0_i32, %c0_i32_0 : i32, i32, i32
  }
  func.func @transform_7(%arg0: i32, %arg1: i32) -> (i32, i32, i32) {
    %c0_i32 = arith.constant 0 : i32
    %c0_i32_0 = arith.constant 0 : i32
    %c0_i32_1 = arith.constant 0 : i32
    return %arg1, %c0_i32, %c0_i32_0 : i32, i32, i32
  }
  func.func @transform_8(%arg0: i32, %arg1: i32) -> (i32, i32, i32) {
    %c0_i32 = arith.constant 0 : i32
    %c0_i32_0 = arith.constant 0 : i32
    %c0_i32_1 = arith.constant 0 : i32
    return %arg1, %c0_i32, %c0_i32_0 : i32, i32, i32
  }
  func.func @transform_9(%arg0: i32, %arg1: i32) -> (i32, i32, i32) {
    %c0_i32 = arith.constant 0 : i32
    %c0_i32_0 = arith.constant 0 : i32
    %c0_i32_1 = arith.constant 0 : i32
    return %arg1, %c0_i32, %c0_i32_0 : i32, i32, i32
  }
  func.func @transform_10(%arg0: i32, %arg1: i32) -> (i32, i32, i32) {
    %c0_i32 = arith.constant 0 : i32
    %c0_i32_0 = arith.constant 0 : i32
    %c0_i32_1 = arith.constant 0 : i32
    return %arg1, %c0_i32, %c0_i32_0 : i32, i32, i32
  }
  func.func @transform_11(%arg0: i32, %arg1: i32) -> (i32, i32, i32) {
    %c0_i32 = arith.constant 0 : i32
    %c0_i32_0 = arith.constant 0 : i32
    %c0_i32_1 = arith.constant 0 : i32
    return %arg1, %c0_i32, %c0_i32_0 : i32, i32, i32
  }
  func.func @transform_12(%arg0: i32, %arg1: i32) -> (i32, i32, i32) {
    %c0_i32 = arith.constant 0 : i32
    %c0_i32_0 = arith.constant 0 : i32
    %c0_i32_1 = arith.constant 0 : i32
    return %arg1, %c0_i32, %c0_i32_0 : i32, i32, i32
  }
  func.func @transform_13(%arg0: i32, %arg1: i32) -> (i32, i32) {
    %c0_i32 = arith.constant 0 : i32
    %c0_i32_0 = arith.constant 0 : i32
    %c0_i32_1 = arith.constant 0 : i32
    return %c0_i32, %c0_i32_0 : i32, i32
  }
  func.func @transform_14(%arg0: i32, %arg1: i32) -> (i32, i32) {
    %c0_i32 = arith.constant 0 : i32
    %c0_i32_0 = arith.constant 0 : i32
    %c0_i32_1 = arith.constant 0 : i32
    return %c0_i32, %c0_i32_0 : i32, i32
  }
  func.func @transform_15(%arg0: i32, %arg1: i32) -> (i32, i32) {
    %c0_i32 = arith.constant 0 : i32
    %c0_i32_0 = arith.constant 0 : i32
    %c0_i32_1 = arith.constant 0 : i32
    return %c0_i32, %c0_i32_0 : i32, i32
  }
  func.func @transform_16(%arg0: i32, %arg1: i32) -> (i32, i32, i32) {
    %c0_i32 = arith.constant 0 : i32
    %c0_i32_0 = arith.constant 0 : i32
    %c0_i32_1 = arith.constant 0 : i32
    return %arg0, %c0_i32, %c0_i32_0 : i32, i32, i32
  }
}

</mosaic_0001>

<llo_original>
// kernel: tpu_custom_call.1
$region0: #{tpu_custom_call.1}
  #allocation0 [shape = 'u32[]', space=smem, size = 0x4, offset = 0x4, fixed_abs, tag = 'smem constant byte address 0x4 - core index']
  #allocation1 [shape = 'u32[144,128]{1,0:T(1,128)}', space=vmem, size = 0x12000, scoped, tag = 'internal scratch']
  #allocation2 [shape = 'f32[48,32]{1,0:T(8,128)}', space=vmem, size = 0x6000, scoped, tag = 'scratch operand']
  %s0 = inlined_call_operand.hbm [shape: f32[6,8,32], index: 0, kind: input, shape index: {}]
  %s1 = inlined_call_operand.hbm [shape: f32[2,1,32], index: 1, kind: input, shape index: {}]
  %s2 = inlined_call_operand.hbm [shape: f32[2,1,32], index: 2, kind: input, shape index: {}]
  %s3 = inlined_call_operand.hbm [shape: bf16[2,32,96], index: 3, kind: input, shape index: {}]
  %s4 = inlined_call_operand.hbm [shape: f32[2,1,96], index: 4, kind: input, shape index: {}]
  %s5 = inlined_call_operand.hbm [shape: bf16[2,32,32], index: 5, kind: input, shape index: {}]
  %s6 = inlined_call_operand.hbm [shape: f32[2,1,32], index: 6, kind: input, shape index: {}]
  %s7 = inlined_call_operand.hbm [shape: f32[2,1,32], index: 7, kind: input, shape index: {}]
  %s8 = inlined_call_operand.hbm [shape: f32[2,1,32], index: 8, kind: input, shape index: {}]
  %s9 = inlined_call_operand.hbm [shape: bf16[2,32,128], index: 9, kind: input, shape index: {}]
  %s10 = inlined_call_operand.hbm [shape: f32[2,1,128], index: 10, kind: input, shape index: {}]
  %s11 = inlined_call_operand.hbm [shape: bf16[2,128,32], index: 11, kind: input, shape index: {}]
  %s12 = inlined_call_operand.hbm [shape: f32[2,1,32], index: 12, kind: input, shape index: {}]
  %s13 = inlined_call_operand.hbm [shape: f32[1,32], index: 13, kind: input, shape index: {}]
  %s14 = inlined_call_operand.hbm [shape: f32[1,32], index: 14, kind: input, shape index: {}]
  %s15 = inlined_call_operand.hbm [shape: f32[8,8], index: 15, kind: input, shape index: {}]
  %s16 = inlined_call_operand.hbm [shape: f32[6,8,32], index: 16, kind: output, shape index: {}]
  %s17 = sld [smem:[#allocation0]]
  $region169: #{tpu_custom_call.1} parent=0
    _
  %s19 = ssub.s32 1, %s17
  %s20 = scalar_select 0, %s19, %s17
  $region1: #{tpu_custom_call.1} parent=0
    #allocation3 [shape = 'u8[24576]{0}', space=vmem, size = 0x6000, scoped, tag = 'input window, operand 0, single buffered']
    #allocation4 [shape = 's32[2]{0}', space=sflag, size = 0x8, scoped, tag = 'scoped memory for tpu_custom_call.1']
    #allocation5 [shape = 's32[2]{0}', space=sflag, size = 0x8, scoped, tag = 'scoped memory for tpu_custom_call.1']
    #allocation6 [shape = 'u8[1024]{0}', space=vmem, size = 0x400, scoped, tag = 'input window, operand 1']
    #allocation7 [shape = 's32[2]{0}', space=sflag, size = 0x8, scoped, tag = 'scoped memory for tpu_custom_call.1']
    #allocation8 [shape = 'u8[1024]{0}', space=vmem, size = 0x400, scoped, tag = 'input window, operand 2']
    #allocation9 [shape = 'u8[16384]{0}', space=vmem, size = 0x4000, scoped, tag = 'input window, operand 3']
    #allocation10 [shape = 's32[2]{0}', space=sflag, size = 0x8, scoped, tag = 'scoped memory for tpu_custom_call.1']
    #allocation11 [shape = 'u8[1024]{0}', space=vmem, size = 0x400, scoped, tag = 'input window, operand 4']
    #allocation12 [shape = 'u8[16384]{0}', space=vmem, size = 0x4000, scoped, tag = 'input window, operand 5']
    #allocation13 [shape = 's32[2]{0}', space=sflag, size = 0x8, scoped, tag = 'scoped memory for tpu_custom_call.1']
    #allocation14 [shape = 'u8[1024]{0}', space=vmem, size = 0x400, scoped, tag = 'input window, operand 6']
    #allocation15 [shape = 'u8[1024]{0}', space=vmem, size = 0x400, scoped, tag = 'input window, operand 7']
    #allocation16 [shape = 's32[2]{0}', space=sflag, size = 0x8, scoped, tag = 'scoped memory for tpu_custom_call.1']
    #allocation17 [shape = 'u8[1024]{0}', space=vmem, size = 0x400, scoped, tag = 'input window, operand 8']
    #allocation18 [shape = 'u8[16384]{0}', space=vmem, size = 0x4000, scoped, tag = 'input window, operand 9']
    #allocation19 [shape = 's32[2]{0}', space=sflag, size = 0x8, scoped, tag = 'scoped memory for tpu_custom_call.1']
    #allocation20 [shape = 'u8[1024]{0}', space=vmem, size = 0x400, scoped, tag = 'input window, operand 10']
    #allocation21 [shape = 'u8[65536]{0}', space=vmem, size = 0x10000, scoped, tag = 'input window, operand 11']
    #allocation22 [shape = 's32[2]{0}', space=sflag, size = 0x8, scoped, tag = 'scoped memory for tpu_custom_call.1']
    #allocation23 [shape = 'u8[1024]{0}', space=vmem, size = 0x400, scoped, tag = 'input window, operand 12']
    #allocation24 [shape = 'u8[512]{0}', space=vmem, size = 0x400, scoped, tag = 'input window, operand 13, single buffered']
    #allocation25 [shape = 's32[1]{0}', space=sflag, size = 0x4, scoped, tag = 'scoped memory for tpu_custom_call.1']
    #allocation26 [shape = 'u8[512]{0}', space=vmem, size = 0x400, scoped, tag = 'input window, operand 14, single buffered']
    #allocation27 [shape = 'u8[4096]{0}', space=vmem, size = 0x1000, scoped, tag = 'input window, operand 15, single buffered']
    #allocation28 [shape = 's32[1]{0}', space=sflag, size = 0x4, scoped, tag = 'scoped memory for tpu_custom_call.1']
    #allocation29 [shape = 'u8[24576]{0}', space=vmem, size = 0x6000, scoped, tag = 'output window, operand 0, single buffered']
    %21 = vsyncpa [#allocation4], 0
    %22 = vsyncpa [#allocation7], 0
    %s23 = scalar_lea.sflag [#allocation7], 1
    %24 = vsyncpa %s23, 0
    %25 = vsyncpa [#allocation10], 0
    %s26 = scalar_lea.sflag [#allocation10], 1
    %27 = vsyncpa %s26, 0
    %28 = vsyncpa [#allocation13], 0
    %s29 = scalar_lea.sflag [#allocation13], 1
    %30 = vsyncpa %s29, 0
    %31 = vsyncpa [#allocation16], 0
    %s32 = scalar_lea.sflag [#allocation16], 1
    %33 = vsyncpa %s32, 0
    %34 = vsyncpa [#allocation19], 0
    %s35 = scalar_lea.sflag [#allocation19], 1
    %36 = vsyncpa %s35, 0
    %37 = vsyncpa [#allocation22], 0
    %s38 = scalar_lea.sflag [#allocation22], 1
    %39 = vsyncpa %s38, 0
    %40 = vsyncpa [#allocation25], 0
    %41 = vsyncpa [#allocation28], 0
    %42 = vsyncpa [#allocation5], 0
    loop: start=0, step=1, limit=4
    $region2: #{tpu_custom_call.1} parent=1 // loop_pre_header
      _
    $region3: #{tpu_custom_call.1} parent=1 // loop_header
      %s44 = sphi 0, %s48
      %p45 = scmp.ge.s32.totalorder %s44, 4
      %s51 = sphi 0, %s63
      %s52 = sphi 0, %s59
      %s53 = sphi 0, %s51
      %s54 = sphi 0, %s52
      %s55 = sphi 0, %s53
      %s56 = sphi 0, %s54
      %s66 = sphi 0, %s68
      %s69 = sphi 0, %s66
      %s70 = sphi 0, %s69
      %s86 = sphi 0, %s70
      %s92 = sphi 0, %s94
      %s95 = sphi 0, %s92
      %s96 = sphi 0, %s95
      %s112 = sphi 0, %s96
      %s118 = sphi 0, %s120
      %s121 = sphi 0, %s118
      %s122 = sphi 0, %s121
      %s138 = sphi 0, %s122
      %s144 = sphi 0, %s146
      %s147 = sphi 0, %s144
      %s148 = sphi 0, %s147
      %s164 = sphi 0, %s148
      %s170 = sphi 0, %s172
      %s173 = sphi 0, %s170
      %s174 = sphi 0, %s173
      %s190 = sphi 0, %s174
      %s196 = sphi 0, %s198
      %s199 = sphi 0, %s196
      %s200 = sphi 0, %s199
      %s216 = sphi 0, %s200
      %s222 = sphi 0, %s224
      %s225 = sphi 0, %s222
      %s226 = sphi 0, %s225
      %s242 = sphi 0, %s226
      %s248 = sphi 0, %s250
      %s251 = sphi 0, %s248
      %s252 = sphi 0, %s251
      %s268 = sphi 0, %s252
      %s274 = sphi 0, %s276
      %s277 = sphi 0, %s274
      %s278 = sphi 0, %s277
      %s294 = sphi 0, %s278
      %s300 = sphi 0, %s302
      %s303 = sphi 0, %s300
      %s304 = sphi 0, %s303
      %s320 = sphi 0, %s304
      %s326 = sphi 0, %s328
      %s329 = sphi 0, %s326
      %s330 = sphi 0, %s329
      %s346 = sphi 0, %s330
      %s352 = sphi 0, %s354
      %s355 = sphi 0, %s352
      %s356 = sphi 0, %s355
      %s372 = sphi 0, %s356
      %s378 = sphi 0, %s380
      %s381 = sphi 0, %s378
      %s382 = sphi 0, %s381
      %s398 = sphi 0, %s382
      %s402 = sphi 0, %s402
      %s404 = sphi 0, %s402
      %s405 = sphi 0, %s404
      %s419 = sphi 0, %s405
      %s423 = sphi 0, %s423
      %s425 = sphi 0, %s423
      %s426 = sphi 0, %s425
      %s440 = sphi 0, %s426
      %s444 = sphi 0, %s444
      %s446 = sphi 0, %s444
      %s447 = sphi 0, %s446
      %s461 = sphi 0, %s447
      %s467 = sphi 0, %s469
      %s470 = sphi 0, %s467
      %s471 = sphi 0, %s470
      %s487 = sphi 0, %s471
    $region4: #{tpu_custom_call.1} parent=1 // loop_header_branch
      %47 = sbr.rel (%p45) target = $region8
    $region5: #{tpu_custom_call.1} parent=1 // loop_body
      %s49 = ssub.s32 %s44, 1
      %s50 = ssub.s32 %s44, 2
      %s57 = sadd.s32 1, %s52
      %p58 = scmp.ge.s32.totalorder %s57, 2
      %s59 = scalar_select %p58, 0, %s57
      %s60 = sadd.s32 1, %s51
      %s61 = scalar_select %p58, %s60, %s51
      %p62 = scmp.ge.s32.totalorder %s61, 1
      %s63 = scalar_select %p62, 0, %s61
      %s64 = ssub.s32 %s51, %s63
      %p65 = scmp.eq.s32.totalorder %s64, 0
      %s67 = sadd.s32 %s66, 1
      %s68 = scalar_select %p65, %s66, %s67
      %p71 = pneg %p65
      %p72 = scmp.eq.s32.totalorder %s44, 1
      %p73 = por %p71, %p72
      %p74 = scmp.ne.s32.totalorder %s66, %s69
      %p75 = scmp.eq.s32.totalorder %s44, 0
      %p76 = por %p74, %p75
      %p77 = scmp.ne.s32.totalorder %s66, %s69
      %p78 = scmp.eq.s32.totalorder %s49, 1
      %p79 = por %p77, %p78
      %p80 = scmp.ne.s32.totalorder %s69, %s70
      %p81 = scmp.eq.s32.totalorder %s49, 0
      %p82 = por %p80, %p81
      %p83 = scmp.ne.s32.totalorder %s69, %s70
      %p84 = scmp.eq.s32.totalorder %s50, 1
      %p85 = por %p83, %p84
      %p87 = scmp.ne.s32.totalorder %s70, %s86
      %p88 = scmp.eq.s32.totalorder %s50, 0
      %p89 = por %p87, %p88
      %s90 = ssub.s32 %s52, %s59
      %p91 = scmp.eq.s32.totalorder %s90, 0
      %s93 = sadd.s32 %s92, 1
      %s94 = scalar_select %p91, %s92, %s93
      %p97 = pneg %p91
      %p98 = scmp.eq.s32.totalorder %s44, 1
      %p99 = por %p97, %p98
      %p100 = scmp.ne.s32.totalorder %s92, %s95
      %p101 = scmp.eq.s32.totalorder %s44, 0
      %p102 = por %p100, %p101
      %p103 = scmp.ne.s32.totalorder %s92, %s95
      %p104 = scmp.eq.s32.totalorder %s49, 1
      %p105 = por %p103, %p104
      %p106 = scmp.ne.s32.totalorder %s95, %s96
      %p107 = scmp.eq.s32.totalorder %s49, 0
      %p108 = por %p106, %p107
      %p109 = scmp.ne.s32.totalorder %s95, %s96
      %p110 = scmp.eq.s32.totalorder %s50, 1
      %p111 = por %p109, %p110
      %p113 = scmp.ne.s32.totalorder %s96, %s112
      %p114 = scmp.eq.s32.totalorder %s50, 0
      %p115 = por %p113, %p114
      %s116 = ssub.s32 %s52, %s59
      %p117 = scmp.eq.s32.totalorder %s116, 0
      %s119 = sadd.s32 %s118, 1
      %s120 = scalar_select %p117, %s118, %s119
      %p123 = pneg %p117
      %p124 = scmp.eq.s32.totalorder %s44, 1
      %p125 = por %p123, %p124
      %p126 = scmp.ne.s32.totalorder %s118, %s121
      %p127 = scmp.eq.s32.totalorder %s44, 0
      %p128 = por %p126, %p127
      %p129 = scmp.ne.s32.totalorder %s118, %s121
      %p130 = scmp.eq.s32.totalorder %s49, 1
      %p131 = por %p129, %p130
      %p132 = scmp.ne.s32.totalorder %s121, %s122
      %p133 = scmp.eq.s32.totalorder %s49, 0
      %p134 = por %p132, %p133
      %p135 = scmp.ne.s32.totalorder %s121, %s122
      %p136 = scmp.eq.s32.totalorder %s50, 1
      %p137 = por %p135, %p136
      %p139 = scmp.ne.s32.totalorder %s122, %s138
      %p140 = scmp.eq.s32.totalorder %s50, 0
      %p141 = por %p139, %p140
      %s142 = ssub.s32 %s52, %s59
      %p143 = scmp.eq.s32.totalorder %s142, 0
      %s145 = sadd.s32 %s144, 1
      %s146 = scalar_select %p143, %s144, %s145
      %p149 = pneg %p143
      %p150 = scmp.eq.s32.totalorder %s44, 1
      %p151 = por %p149, %p150
      %p152 = scmp.ne.s32.totalorder %s144, %s147
      %p153 = scmp.eq.s32.totalorder %s44, 0
      %p154 = por %p152, %p153
      %p155 = scmp.ne.s32.totalorder %s144, %s147
      %p156 = scmp.eq.s32.totalorder %s49, 1
      %p157 = por %p155, %p156
      %p158 = scmp.ne.s32.totalorder %s147, %s148
      %p159 = scmp.eq.s32.totalorder %s49, 0
      %p160 = por %p158, %p159
      %p161 = scmp.ne.s32.totalorder %s147, %s148
      %p162 = scmp.eq.s32.totalorder %s50, 1
      %p163 = por %p161, %p162
      %p165 = scmp.ne.s32.totalorder %s148, %s164
      %p166 = scmp.eq.s32.totalorder %s50, 0
      %p167 = por %p165, %p166
      %s168 = ssub.s32 %s52, %s59
      %p169 = scmp.eq.s32.totalorder %s168, 0
      %s171 = sadd.s32 %s170, 1
      %s172 = scalar_select %p169, %s170, %s171
      %p175 = pneg %p169
      %p176 = scmp.eq.s32.totalorder %s44, 1
      %p177 = por %p175, %p176
      %p178 = scmp.ne.s32.totalorder %s170, %s173
      %p179 = scmp.eq.s32.totalorder %s44, 0
      %p180 = por %p178, %p179
      %p181 = scmp.ne.s32.totalorder %s170, %s173
      %p182 = scmp.eq.s32.totalorder %s49, 1
      %p183 = por %p181, %p182
      %p184 = scmp.ne.s32.totalorder %s173, %s174
      %p185 = scmp.eq.s32.totalorder %s49, 0
      %p186 = por %p184, %p185
      %p187 = scmp.ne.s32.totalorder %s173, %s174
      %p188 = scmp.eq.s32.totalorder %s50, 1
      %p189 = por %p187, %p188
      %p191 = scmp.ne.s32.totalorder %s174, %s190
      %p192 = scmp.eq.s32.totalorder %s50, 0
      %p193 = por %p191, %p192
      %s194 = ssub.s32 %s52, %s59
      %p195 = scmp.eq.s32.totalorder %s194, 0
      %s197 = sadd.s32 %s196, 1
      %s198 = scalar_select %p195, %s196, %s197
      %p201 = pneg %p195
      %p202 = scmp.eq.s32.totalorder %s44, 1
      %p203 = por %p201, %p202
      %p204 = scmp.ne.s32.totalorder %s196, %s199
      %p205 = scmp.eq.s32.totalorder %s44, 0
      %p206 = por %p204, %p205
      %p207 = scmp.ne.s32.totalorder %s196, %s199
      %p208 = scmp.eq.s32.totalorder %s49, 1
      %p209 = por %p207, %p208
      %p210 = scmp.ne.s32.totalorder %s199, %s200
      %p211 = scmp.eq.s32.totalorder %s49, 0
      %p212 = por %p210, %p211
      %p213 = scmp.ne.s32.totalorder %s199, %s200
      %p214 = scmp.eq.s32.totalorder %s50, 1
      %p215 = por %p213, %p214
      %p217 = scmp.ne.s32.totalorder %s200, %s216
      %p218 = scmp.eq.s32.totalorder %s50, 0
      %p219 = por %p217, %p218
      %s220 = ssub.s32 %s52, %s59
      %p221 = scmp.eq.s32.totalorder %s220, 0
      %s223 = sadd.s32 %s222, 1
      %s224 = scalar_select %p221, %s222, %s223
      %p227 = pneg %p221
      %p228 = scmp.eq.s32.totalorder %s44, 1
      %p229 = por %p227, %p228
      %p230 = scmp.ne.s32.totalorder %s222, %s225
      %p231 = scmp.eq.s32.totalorder %s44, 0
      %p232 = por %p230, %p231
      %p233 = scmp.ne.s32.totalorder %s222, %s225
      %p234 = scmp.eq.s32.totalorder %s49, 1
      %p235 = por %p233, %p234
      %p236 = scmp.ne.s32.totalorder %s225, %s226
      %p237 = scmp.eq.s32.totalorder %s49, 0
      %p238 = por %p236, %p237
      %p239 = scmp.ne.s32.totalorder %s225, %s226
      %p240 = scmp.eq.s32.totalorder %s50, 1
      %p241 = por %p239, %p240
      %p243 = scmp.ne.s32.totalorder %s226, %s242
      %p244 = scmp.eq.s32.totalorder %s50, 0
      %p245 = por %p243, %p244
      %s246 = ssub.s32 %s52, %s59
      %p247 = scmp.eq.s32.totalorder %s246, 0
      %s249 = sadd.s32 %s248, 1
      %s250 = scalar_select %p247, %s248, %s249
      %p253 = pneg %p247
      %p254 = scmp.eq.s32.totalorder %s44, 1
      %p255 = por %p253, %p254
      %p256 = scmp.ne.s32.totalorder %s248, %s251
      %p257 = scmp.eq.s32.totalorder %s44, 0
      %p258 = por %p256, %p257
      %p259 = scmp.ne.s32.totalorder %s248, %s251
      %p260 = scmp.eq.s32.totalorder %s49, 1
      %p261 = por %p259, %p260
      %p262 = scmp.ne.s32.totalorder %s251, %s252
      %p263 = scmp.eq.s32.totalorder %s49, 0
      %p264 = por %p262, %p263
      %p265 = scmp.ne.s32.totalorder %s251, %s252
      %p266 = scmp.eq.s32.totalorder %s50, 1
      %p267 = por %p265, %p266
      %p269 = scmp.ne.s32.totalorder %s252, %s268
      %p270 = scmp.eq.s32.totalorder %s50, 0
      %p271 = por %p269, %p270
      %s272 = ssub.s32 %s52, %s59
      %p273 = scmp.eq.s32.totalorder %s272, 0
      %s275 = sadd.s32 %s274, 1
      %s276 = scalar_select %p273, %s274, %s275
      %p279 = pneg %p273
      %p280 = scmp.eq.s32.totalorder %s44, 1
      %p281 = por %p279, %p280
      %p282 = scmp.ne.s32.totalorder %s274, %s277
      %p283 = scmp.eq.s32.totalorder %s44, 0
      %p284 = por %p282, %p283
      %p285 = scmp.ne.s32.totalorder %s274, %s277
      %p286 = scmp.eq.s32.totalorder %s49, 1
      %p287 = por %p285, %p286
      %p288 = scmp.ne.s32.totalorder %s277, %s278
      %p289 = scmp.eq.s32.totalorder %s49, 0
      %p290 = por %p288, %p289
      %p291 = scmp.ne.s32.totalorder %s277, %s278
      %p292 = scmp.eq.s32.totalorder %s50, 1
      %p293 = por %p291, %p292
      %p295 = scmp.ne.s32.totalorder %s278, %s294
      %p296 = scmp.eq.s32.totalorder %s50, 0
      %p297 = por %p295, %p296
      %s298 = ssub.s32 %s52, %s59
      %p299 = scmp.eq.s32.totalorder %s298, 0
      %s301 = sadd.s32 %s300, 1
      %s302 = scalar_select %p299, %s300, %s301
      %p305 = pneg %p299
      %p306 = scmp.eq.s32.totalorder %s44, 1
      %p307 = por %p305, %p306
      %p308 = scmp.ne.s32.totalorder %s300, %s303
      %p309 = scmp.eq.s32.totalorder %s44, 0
      %p310 = por %p308, %p309
      %p311 = scmp.ne.s32.totalorder %s300, %s303
      %p312 = scmp.eq.s32.totalorder %s49, 1
      %p313 = por %p311, %p312
      %p314 = scmp.ne.s32.totalorder %s303, %s304
      %p315 = scmp.eq.s32.totalorder %s49, 0
      %p316 = por %p314, %p315
      %p317 = scmp.ne.s32.totalorder %s303, %s304
      %p318 = scmp.eq.s32.totalorder %s50, 1
      %p319 = por %p317, %p318
      %p321 = scmp.ne.s32.totalorder %s304, %s320
      %p322 = scmp.eq.s32.totalorder %s50, 0
      %p323 = por %p321, %p322
      %s324 = ssub.s32 %s52, %s59
      %p325 = scmp.eq.s32.totalorder %s324, 0
      %s327 = sadd.s32 %s326, 1
      %s328 = scalar_select %p325, %s326, %s327
      %p331 = pneg %p325
      %p332 = scmp.eq.s32.totalorder %s44, 1
      %p333 = por %p331, %p332
      %p334 = scmp.ne.s32.totalorder %s326, %s329
      %p335 = scmp.eq.s32.totalorder %s44, 0
      %p336 = por %p334, %p335
      %p337 = scmp.ne.s32.totalorder %s326, %s329
      %p338 = scmp.eq.s32.totalorder %s49, 1
      %p339 = por %p337, %p338
      %p340 = scmp.ne.s32.totalorder %s329, %s330
      %p341 = scmp.eq.s32.totalorder %s49, 0
      %p342 = por %p340, %p341
      %p343 = scmp.ne.s32.totalorder %s329, %s330
      %p344 = scmp.eq.s32.totalorder %s50, 1
      %p345 = por %p343, %p344
      %p347 = scmp.ne.s32.totalorder %s330, %s346
      %p348 = scmp.eq.s32.totalorder %s50, 0
      %p349 = por %p347, %p348
      %s350 = ssub.s32 %s52, %s59
      %p351 = scmp.eq.s32.totalorder %s350, 0
      %s353 = sadd.s32 %s352, 1
      %s354 = scalar_select %p351, %s352, %s353
      %p357 = pneg %p351
      %p358 = scmp.eq.s32.totalorder %s44, 1
      %p359 = por %p357, %p358
      %p360 = scmp.ne.s32.totalorder %s352, %s355
      %p361 = scmp.eq.s32.totalorder %s44, 0
      %p362 = por %p360, %p361
      %p363 = scmp.ne.s32.totalorder %s352, %s355
      %p364 = scmp.eq.s32.totalorder %s49, 1
      %p365 = por %p363, %p364
      %p366 = scmp.ne.s32.totalorder %s355, %s356
      %p367 = scmp.eq.s32.totalorder %s49, 0
      %p368 = por %p366, %p367
      %p369 = scmp.ne.s32.totalorder %s355, %s356
      %p370 = scmp.eq.s32.totalorder %s50, 1
      %p371 = por %p369, %p370
      %p373 = scmp.ne.s32.totalorder %s356, %s372
      %p374 = scmp.eq.s32.totalorder %s50, 0
      %p375 = por %p373, %p374
      %s376 = ssub.s32 %s52, %s59
      %p377 = scmp.eq.s32.totalorder %s376, 0
      %s379 = sadd.s32 %s378, 1
      %s380 = scalar_select %p377, %s378, %s379
      %p383 = pneg %p377
      %p384 = scmp.eq.s32.totalorder %s44, 1
      %p385 = por %p383, %p384
      %p386 = scmp.ne.s32.totalorder %s378, %s381
      %p387 = scmp.eq.s32.totalorder %s44, 0
      %p388 = por %p386, %p387
      %p389 = scmp.ne.s32.totalorder %s378, %s381
      %p390 = scmp.eq.s32.totalorder %s49, 1
      %p391 = por %p389, %p390
      %p392 = scmp.ne.s32.totalorder %s381, %s382
      %p393 = scmp.eq.s32.totalorder %s49, 0
      %p394 = por %p392, %p393
      %p395 = scmp.ne.s32.totalorder %s381, %s382
      %p396 = scmp.eq.s32.totalorder %s50, 1
      %p397 = por %p395, %p396
      %p399 = scmp.ne.s32.totalorder %s382, %s398
      %p400 = scmp.eq.s32.totalorder %s50, 0
      %p401 = por %p399, %p400
      %s403 = sadd.s32 %s402, 1
      %p406 = scmp.eq.s32.totalorder %s44, 1
      %p407 = scmp.ne.s32.totalorder %s402, %s404
      %p408 = scmp.eq.s32.totalorder %s44, 0
      %p409 = por %p407, %p408
      %p410 = scmp.ne.s32.totalorder %s402, %s404
      %p411 = scmp.eq.s32.totalorder %s49, 1
      %p412 = por %p410, %p411
      %p413 = scmp.ne.s32.totalorder %s404, %s405
      %p414 = scmp.eq.s32.totalorder %s49, 0
      %p415 = por %p413, %p414
      %p416 = scmp.ne.s32.totalorder %s404, %s405
      %p417 = scmp.eq.s32.totalorder %s50, 1
      %p418 = por %p416, %p417
      %p420 = scmp.ne.s32.totalorder %s405, %s419
      %p421 = scmp.eq.s32.totalorder %s50, 0
      %p422 = por %p420, %p421
      %s424 = sadd.s32 %s423, 1
      %p427 = scmp.eq.s32.totalorder %s44, 1
      %p428 = scmp.ne.s32.totalorder %s423, %s425
      %p429 = scmp.eq.s32.totalorder %s44, 0
      %p430 = por %p428, %p429
      %p431 = scmp.ne.s32.totalorder %s423, %s425
      %p432 = scmp.eq.s32.totalorder %s49, 1
      %p433 = por %p431, %p432
      %p434 = scmp.ne.s32.totalorder %s425, %s426
      %p435 = scmp.eq.s32.totalorder %s49, 0
      %p436 = por %p434, %p435
      %p437 = scmp.ne.s32.totalorder %s425, %s426
      %p438 = scmp.eq.s32.totalorder %s50, 1
      %p439 = por %p437, %p438
      %p441 = scmp.ne.s32.totalorder %s426, %s440
      %p442 = scmp.eq.s32.totalorder %s50, 0
      %p443 = por %p441, %p442
      %s445 = sadd.s32 %s444, 1
      %p448 = scmp.eq.s32.totalorder %s44, 1
      %p449 = scmp.ne.s32.totalorder %s444, %s446
      %p450 = scmp.eq.s32.totalorder %s44, 0
      %p451 = por %p449, %p450
      %p452 = scmp.ne.s32.totalorder %s444, %s446
      %p453 = scmp.eq.s32.totalorder %s49, 1
      %p454 = por %p452, %p453
      %p455 = scmp.ne.s32.totalorder %s446, %s447
      %p456 = scmp.eq.s32.totalorder %s49, 0
      %p457 = por %p455, %p456
      %p458 = scmp.ne.s32.totalorder %s446, %s447
      %p459 = scmp.eq.s32.totalorder %s50, 1
      %p460 = por %p458, %p459
      %p462 = scmp.ne.s32.totalorder %s447, %s461
      %p463 = scmp.eq.s32.totalorder %s50, 0
      %p464 = por %p462, %p463
      %s465 = ssub.s32 %s51, %s63
      %p466 = scmp.eq.s32.totalorder %s465, 0
      %s468 = sadd.s32 %s467, 1
      %s469 = scalar_select %p466, %s467, %s468
      %p472 = pneg %p466
      %p473 = scmp.eq.s32.totalorder %s44, 1
      %p474 = por %p472, %p473
      %p475 = scmp.ne.s32.totalorder %s467, %s470
      %p476 = scmp.eq.s32.totalorder %s44, 0
      %p477 = por %p475, %p476
      %p478 = scmp.ne.s32.totalorder %s467, %s470
      %p479 = scmp.eq.s32.totalorder %s49, 1
      %p480 = por %p478, %p479
      %p481 = scmp.ne.s32.totalorder %s470, %s471
      %p482 = scmp.eq.s32.totalorder %s49, 0
      %p483 = por %p481, %p482
      %p484 = scmp.ne.s32.totalorder %s470, %s471
      %p485 = scmp.eq.s32.totalorder %s50, 1
      %p486 = por %p484, %p485
      %p488 = scmp.ne.s32.totalorder %s471, %s487
      %p489 = scmp.eq.s32.totalorder %s50, 0
      %p490 = por %p488, %p489
      %p491 = scmp.le.s32.totalorder 1, %s44
      %p492 = scmp.lt.s32.totalorder %s44, 3
      %p493 = pnand %p491, %p492
      %p494 = pneg %p493
      // Predicated region
      $region9: #{tpu_custom_call.1} parent=5 // pred_check
        _
      $region10: #{tpu_custom_call.1} parent=5 // pred_check_branch
        %496 = sbr.rel (%p493) target = $region12
      $region11: #{tpu_custom_call.1} parent=5 // pred_region
        %s497 = ssub.s32 %s44, 1
        // Predicated region
        $region13: #{tpu_custom_call.1} parent=11 // pred_check
          %p498 = pneg %p82
        $region14: #{tpu_custom_call.1} parent=11 // pred_check_branch
          %500 = sbr.rel (%p498) target = $region16
        $region15: #{tpu_custom_call.1} parent=11 // pred_region
          %s501 = smul.u32 6, %s53
          %s503 = ssub.s32 768, 768
          %504 = vsyncadd [#allocation4], %s503
          %s505 = smul.addr %s501, 128
          %s506 = scalar_lea.hbm %s0, %s505
          %s507 = sshll.u32 [#allocation3], 4
          %s508 = int_to_ptr.vmem [resolvable:$true] %s507
          %513 = dma.hbm_to_vmem [thread:$0]  %s506, 768, %s508, [#allocation4], 128, 128, 8
        $region16: #{tpu_custom_call.1} parent=11 // pred_fallthru
          _
        // Predicated region
        $region17: #{tpu_custom_call.1} parent=11 // pred_check
          %p514 = pneg %p415
        $region18: #{tpu_custom_call.1} parent=11 // pred_check_branch
          %516 = sbr.rel (%p514) target = $region20
        $region19: #{tpu_custom_call.1} parent=11 // pred_region
          %s518 = ssub.s32 16, 16
          %519 = vsyncadd [#allocation25], %s518
          %s521 = sshll.u32 [#allocation24], 4
          %s522 = int_to_ptr.vmem [resolvable:$true] %s521
          %524 = dma.hbm_to_vmem [thread:$0]  %s13, 16, %s522, [#allocation25]
        $region20: #{tpu_custom_call.1} parent=11 // pred_fallthru
          _
        // Predicated region
        $region21: #{tpu_custom_call.1} parent=11 // pred_check
          %p525 = pneg %p436
        $region22: #{tpu_custom_call.1} parent=11 // pred_check_branch
          %527 = sbr.rel (%p525) target = $region24
        $region23: #{tpu_custom_call.1} parent=11 // pred_region
          %s529 = ssub.s32 16, 16
          %530 = vsyncadd [#allocation25], %s529
          %s532 = sshll.u32 [#allocation26], 4
          %s533 = int_to_ptr.vmem [resolvable:$true] %s532
          %535 = dma.hbm_to_vmem [thread:$0]  %s14, 16, %s533, [#allocation25]
        $region24: #{tpu_custom_call.1} parent=11 // pred_fallthru
          _
        // Predicated region
        $region25: #{tpu_custom_call.1} parent=11 // pred_check
          %p536 = pneg %p457
        $region26: #{tpu_custom_call.1} parent=11 // pred_check_branch
          %538 = sbr.rel (%p536) target = $region28
        $region27: #{tpu_custom_call.1} parent=11 // pred_region
          %s540 = ssub.s32 128, 128
          %541 = vsyncadd [#allocation28], %s540
          %s543 = sshll.u32 [#allocation27], 4
          %s544 = int_to_ptr.vmem [resolvable:$true] %s543
          %546 = dma.hbm_to_vmem [thread:$0]  %s15, 128, %s544, [#allocation28]
        $region28: #{tpu_custom_call.1} parent=11 // pred_fallthru
          _
      $region12: #{tpu_custom_call.1} parent=5 // pred_fallthru
        _
      %p547 = scmp.lt.s32.totalorder %s44, 2
      // Predicated region
      $region29: #{tpu_custom_call.1} parent=5 // pred_check
        %p548 = pneg %p547
      $region30: #{tpu_custom_call.1} parent=5 // pred_check_branch
        %550 = sbr.rel (%p548) target = $region32
      $region31: #{tpu_custom_call.1} parent=5 // pred_region
        // Predicated region
        $region33: #{tpu_custom_call.1} parent=31 // pred_check
          %p551 = pneg %p102
        $region34: #{tpu_custom_call.1} parent=31 // pred_check_branch
          %553 = sbr.rel (%p551) target = $region36
        $region35: #{tpu_custom_call.1} parent=31 // pred_region
          %s554 = sand.u32 %s44, 1
          %s555 = scalar_lea.sflag [#allocation7], %s554
          %s556 = sand.u32 %s92, 1
          %s557 = scalar_lea.vmem [#allocation6], %s556
          %s559 = ssub.s32 16, 16
          %560 = vsyncadd %s555, %s559
          %s561 = smul.addr %s52, 16
          %s562 = scalar_lea.hbm %s1, %s561
          %s564 = sshll.u32 %s557, 4
          %s565 = int_to_ptr.vmem [resolvable:$true] %s564
          %567 = dma.hbm_to_vmem [thread:$0]  %s562, 16, %s565, %s555
        $region36: #{tpu_custom_call.1} parent=31 // pred_fallthru
          _
        // Predicated region
        $region37: #{tpu_custom_call.1} parent=31 // pred_check
          %p568 = pneg %p128
        $region38: #{tpu_custom_call.1} parent=31 // pred_check_branch
          %570 = sbr.rel (%p568) target = $region40
        $region39: #{tpu_custom_call.1} parent=31 // pred_region
          %s571 = sand.u32 %s44, 1
          %s572 = scalar_lea.sflag [#allocation7], %s571
          %s573 = sand.u32 %s118, 1
          %s574 = scalar_lea.vmem [#allocation8], %s573
          %s576 = ssub.s32 16, 16
          %577 = vsyncadd %s572, %s576
          %s578 = smul.addr %s52, 16
          %s579 = scalar_lea.hbm %s2, %s578
          %s581 = sshll.u32 %s574, 4
          %s582 = int_to_ptr.vmem [resolvable:$true] %s581
          %584 = dma.hbm_to_vmem [thread:$0]  %s579, 16, %s582, %s572
        $region40: #{tpu_custom_call.1} parent=31 // pred_fallthru
          _
        // Predicated region
        $region41: #{tpu_custom_call.1} parent=31 // pred_check
          %p585 = pneg %p154
        $region42: #{tpu_custom_call.1} parent=31 // pred_check_branch
          %587 = sbr.rel (%p585) target = $region44
        $region43: #{tpu_custom_call.1} parent=31 // pred_region
          %s588 = sand.u32 %s44, 1
          %s589 = scalar_lea.sflag [#allocation10], %s588
          %s590 = sand.u32 %s144, 1
          %s591 = smul.addr %s590, 16
          %s592 = scalar_lea.vmem [#allocation9], %s591
          %s594 = ssub.s32 256, 256
          %595 = vsyncadd %s589, %s594
          %s596 = smul.addr %s52, 4
          %s597 = smul.addr %s596, 64
          %s598 = scalar_lea.hbm %s3, %s597
          %s599 = sshll.u32 %s592, 4
          %s600 = int_to_ptr.vmem [resolvable:$true] %s599
          %605 = dma.hbm_to_vmem [thread:$0]  %s598, 256, %s600, %s589, 64, 64, 4
        $region44: #{tpu_custom_call.1} parent=31 // pred_fallthru
          _
        // Predicated region
        $region45: #{tpu_custom_call.1} parent=31 // pred_check
          %p606 = pneg %p180
        $region46: #{tpu_custom_call.1} parent=31 // pred_check_branch
          %608 = sbr.rel (%p606) target = $region48
        $region47: #{tpu_custom_call.1} parent=31 // pred_region
          %s609 = sand.u32 %s44, 1
          %s610 = scalar_lea.sflag [#allocation10], %s609
          %s611 = sand.u32 %s170, 1
          %s612 = scalar_lea.vmem [#allocation11], %s611
          %s614 = ssub.s32 16, 16
          %615 = vsyncadd %s610, %s614
          %s616 = smul.addr %s52, 16
          %s617 = scalar_lea.hbm %s4, %s616
          %s619 = sshll.u32 %s612, 4
          %s620 = int_to_ptr.vmem [resolvable:$true] %s619
          %622 = dma.hbm_to_vmem [thread:$0]  %s617, 16, %s620, %s610
        $region48: #{tpu_custom_call.1} parent=31 // pred_fallthru
          _
        // Predicated region
        $region49: #{tpu_custom_call.1} parent=31 // pred_check
          %p623 = pneg %p206
        $region50: #{tpu_custom_call.1} parent=31 // pred_check_branch
          %625 = sbr.rel (%p623) target = $region52
        $region51: #{tpu_custom_call.1} parent=31 // pred_region
          %s626 = sand.u32 %s44, 1
          %s627 = scalar_lea.sflag [#allocation13], %s626
          %s628 = sand.u32 %s196, 1
          %s629 = smul.addr %s628, 16
          %s630 = scalar_lea.vmem [#allocation12], %s629
          %s632 = ssub.s32 256, 256
          %633 = vsyncadd %s627, %s632
          %s634 = smul.addr %s52, 4
          %s635 = smul.addr %s634, 64
          %s636 = scalar_lea.hbm %s5, %s635
          %s637 = sshll.u32 %s630, 4
          %s638 = int_to_ptr.vmem [resolvable:$true] %s637
          %643 = dma.hbm_to_vmem [thread:$0]  %s636, 256, %s638, %s627, 64, 64, 4
        $region52: #{tpu_custom_call.1} parent=31 // pred_fallthru
          _
        // Predicated region
        $region53: #{tpu_custom_call.1} parent=31 // pred_check
          %p644 = pneg %p232
        $region54: #{tpu_custom_call.1} parent=31 // pred_check_branch
          %646 = sbr.rel (%p644) target = $region56
        $region55: #{tpu_custom_call.1} parent=31 // pred_region
          %s647 = sand.u32 %s44, 1
          %s648 = scalar_lea.sflag [#allocation13], %s647
          %s649 = sand.u32 %s222, 1
          %s650 = scalar_lea.vmem [#allocation14], %s649
          %s652 = ssub.s32 16, 16
          %653 = vsyncadd %s648, %s652
          %s654 = smul.addr %s52, 16
          %s655 = scalar_lea.hbm %s6, %s654
          %s657 = sshll.u32 %s650, 4
          %s658 = int_to_ptr.vmem [resolvable:$true] %s657
          %660 = dma.hbm_to_vmem [thread:$0]  %s655, 16, %s658, %s648
        $region56: #{tpu_custom_call.1} parent=31 // pred_fallthru
          _
        // Predicated region
        $region57: #{tpu_custom_call.1} parent=31 // pred_check
          %p661 = pneg %p258
        $region58: #{tpu_custom_call.1} parent=31 // pred_check_branch
          %663 = sbr.rel (%p661) target = $region60
        $region59: #{tpu_custom_call.1} parent=31 // pred_region
          %s664 = sand.u32 %s44, 1
          %s665 = scalar_lea.sflag [#allocation16], %s664
          %s666 = sand.u32 %s248, 1
          %s667 = scalar_lea.vmem [#allocation15], %s666
          %s669 = ssub.s32 16, 16
          %670 = vsyncadd %s665, %s669
          %s671 = smul.addr %s52, 16
          %s672 = scalar_lea.hbm %s7, %s671
          %s674 = sshll.u32 %s667, 4
          %s675 = int_to_ptr.vmem [resolvable:$true] %s674
          %677 = dma.hbm_to_vmem [thread:$0]  %s672, 16, %s675, %s665
        $region60: #{tpu_custom_call.1} parent=31 // pred_fallthru
          _
        // Predicated region
        $region61: #{tpu_custom_call.1} parent=31 // pred_check
          %p678 = pneg %p284
        $region62: #{tpu_custom_call.1} parent=31 // pred_check_branch
          %680 = sbr.rel (%p678) target = $region64
        $region63: #{tpu_custom_call.1} parent=31 // pred_region
          %s681 = sand.u32 %s44, 1
          %s682 = scalar_lea.sflag [#allocation16], %s681
          %s683 = sand.u32 %s274, 1
          %s684 = scalar_lea.vmem [#allocation17], %s683
          %s686 = ssub.s32 16, 16
          %687 = vsyncadd %s682, %s686
          %s688 = smul.addr %s52, 16
          %s689 = scalar_lea.hbm %s8, %s688
          %s691 = sshll.u32 %s684, 4
          %s692 = int_to_ptr.vmem [resolvable:$true] %s691
          %694 = dma.hbm_to_vmem [thread:$0]  %s689, 16, %s692, %s682
        $region64: #{tpu_custom_call.1} parent=31 // pred_fallthru
          _
        // Predicated region
        $region65: #{tpu_custom_call.1} parent=31 // pred_check
          %p695 = pneg %p310
        $region66: #{tpu_custom_call.1} parent=31 // pred_check_branch
          %697 = sbr.rel (%p695) target = $region68
        $region67: #{tpu_custom_call.1} parent=31 // pred_region
          %s698 = sand.u32 %s44, 1
          %s699 = scalar_lea.sflag [#allocation19], %s698
          %s700 = sand.u32 %s300, 1
          %s701 = smul.addr %s700, 16
          %s702 = scalar_lea.vmem [#allocation18], %s701
          %s704 = ssub.s32 256, 256
          %705 = vsyncadd %s699, %s704
          %s706 = smul.addr %s52, 4
          %s707 = smul.addr %s706, 64
          %s708 = scalar_lea.hbm %s9, %s707
          %s709 = sshll.u32 %s702, 4
          %s710 = int_to_ptr.vmem [resolvable:$true] %s709
          %715 = dma.hbm_to_vmem [thread:$0]  %s708, 256, %s710, %s699, 64, 64, 4
        $region68: #{tpu_custom_call.1} parent=31 // pred_fallthru
          _
        // Predicated region
        $region69: #{tpu_custom_call.1} parent=31 // pred_check
          %p716 = pneg %p336
        $region70: #{tpu_custom_call.1} parent=31 // pred_check_branch
          %718 = sbr.rel (%p716) target = $region72
        $region71: #{tpu_custom_call.1} parent=31 // pred_region
          %s719 = sand.u32 %s44, 1
          %s720 = scalar_lea.sflag [#allocation19], %s719
          %s721 = sand.u32 %s326, 1
          %s722 = scalar_lea.vmem [#allocation20], %s721
          %s724 = ssub.s32 16, 16
          %725 = vsyncadd %s720, %s724
          %s726 = smul.addr %s52, 16
          %s727 = scalar_lea.hbm %s10, %s726
          %s729 = sshll.u32 %s722, 4
          %s730 = int_to_ptr.vmem [resolvable:$true] %s729
          %732 = dma.hbm_to_vmem [thread:$0]  %s727, 16, %s730, %s720
        $region72: #{tpu_custom_call.1} parent=31 // pred_fallthru
          _
        // Predicated region
        $region73: #{tpu_custom_call.1} parent=31 // pred_check
          %p733 = pneg %p362
        $region74: #{tpu_custom_call.1} parent=31 // pred_check_branch
          %735 = sbr.rel (%p733) target = $region76
        $region75: #{tpu_custom_call.1} parent=31 // pred_region
          %s736 = sand.u32 %s44, 1
          %s737 = scalar_lea.sflag [#allocation22], %s736
          %s738 = sand.u32 %s352, 1
          %s739 = smul.addr %s738, 64
          %s740 = scalar_lea.vmem [#allocation21], %s739
          %s742 = ssub.s32 1024, 1024
          %743 = vsyncadd %s737, %s742
          %s744 = smul.addr %s52, 16
          %s745 = smul.addr %s744, 64
          %s746 = scalar_lea.hbm %s11, %s745
          %s747 = sshll.u32 %s740, 4
          %s748 = int_to_ptr.vmem [resolvable:$true] %s747
          %753 = dma.hbm_to_vmem [thread:$0]  %s746, 1024, %s748, %s737, 64, 64, 4
        $region76: #{tpu_custom_call.1} parent=31 // pred_fallthru
          _
        // Predicated region
        $region77: #{tpu_custom_call.1} parent=31 // pred_check
          %p754 = pneg %p388
        $region78: #{tpu_custom_call.1} parent=31 // pred_check_branch
          %756 = sbr.rel (%p754) target = $region80
        $region79: #{tpu_custom_call.1} parent=31 // pred_region
          %s757 = sand.u32 %s44, 1
          %s758 = scalar_lea.sflag [#allocation22], %s757
          %s759 = sand.u32 %s378, 1
          %s760 = scalar_lea.vmem [#allocation23], %s759
          %s762 = ssub.s32 16, 16
          %763 = vsyncadd %s758, %s762
          %s764 = smul.addr %s52, 16
          %s765 = scalar_lea.hbm %s12, %s764
          %s767 = sshll.u32 %s760, 4
          %s768 = int_to_ptr.vmem [resolvable:$true] %s767
          %770 = dma.hbm_to_vmem [thread:$0]  %s765, 16, %s768, %s758
        $region80: #{tpu_custom_call.1} parent=31 // pred_fallthru
          _
      $region32: #{tpu_custom_call.1} parent=5 // pred_fallthru
        _
      %p771 = scmp.le.s32.totalorder 1, %s44
      %p772 = scmp.lt.s32.totalorder %s44, 3
      %p773 = pnand %p771, %p772
      %p774 = pneg %p773
      // Predicated region
      $region81: #{tpu_custom_call.1} parent=5 // pred_check
        _
      $region82: #{tpu_custom_call.1} parent=5 // pred_check_branch
        %776 = sbr.rel (%p773) target = $region84
      $region83: #{tpu_custom_call.1} parent=5 // pred_region
        %s777 = ssub.s32 %s44, 1
        // Predicated region
        $region85: #{tpu_custom_call.1} parent=83 // pred_check
          %p778 = pneg %p82
        $region86: #{tpu_custom_call.1} parent=83 // pred_check_branch
          %780 = sbr.rel (%p778) target = $region88
        $region87: #{tpu_custom_call.1} parent=83 // pred_region
          %781 = dma.done [#allocation4], 768
        $region88: #{tpu_custom_call.1} parent=83 // pred_fallthru
          _
        %s782 = sand.u32 %s49, 1
        %s783 = scalar_lea.sflag [#allocation7], %s782
        %s784 = sand.u32 %s95, 1
        %s785 = scalar_lea.vmem [#allocation6], %s784
        // Predicated region
        $region89: #{tpu_custom_call.1} parent=83 // pred_check
          %p786 = pneg %p108
        $region90: #{tpu_custom_call.1} parent=83 // pred_check_branch
          %788 = sbr.rel (%p786) target = $region92
        $region91: #{tpu_custom_call.1} parent=83 // pred_region
          %789 = dma.done %s783, 16
        $region92: #{tpu_custom_call.1} parent=83 // pred_fallthru
          _
        %s790 = sand.u32 %s49, 1
        %s791 = scalar_lea.sflag [#allocation7], %s790
        %s792 = sand.u32 %s121, 1
        %s793 = scalar_lea.vmem [#allocation8], %s792
        // Predicated region
        $region93: #{tpu_custom_call.1} parent=83 // pred_check
          %p794 = pneg %p134
        $region94: #{tpu_custom_call.1} parent=83 // pred_check_branch
          %796 = sbr.rel (%p794) target = $region96
        $region95: #{tpu_custom_call.1} parent=83 // pred_region
          %797 = dma.done %s791, 16
        $region96: #{tpu_custom_call.1} parent=83 // pred_fallthru
          _
        %s798 = sand.u32 %s49, 1
        %s799 = scalar_lea.sflag [#allocation10], %s798
        %s800 = sand.u32 %s147, 1
        %s801 = smul.addr %s800, 16
        %s802 = scalar_lea.vmem [#allocation9], %s801
        // Predicated region
        $region97: #{tpu_custom_call.1} parent=83 // pred_check
          %p803 = pneg %p160
        $region98: #{tpu_custom_call.1} parent=83 // pred_check_branch
          %805 = sbr.rel (%p803) target = $region100
        $region99: #{tpu_custom_call.1} parent=83 // pred_region
          %806 = dma.done %s799, 256
        $region100: #{tpu_custom_call.1} parent=83 // pred_fallthru
          _
        %s807 = sand.u32 %s49, 1
        %s808 = scalar_lea.sflag [#allocation10], %s807
        %s809 = sand.u32 %s173, 1
        %s810 = scalar_lea.vmem [#allocation11], %s809
        // Predicated region
        $region101: #{tpu_custom_call.1} parent=83 // pred_check
          %p811 = pneg %p186
        $region102: #{tpu_custom_call.1} parent=83 // pred_check_branch
          %813 = sbr.rel (%p811) target = $region104
        $region103: #{tpu_custom_call.1} parent=83 // pred_region
          %814 = dma.done %s808, 16
        $region104: #{tpu_custom_call.1} parent=83 // pred_fallthru
          _
        %s815 = sand.u32 %s49, 1
        %s816 = scalar_lea.sflag [#allocation13], %s815
        %s817 = sand.u32 %s199, 1
        %s818 = smul.addr %s817, 16
        %s819 = scalar_lea.vmem [#allocation12], %s818
        // Predicated region
        $region105: #{tpu_custom_call.1} parent=83 // pred_check
          %p820 = pneg %p212
        $region106: #{tpu_custom_call.1} parent=83 // pred_check_branch
          %822 = sbr.rel (%p820) target = $region108
        $region107: #{tpu_custom_call.1} parent=83 // pred_region
          %823 = dma.done %s816, 256
        $region108: #{tpu_custom_call.1} parent=83 // pred_fallthru
          _
        %s824 = sand.u32 %s49, 1
        %s825 = scalar_lea.sflag [#allocation13], %s824
        %s826 = sand.u32 %s225, 1
        %s827 = scalar_lea.vmem [#allocation14], %s826
        // Predicated region
        $region109: #{tpu_custom_call.1} parent=83 // pred_check
          %p828 = pneg %p238
        $region110: #{tpu_custom_call.1} parent=83 // pred_check_branch
          %830 = sbr.rel (%p828) target = $region112
        $region111: #{tpu_custom_call.1} parent=83 // pred_region
          %831 = dma.done %s825, 16
        $region112: #{tpu_custom_call.1} parent=83 // pred_fallthru
          _
        %s832 = sand.u32 %s49, 1
        %s833 = scalar_lea.sflag [#allocation16], %s832
        %s834 = sand.u32 %s251, 1
        %s835 = scalar_lea.vmem [#allocation15], %s834
        // Predicated region
        $region113: #{tpu_custom_call.1} parent=83 // pred_check
          %p836 = pneg %p264
        $region114: #{tpu_custom_call.1} parent=83 // pred_check_branch
          %838 = sbr.rel (%p836) target = $region116
        $region115: #{tpu_custom_call.1} parent=83 // pred_region
          %839 = dma.done %s833, 16
        $region116: #{tpu_custom_call.1} parent=83 // pred_fallthru
          _
        %s840 = sand.u32 %s49, 1
        %s841 = scalar_lea.sflag [#allocation16], %s840
        %s842 = sand.u32 %s277, 1
        %s843 = scalar_lea.vmem [#allocation17], %s842
        // Predicated region
        $region117: #{tpu_custom_call.1} parent=83 // pred_check
          %p844 = pneg %p290
        $region118: #{tpu_custom_call.1} parent=83 // pred_check_branch
          %846 = sbr.rel (%p844) target = $region120
        $region119: #{tpu_custom_call.1} parent=83 // pred_region
          %847 = dma.done %s841, 16
        $region120: #{tpu_custom_call.1} parent=83 // pred_fallthru
          _
        %s848 = sand.u32 %s49, 1
        %s849 = scalar_lea.sflag [#allocation19], %s848
        %s850 = sand.u32 %s303, 1
        %s851 = smul.addr %s850, 16
        %s852 = scalar_lea.vmem [#allocation18], %s851
        // Predicated region
        $region121: #{tpu_custom_call.1} parent=83 // pred_check
          %p853 = pneg %p316
        $region122: #{tpu_custom_call.1} parent=83 // pred_check_branch
          %855 = sbr.rel (%p853) target = $region124
        $region123: #{tpu_custom_call.1} parent=83 // pred_region
          %856 = dma.done %s849, 256
        $region124: #{tpu_custom_call.1} parent=83 // pred_fallthru
          _
        %s857 = sand.u32 %s49, 1
        %s858 = scalar_lea.sflag [#allocation19], %s857
        %s859 = sand.u32 %s329, 1
        %s860 = scalar_lea.vmem [#allocation20], %s859
        // Predicated region
        $region125: #{tpu_custom_call.1} parent=83 // pred_check
          %p861 = pneg %p342
        $region126: #{tpu_custom_call.1} parent=83 // pred_check_branch
          %863 = sbr.rel (%p861) target = $region128
        $region127: #{tpu_custom_call.1} parent=83 // pred_region
          %864 = dma.done %s858, 16
        $region128: #{tpu_custom_call.1} parent=83 // pred_fallthru
          _
        %s865 = sand.u32 %s49, 1
        %s866 = scalar_lea.sflag [#allocation22], %s865
        %s867 = sand.u32 %s355, 1
        %s868 = smul.addr %s867, 64
        %s869 = scalar_lea.vmem [#allocation21], %s868
        // Predicated region
        $region129: #{tpu_custom_call.1} parent=83 // pred_check
          %p870 = pneg %p368
        $region130: #{tpu_custom_call.1} parent=83 // pred_check_branch
          %872 = sbr.rel (%p870) target = $region132
        $region131: #{tpu_custom_call.1} parent=83 // pred_region
          %873 = dma.done %s866, 1024
        $region132: #{tpu_custom_call.1} parent=83 // pred_fallthru
          _
        %s874 = sand.u32 %s49, 1
        %s875 = scalar_lea.sflag [#allocation22], %s874
        %s876 = sand.u32 %s381, 1
        %s877 = scalar_lea.vmem [#allocation23], %s876
        // Predicated region
        $region133: #{tpu_custom_call.1} parent=83 // pred_check
          %p878 = pneg %p394
        $region134: #{tpu_custom_call.1} parent=83 // pred_check_branch
          %880 = sbr.rel (%p878) target = $region136
        $region135: #{tpu_custom_call.1} parent=83 // pred_region
          %881 = dma.done %s875, 16
        $region136: #{tpu_custom_call.1} parent=83 // pred_fallthru
          _
        // Predicated region
        $region137: #{tpu_custom_call.1} parent=83 // pred_check
          %p882 = pneg %p415
        $region138: #{tpu_custom_call.1} parent=83 // pred_check_branch
          %884 = sbr.rel (%p882) target = $region140
        $region139: #{tpu_custom_call.1} parent=83 // pred_region
          %885 = dma.done [#allocation25], 16
        $region140: #{tpu_custom_call.1} parent=83 // pred_fallthru
          _
        // Predicated region
        $region141: #{tpu_custom_call.1} parent=83 // pred_check
          %p886 = pneg %p436
        $region142: #{tpu_custom_call.1} parent=83 // pred_check_branch
          %888 = sbr.rel (%p886) target = $region144
        $region143: #{tpu_custom_call.1} parent=83 // pred_region
          %889 = dma.done [#allocation25], 16
        $region144: #{tpu_custom_call.1} parent=83 // pred_fallthru
          _
        // Predicated region
        $region145: #{tpu_custom_call.1} parent=83 // pred_check
          %p890 = pneg %p457
        $region146: #{tpu_custom_call.1} parent=83 // pred_check_branch
          %892 = sbr.rel (%p890) target = $region148
        $region147: #{tpu_custom_call.1} parent=83 // pred_region
          %893 = dma.done [#allocation28], 128
        $region148: #{tpu_custom_call.1} parent=83 // pred_fallthru
          _
        %p894 = pneg %p82
        %p895 = pneg %p79
        %s896 = sand.u32 %s49, 1
        %s897 = scalar_lea.sflag [#allocation7], %s896
        %s898 = sand.u32 %s95, 1
        %s899 = scalar_lea.vmem [#allocation6], %s898
        %p900 = pneg %p108
        %p901 = pneg %p105
        %s902 = sand.u32 %s49, 1
        %s903 = scalar_lea.sflag [#allocation7], %s902
        %s904 = sand.u32 %s121, 1
        %s905 = scalar_lea.vmem [#allocation8], %s904
        %p906 = pneg %p134
        %p907 = pneg %p131
        %s908 = sand.u32 %s49, 1
        %s909 = scalar_lea.sflag [#allocation10], %s908
        %s910 = sand.u32 %s147, 1
        %s911 = smul.addr %s910, 16
        %s912 = scalar_lea.vmem [#allocation9], %s911
        %p913 = pneg %p160
        %p914 = pneg %p157
        %s915 = sand.u32 %s49, 1
        %s916 = scalar_lea.sflag [#allocation10], %s915
        %s917 = sand.u32 %s173, 1
        %s918 = scalar_lea.vmem [#allocation11], %s917
        %p919 = pneg %p186
        %p920 = pneg %p183
        %s921 = sand.u32 %s49, 1
        %s922 = scalar_lea.sflag [#allocation13], %s921
        %s923 = sand.u32 %s199, 1
        %s924 = smul.addr %s923, 16
        %s925 = scalar_lea.vmem [#allocation12], %s924
        %p926 = pneg %p212
        %p927 = pneg %p209
        %s928 = sand.u32 %s49, 1
        %s929 = scalar_lea.sflag [#allocation13], %s928
        %s930 = sand.u32 %s225, 1
        %s931 = scalar_lea.vmem [#allocation14], %s930
        %p932 = pneg %p238
        %p933 = pneg %p235
        %s934 = sand.u32 %s49, 1
        %s935 = scalar_lea.sflag [#allocation16], %s934
        %s936 = sand.u32 %s251, 1
        %s937 = scalar_lea.vmem [#allocation15], %s936
        %p938 = pneg %p264
        %p939 = pneg %p261
        %s940 = sand.u32 %s49, 1
        %s941 = scalar_lea.sflag [#allocation16], %s940
        %s942 = sand.u32 %s277, 1
        %s943 = scalar_lea.vmem [#allocation17], %s942
        %p944 = pneg %p290
        %p945 = pneg %p287
        %s946 = sand.u32 %s49, 1
        %s947 = scalar_lea.sflag [#allocation19], %s946
        %s948 = sand.u32 %s303, 1
        %s949 = smul.addr %s948, 16
        %s950 = scalar_lea.vmem [#allocation18], %s949
        %p951 = pneg %p316
        %p952 = pneg %p313
        %s953 = sand.u32 %s49, 1
        %s954 = scalar_lea.sflag [#allocation19], %s953
        %s955 = sand.u32 %s329, 1
        %s956 = scalar_lea.vmem [#allocation20], %s955
        %p957 = pneg %p342
        %p958 = pneg %p339
        %s959 = sand.u32 %s49, 1
        %s960 = scalar_lea.sflag [#allocation22], %s959
        %s961 = sand.u32 %s355, 1
        %s962 = smul.addr %s961, 64
        %s963 = scalar_lea.vmem [#allocation21], %s962
        %p964 = pneg %p368
        %p965 = pneg %p365
        %s966 = sand.u32 %s49, 1
        %s967 = scalar_lea.sflag [#allocation22], %s966
        %s968 = sand.u32 %s381, 1
        %s969 = scalar_lea.vmem [#allocation23], %s968
        %p970 = pneg %p394
        %p971 = pneg %p391
        %p972 = pneg %p415
        %p973 = pneg %p412
        %p974 = pneg %p436
        %p975 = pneg %p433
        %p976 = pneg %p457
        %p977 = pneg %p454
        %p978 = pneg %p483
        %p979 = pneg %p480
        %s980 = smul.u32 6, %s53
        %s981 = smul.u32 6, %s53
        %p983 = scmp.eq.s32.totalorder %s54, 0
        // Predicated region
        $region149: #{tpu_custom_call.1} parent=83 // pred_check
          %p984 = pneg %p983
        $region150: #{tpu_custom_call.1} parent=83 // pred_check_branch
          %986 = sbr.rel (%p984) target = $region152
        $region151: #{tpu_custom_call.1} parent=83 // pred_region
          %v987 = vld [vmem:[#allocation3] sm:$0xff]
          %v988 = vld [vmem:[#allocation3 + $0x8] sm:$0xff]
          %v989 = vld [vmem:[#allocation3 + $0x10] sm:$0xff]
          %v990 = vld [vmem:[#allocation3 + $0x18] sm:$0xff]
          %v991 = vld [vmem:[#allocation3 + $0x20] sm:$0xff]
          %v992 = vld [vmem:[#allocation3 + $0x28] sm:$0xff]
          %vm993 = vcmask 261120
          %994 = vst.msk [vmem:[#allocation2] sm:$0xff] %vm993, %v987
          %995 = vst.msk [vmem:[#allocation2 + $0x8] sm:$0xff] %vm993, %v988
          %996 = vst.msk [vmem:[#allocation2 + $0x10] sm:$0xff] %vm993, %v989
          %997 = vst.msk [vmem:[#allocation2 + $0x18] sm:$0xff] %vm993, %v990
          %998 = vst.msk [vmem:[#allocation2 + $0x20] sm:$0xff] %vm993, %v991
          %999 = vst.msk [vmem:[#allocation2 + $0x28] sm:$0xff] %vm993, %v992
        $region152: #{tpu_custom_call.1} parent=83 // pred_fallthru
          _
        %v1000 = vld [vmem:[#allocation2] sm:$0xff]
        %v1001 = vld [vmem:[#allocation2 + $0x8] sm:$0xff]
        %v1002 = vld [vmem:[#allocation2 + $0x10] sm:$0xff]
        %v1003 = vld [vmem:[#allocation2 + $0x18] sm:$0xff]
        %v1004 = vld [vmem:[#allocation2 + $0x20] sm:$0xff]
        %v1005 = vld [vmem:[#allocation2 + $0x28] sm:$0xff]
        %v1006 = vld [vmem:[%s785] sm:$0x1]
        %v1007 = vld [vmem:[%s793] sm:$0x1]
        %vm1008 = vcmask 261120
        %v1009 = vsel %vm1008, %v1000, 0.0
        %1010 = vadd.xlane.f32.xlu0 %v1009
        %v1011 = vpop.xlane.xlu0 %1010
        %v1012 = vsel %vm1008, %v1001, 0.0
        %1013 = vadd.xlane.f32.xlu0 %v1012
        %v1014 = vpop.xlane.xlu0 %1013
        %v1015 = vsel %vm1008, %v1002, 0.0
        %1016 = vadd.xlane.f32.xlu0 %v1015
        %v1017 = vpop.xlane.xlu0 %1016
        %v1018 = vsel %vm1008, %v1003, 0.0
        %1019 = vadd.xlane.f32.xlu0 %v1018
        %v1020 = vpop.xlane.xlu0 %1019
        %v1021 = vsel %vm1008, %v1004, 0.0
        %1022 = vadd.xlane.f32.xlu0 %v1021
        %v1023 = vpop.xlane.xlu0 %1022
        %v1024 = vsel %vm1008, %v1005, 0.0
        %1025 = vadd.xlane.f32.xlu0 %v1024
        %v1026 = vpop.xlane.xlu0 %1025
        %v1027 = vrcp.pop 32.0
        %v1028 = vmul.f32 %v1011, %v1027
        %v1029 = vmul.f32 %v1014, %v1027
        %v1030 = vmul.f32 %v1017, %v1027
        %v1031 = vmul.f32 %v1020, %v1027
        %v1032 = vmul.f32 %v1023, %v1027
        %v1033 = vmul.f32 %v1026, %v1027
        %v1034 = vsub.f32 %v1000, %v1028
        %v1035 = vsub.f32 %v1001, %v1029
        %v1036 = vsub.f32 %v1002, %v1030
        %v1037 = vsub.f32 %v1003, %v1031
        %v1038 = vsub.f32 %v1004, %v1032
        %v1039 = vsub.f32 %v1005, %v1033
        %v1040 = vmul.f32 %v1034, %v1034
        %v1041 = vmul.f32 %v1035, %v1035
        %v1042 = vmul.f32 %v1036, %v1036
        %v1043 = vmul.f32 %v1037, %v1037
        %v1044 = vmul.f32 %v1038, %v1038
        %v1045 = vmul.f32 %v1039, %v1039
        %v1046 = vsel %vm1008, %v1040, 0.0
        %1047 = vadd.xlane.f32.xlu0 %v1046
        %v1048 = vpop.xlane.xlu0 %1047
        %v1049 = vsel %vm1008, %v1041, 0.0
        %1050 = vadd.xlane.f32.xlu0 %v1049
        %v1051 = vpop.xlane.xlu0 %1050
        %v1052 = vsel %vm1008, %v1042, 0.0
        %1053 = vadd.xlane.f32.xlu0 %v1052
        %v1054 = vpop.xlane.xlu0 %1053
        %v1055 = vsel %vm1008, %v1043, 0.0
        %1056 = vadd.xlane.f32.xlu0 %v1055
        %v1057 = vpop.xlane.xlu0 %1056
        %v1058 = vsel %vm1008, %v1044, 0.0
        %1059 = vadd.xlane.f32.xlu0 %v1058
        %v1060 = vpop.xlane.xlu0 %1059
        %v1061 = vsel %vm1008, %v1045, 0.0
        %1062 = vadd.xlane.f32.xlu0 %v1061
        %v1063 = vpop.xlane.xlu0 %1062
        %v1064 = vmul.f32 %v1048, %v1027
        %v1065 = vmul.f32 %v1051, %v1027
        %v1066 = vmul.f32 %v1054, %v1027
        %v1067 = vmul.f32 %v1057, %v1027
        %v1068 = vmul.f32 %v1060, %v1027
        %v1069 = vmul.f32 %v1063, %v1027
        %v1070 = vadd.f32 %v1064, 1e-05
        %v1071 = vadd.f32 %v1065, 1e-05
        %v1072 = vadd.f32 %v1066, 1e-05
        %v1073 = vadd.f32 %v1067, 1e-05
        %v1074 = vadd.f32 %v1068, 1e-05
        %v1075 = vadd.f32 %v1069, 1e-05
        %v1076 = vrsqrt.pop %v1070
        %v1077 = vrsqrt.pop %v1071
        %v1078 = vrsqrt.pop %v1072
        %v1079 = vrsqrt.pop %v1073
        %v1080 = vrsqrt.pop %v1074
        %v1081 = vrsqrt.pop %v1075
        %v1082 = vmul.f32 %v1034, %v1076
        %v1083 = vmul.f32 %v1035, %v1077
        %v1084 = vmul.f32 %v1036, %v1078
        %v1085 = vmul.f32 %v1037, %v1079
        %v1086 = vmul.f32 %v1038, %v1080
        %v1087 = vmul.f32 %v1039, %v1081
        %v1089 = vlaneseq
        %v1090 = vshrl.u32 %v1089, 7
        %v1091 = vsub.s32 0, %v1090
        %v1092 = vrot.slane %v1006, %v1091
        %v1094 = vmul.f32 %v1082, %v1092
        %v1095 = vmul.f32 %v1083, %v1092
        %v1096 = vmul.f32 %v1084, %v1092
        %v1097 = vmul.f32 %v1085, %v1092
        %v1098 = vmul.f32 %v1086, %v1092
        %v1099 = vmul.f32 %v1087, %v1092
        %v1101 = vlaneseq
        %v1102 = vshrl.u32 %v1101, 7
        %v1103 = vsub.s32 0, %v1102
        %v1104 = vrot.slane %v1007, %v1103
        %v1106 = vadd.f32 %v1094, %v1104
        %v1107 = vadd.f32 %v1095, %v1104
        %v1108 = vadd.f32 %v1096, %v1104
        %v1109 = vadd.f32 %v1097, %v1104
        %v1110 = vadd.f32 %v1098, %v1104
        %v1111 = vadd.f32 %v1099, %v1104
        %v1112 = vpack.c.bf16 %v1107, %v1106
        %v1113 = vpack.c.bf16 %v1109, %v1108
        %v1114 = vpack.c.bf16 %v1111, %v1110
        %v1115 = vld [vmem:[%s802] sm:$0xf]
        %v1116 = vld [vmem:[%s802 + $0x4] sm:$0xf]
        %v1117 = vld [vmem:[%s802 + $0x8] sm:$0xf]
        %v1118 = vld [vmem:[%s802 + $0xc] sm:$0xf]
        %v1119 = vld [vmem:[%s810] sm:$0x1]
        %v1121 = vlaneseq
        %v1122 = vshrl.u32 %v1121, 7
        %v1123 = vsub.s32 0, %v1122
        %v1124 = vrot.slane %v1119, %v1123
        %v1130 = vunpack.c.l.b16 %v1115
        %v1131 = vunpack.c.l.b16 %v1116
        %v1132 = vunpack.c.l.b16 %v1117
        %v1133 = vunpack.c.l.b16 %v1118
        %v1134 = vpack.c.b16 %v1131, %v1130
        %v1135 = vpack.c.b16 %v1133, %v1132
        %v1139 = vsel %vm1008, %v1112, 0
        %v1142 = vsel %vm1008, %v1113, 0
        %v1145 = vsel %vm1008, %v1114, 0
        %1147 = vmatprep.subr.bf16.mxu0 0
        %1148 = vmatpush1.bf16.msra.mxu0 %v1134
        %1149 = vmatprep.subr.bf16.mxu0 0
        %1150 = vmatpush1.bf16.msra.mxu0 %v1135
        %1151 = vmatprep.subr.bf16.mxu0 0
        %1152 = vmatpush1.bf16.msra.mxu0 0
        %1153 = vmatprep.subr.bf16.mxu0 0
        %1154 = vmatpush1.bf16.msra.mxu0 0
        %1155 = vmatprep.subr.bf16.mxu0 0
        %1156 = vmatpush1.bf16.msra.mxu0 0
        %1157 = vmatprep.subr.bf16.mxu0 0
        %1158 = vmatpush1.bf16.msra.mxu0 0
        %1159 = vmatprep.subr.bf16.mxu0 0
        %1160 = vmatpush1.bf16.msra.mxu0 0
        %1161 = vmatprep.subr.bf16.mxu0 0
        %1162 = vmatpush1.bf16.msra.mxu0 0
        %1163 = vmatprep.subr.bf16.mxu0 0
        %1164 = vmatpush1.bf16.msra.mxu0 0
        %1165 = vmatprep.subr.bf16.mxu0 0
        %1166 = vmatpush1.bf16.msra.mxu0 0
        %1167 = vmatprep.subr.bf16.mxu0 0
        %1168 = vmatpush1.bf16.msra.mxu0 0
        %1169 = vmatprep.subr.bf16.mxu0 0
        %1170 = vmatpush1.bf16.msra.mxu0 0
        %1171 = vmatprep.subr.bf16.mxu0 0
        %1172 = vmatpush1.bf16.msra.mxu0 0
        %1173 = vmatprep.subr.bf16.mxu0 0
        %1174 = vmatpush1.bf16.msra.mxu0 0
        %1175 = vmatprep.subr.bf16.mxu0 0
        %1176 = vmatpush1.bf16.msra.mxu0 0
        %1177 = vmatprep.subr.bf16.mxu0 0
        %1178 = vmatpush1.bf16.msra.mxu0 0
        %1179 = vmatprep.mubr.bf16.mxu0 0
        %1180 = vmatmul.mubr.bf16.gmra.mrb[0].mxu0 %v1139
        %v1181 = vpop.f32.mrb[0].mxu0
        %v1182 = vadd.f32 %v1124, %v1181
        %v1183 = vpop.f32.mrb[0].mxu0
        %v1184 = vpop.f32.mrb[0].mxu0
        %v1185 = vadd.f32 %v1124, %v1184
        %v1186 = vpop.f32.mrb[0].mxu0
        %1187 = vmatprep.mubr.bf16.mxu0 0
        %1188 = vmatmul.mubr.bf16.gmra.mrb[0].mxu0 %v1142
        %v1189 = vpop.f32.mrb[0].mxu0
        %v1190 = vadd.f32 %v1124, %v1189
        %v1191 = vpop.f32.mrb[0].mxu0
        %v1192 = vpop.f32.mrb[0].mxu0
        %v1193 = vadd.f32 %v1124, %v1192
        %v1194 = vpop.f32.mrb[0].mxu0
        %1195 = vmatprep.mubr.bf16.mxu0 0
        %1196 = vmatmul.mubr.bf16.gmra.mrb[0].mxu0 %v1145
        %v1197 = vpop.f32.mrb[0].mxu0
        %v1198 = vadd.f32 %v1124, %v1197
        %v1199 = vpop.f32.mrb[0].mxu0
        %v1200 = vpop.f32.mrb[0].mxu0
        %v1201 = vadd.f32 %v1124, %v1200
        %v1202 = vpop.f32.mrb[0].mxu0
        %1203 = vdwg.mxu0
        %v1204 = vpack.c.bf16 %v1185, %v1182
        %v1205 = vpack.c.bf16 %v1193, %v1190
        %v1206 = vpack.c.bf16 %v1201, %v1198
        %v1207 = vld [vmem:[#allocation27] sm:$0xff]
        %v1211 = vunpack.c.l.b16 %v1204
        %v1212 = vunpack.c.h.b16 %v1204
        %v1213 = vunpack.c.l.b16 %v1205
        %v1214 = vunpack.c.h.b16 %v1205
        %v1215 = vunpack.c.l.b16 %v1206
        %v1216 = vunpack.c.h.b16 %v1206
        %v1217 = vpack.c.b16 %v1211, %v1211
        %v1218 = vpack.c.b16 %v1212, %v1212
        %v1219 = vpack.c.b16 %v1213, %v1213
        %v1220 = vpack.c.b16 %v1214, %v1214
        %v1221 = vpack.c.b16 %v1215, %v1215
        %v1222 = vpack.c.b16 %v1216, %v1216
        %1223 = vrot.lane.b32.xlu0 %v1217, 96
        %v1224 = vpop.permute.xlu0 %1223
        %vm1225 = vcmask 64512
        %v1227 = vsel %vm1225, %v1217, 0
        %v1230 = vsel %vm1225, %v1224, 0
        %1232 = vmatprep.subr.bf16.mxu0 0
        %1233 = vmatpush1.bf16.xpose.msra.mxu0 %v1230
        %1234 = vmatprep.subr.bf16.mxu0 0
        %1235 = vmatpush1.bf16.xpose.msra.mxu0 0
        %1236 = vmatprep.subr.bf16.mxu0 0
        %1237 = vmatpush1.bf16.xpose.msra.mxu0 0
        %1238 = vmatprep.subr.bf16.mxu0 0
        %1239 = vmatpush1.bf16.xpose.msra.mxu0 0
        %1240 = vmatprep.subr.bf16.mxu0 0
        %1241 = vmatpush1.bf16.xpose.msra.mxu0 0
        %1242 = vmatprep.subr.bf16.mxu0 0
        %1243 = vmatpush1.bf16.xpose.msra.mxu0 0
        %1244 = vmatprep.subr.bf16.mxu0 0
        %1245 = vmatpush1.bf16.xpose.msra.mxu0 0
        %1246 = vmatprep.subr.bf16.mxu0 0
        %1247 = vmatpush1.bf16.xpose.msra.mxu0 0
        %1248 = vmatprep.subr.bf16.mxu0 0
        %1249 = vmatpush1.bf16.xpose.msra.mxu0 0
        %1250 = vmatprep.subr.bf16.mxu0 0
        %1251 = vmatpush1.bf16.xpose.msra.mxu0 0
        %1252 = vmatprep.subr.bf16.mxu0 0
        %1253 = vmatpush1.bf16.xpose.msra.mxu0 0
        %1254 = vmatprep.subr.bf16.mxu0 0
        %1255 = vmatpush1.bf16.xpose.msra.mxu0 0
        %1256 = vmatprep.subr.bf16.mxu0 0
        %1257 = vmatpush1.bf16.xpose.msra.mxu0 0
        %1258 = vmatprep.subr.bf16.mxu0 0
        %1259 = vmatpush1.bf16.xpose.msra.mxu0 0
        %1260 = vmatprep.subr.bf16.mxu0 0
        %1261 = vmatpush1.bf16.xpose.msra.mxu0 0
        %1262 = vmatprep.subr.bf16.mxu0 0
        %1263 = vmatpush1.bf16.xpose.msra.mxu0 0
        %1264 = vmatprep.mubr.bf16.mxu0 0
        %1265 = vmatmul.mubr.bf16.gmra.mrb[0].mxu0 %v1227
        %v1266 = vpop.f32.mrb[0].mxu0
        %v1267 = vadd.f32 %v1207, %v1266
        %v1268 = vpop.f32.mrb[0].mxu0
        %v1269 = vpop.f32.mrb[0].mxu0
        %v1270 = vpop.f32.mrb[0].mxu0
        %1271 = vdwg.mxu0
        %1272 = vrot.lane.b32.xlu0 %v1218, 96
        %v1273 = vpop.permute.xlu0 %1272
        %v1275 = vsel %vm1225, %v1218, 0
        %v1278 = vsel %vm1225, %v1273, 0
        %1280 = vmatprep.subr.bf16.mxu0 0
        %1281 = vmatpush1.bf16.xpose.msra.mxu0 %v1278
        %1282 = vmatprep.subr.bf16.mxu0 0
        %1283 = vmatpush1.bf16.xpose.msra.mxu0 0
        %1284 = vmatprep.subr.bf16.mxu0 0
        %1285 = vmatpush1.bf16.xpose.msra.mxu0 0
        %1286 = vmatprep.subr.bf16.mxu0 0
        %1287 = vmatpush1.bf16.xpose.msra.mxu0 0
        %1288 = vmatprep.subr.bf16.mxu0 0
        %1289 = vmatpush1.bf16.xpose.msra.mxu0 0
        %1290 = vmatprep.subr.bf16.mxu0 0
        %1291 = vmatpush1.bf16.xpose.msra.mxu0 0
        %1292 = vmatprep.subr.bf16.mxu0 0
        %1293 = vmatpush1.bf16.xpose.msra.mxu0 0
        %1294 = vmatprep.subr.bf16.mxu0 0
        %1295 = vmatpush1.bf16.xpose.msra.mxu0 0
        %1296 = vmatprep.subr.bf16.mxu0 0
        %1297 = vmatpush1.bf16.xpose.msra.mxu0 0
        %1298 = vmatprep.subr.bf16.mxu0 0
        %1299 = vmatpush1.bf16.xpose.msra.mxu0 0
        %1300 = vmatprep.subr.bf16.mxu0 0
        %1301 = vmatpush1.bf16.xpose.msra.mxu0 0
        %1302 = vmatprep.subr.bf16.mxu0 0
        %1303 = vmatpush1.bf16.xpose.msra.mxu0 0
        %1304 = vmatprep.subr.bf16.mxu0 0
        %1305 = vmatpush1.bf16.xpose.msra.mxu0 0
        %1306 = vmatprep.subr.bf16.mxu0 0
        %1307 = vmatpush1.bf16.xpose.msra.mxu0 0
        %1308 = vmatprep.subr.bf16.mxu0 0
        %1309 = vmatpush1.bf16.xpose.msra.mxu0 0
        %1310 = vmatprep.subr.bf16.mxu0 0
        %1311 = vmatpush1.bf16.xpose.msra.mxu0 0
        %1312 = vmatprep.mubr.bf16.mxu0 0
        %1313 = vmatmul.mubr.bf16.gmra.mrb[0].mxu0 %v1275
        %v1314 = vpop.f32.mrb[0].mxu0
        %v1315 = vadd.f32 %v1207, %v1314
        %v1316 = vpop.f32.mrb[0].mxu0
        %v1317 = vpop.f32.mrb[0].mxu0
        %v1318 = vpop.f32.mrb[0].mxu0
        %1319 = vdwg.mxu0
        %1320 = vrot.lane.b32.xlu0 %v1219, 96
        %v1321 = vpop.permute.xlu0 %1320
        %v1323 = vsel %vm1225, %v1219, 0
        %v1326 = vsel %vm1225, %v1321, 0
        %1328 = vmatprep.subr.bf16.mxu0 0
        %1329 = vmatpush1.bf16.xpose.msra.mxu0 %v1326
        %1330 = vmatprep.subr.bf16.mxu0 0
        %1331 = vmatpush1.bf16.xpose.msra.mxu0 0
        %1332 = vmatprep.subr.bf16.mxu0 0
        %1333 = vmatpush1.bf16.xpose.msra.mxu0 0
        %1334 = vmatprep.subr.bf16.mxu0 0
        %1335 = vmatpush1.bf16.xpose.msra.mxu0 0
        %1336 = vmatprep.subr.bf16.mxu0 0
        %1337 = vmatpush1.bf16.xpose.msra.mxu0 0
        %1338 = vmatprep.subr.bf16.mxu0 0
        %1339 = vmatpush1.bf16.xpose.msra.mxu0 0
        %1340 = vmatprep.subr.bf16.mxu0 0
        %1341 = vmatpush1.bf16.xpose.msra.mxu0 0
        %1342 = vmatprep.subr.bf16.mxu0 0
        %1343 = vmatpush1.bf16.xpose.msra.mxu0 0
        %1344 = vmatprep.subr.bf16.mxu0 0
        %1345 = vmatpush1.bf16.xpose.msra.mxu0 0
        %1346 = vmatprep.subr.bf16.mxu0 0
        %1347 = vmatpush1.bf16.xpose.msra.mxu0 0
        %1348 = vmatprep.subr.bf16.mxu0 0
        %1349 = vmatpush1.bf16.xpose.msra.mxu0 0
        %1350 = vmatprep.subr.bf16.mxu0 0
        %1351 = vmatpush1.bf16.xpose.msra.mxu0 0
        %1352 = vmatprep.subr.bf16.mxu0 0
        %1353 = vmatpush1.bf16.xpose.msra.mxu0 0
        %1354 = vmatprep.subr.bf16.mxu0 0
        %1355 = vmatpush1.bf16.xpose.msra.mxu0 0
        %1356 = vmatprep.subr.bf16.mxu0 0
        %1357 = vmatpush1.bf16.xpose.msra.mxu0 0
        %1358 = vmatprep.subr.bf16.mxu0 0
        %1359 = vmatpush1.bf16.xpose.msra.mxu0 0
        %1360 = vmatprep.mubr.bf16.mxu0 0
        %1361 = vmatmul.mubr.bf16.gmra.mrb[0].mxu0 %v1323
        %v1362 = vpop.f32.mrb[0].mxu0
        %v1363 = vadd.f32 %v1207, %v1362
        %v1364 = vpop.f32.mrb[0].mxu0
        %v1365 = vpop.f32.mrb[0].mxu0
        %v1366 = vpop.f32.mrb[0].mxu0
        %1367 = vdwg.mxu0
        %1368 = vrot.lane.b32.xlu0 %v1220, 96
        %v1369 = vpop.permute.xlu0 %1368
        %v1371 = vsel %vm1225, %v1220, 0
        %v1374 = vsel %vm1225, %v1369, 0
        %1376 = vmatprep.subr.bf16.mxu0 0
        %1377 = vmatpush1.bf16.xpose.msra.mxu0 %v1374
        %1378 = vmatprep.subr.bf16.mxu0 0
        %1379 = vmatpush1.bf16.xpose.msra.mxu0 0
        %1380 = vmatprep.subr.bf16.mxu0 0
        %1381 = vmatpush1.bf16.xpose.msra.mxu0 0
        %1382 = vmatprep.subr.bf16.mxu0 0
        %1383 = vmatpush1.bf16.xpose.msra.mxu0 0
        %1384 = vmatprep.subr.bf16.mxu0 0
        %1385 = vmatpush1.bf16.xpose.msra.mxu0 0
        %1386 = vmatprep.subr.bf16.mxu0 0
        %1387 = vmatpush1.bf16.xpose.msra.mxu0 0
        %1388 = vmatprep.subr.bf16.mxu0 0
        %1389 = vmatpush1.bf16.xpose.msra.mxu0 0
        %1390 = vmatprep.subr.bf16.mxu0 0
        %1391 = vmatpush1.bf16.xpose.msra.mxu0 0
        %1392 = vmatprep.subr.bf16.mxu0 0
        %1393 = vmatpush1.bf16.xpose.msra.mxu0 0
        %1394 = vmatprep.subr.bf16.mxu0 0
        %1395 = vmatpush1.bf16.xpose.msra.mxu0 0
        %1396 = vmatprep.subr.bf16.mxu0 0
        %1397 = vmatpush1.bf16.xpose.msra.mxu0 0
        %1398 = vmatprep.subr.bf16.mxu0 0
        %1399 = vmatpush1.bf16.xpose.msra.mxu0 0
        %1400 = vmatprep.subr.bf16.mxu0 0
        %1401 = vmatpush1.bf16.xpose.msra.mxu0 0
        %1402 = vmatprep.subr.bf16.mxu0 0
        %1403 = vmatpush1.bf16.xpose.msra.mxu0 0
        %1404 = vmatprep.subr.bf16.mxu0 0
        %1405 = vmatpush1.bf16.xpose.msra.mxu0 0
        %1406 = vmatprep.subr.bf16.mxu0 0
        %1407 = vmatpush1.bf16.xpose.msra.mxu0 0
        %1408 = vmatprep.mubr.bf16.mxu0 0
        %1409 = vmatmul.mubr.bf16.gmra.mrb[0].mxu0 %v1371
        %v1410 = vpop.f32.mrb[0].mxu0
        %v1411 = vadd.f32 %v1207, %v1410
        %v1412 = vpop.f32.mrb[0].mxu0
        %v1413 = vpop.f32.mrb[0].mxu0
        %v1414 = vpop.f32.mrb[0].mxu0
        %1415 = vdwg.mxu0
        %1416 = vrot.lane.b32.xlu0 %v1221, 96
        %v1417 = vpop.permute.xlu0 %1416
        %v1419 = vsel %vm1225, %v1221, 0
        %v1422 = vsel %vm1225, %v1417, 0
        %1424 = vmatprep.subr.bf16.mxu0 0
        %1425 = vmatpush1.bf16.xpose.msra.mxu0 %v1422
        %1426 = vmatprep.subr.bf16.mxu0 0
        %1427 = vmatpush1.bf16.xpose.msra.mxu0 0
        %1428 = vmatprep.subr.bf16.mxu0 0
        %1429 = vmatpush1.bf16.xpose.msra.mxu0 0
        %1430 = vmatprep.subr.bf16.mxu0 0
        %1431 = vmatpush1.bf16.xpose.msra.mxu0 0
        %1432 = vmatprep.subr.bf16.mxu0 0
        %1433 = vmatpush1.bf16.xpose.msra.mxu0 0
        %1434 = vmatprep.subr.bf16.mxu0 0
        %1435 = vmatpush1.bf16.xpose.msra.mxu0 0
        %1436 = vmatprep.subr.bf16.mxu0 0
        %1437 = vmatpush1.bf16.xpose.msra.mxu0 0
        %1438 = vmatprep.subr.bf16.mxu0 0
        %1439 = vmatpush1.bf16.xpose.msra.mxu0 0
        %1440 = vmatprep.subr.bf16.mxu0 0
        %1441 = vmatpush1.bf16.xpose.msra.mxu0 0
        %1442 = vmatprep.subr.bf16.mxu0 0
        %1443 = vmatpush1.bf16.xpose.msra.mxu0 0
        %1444 = vmatprep.subr.bf16.mxu0 0
        %1445 = vmatpush1.bf16.xpose.msra.mxu0 0
        %1446 = vmatprep.subr.bf16.mxu0 0
        %1447 = vmatpush1.bf16.xpose.msra.mxu0 0
        %1448 = vmatprep.subr.bf16.mxu0 0
        %1449 = vmatpush1.bf16.xpose.msra.mxu0 0
        %1450 = vmatprep.subr.bf16.mxu0 0
        %1451 = vmatpush1.bf16.xpose.msra.mxu0 0
        %1452 = vmatprep.subr.bf16.mxu0 0
        %1453 = vmatpush1.bf16.xpose.msra.mxu0 0
        %1454 = vmatprep.subr.bf16.mxu0 0
        %1455 = vmatpush1.bf16.xpose.msra.mxu0 0
        %1456 = vmatprep.mubr.bf16.mxu0 0
        %1457 = vmatmul.mubr.bf16.gmra.mrb[0].mxu0 %v1419
        %v1458 = vpop.f32.mrb[0].mxu0
        %v1459 = vadd.f32 %v1207, %v1458
        %v1460 = vpop.f32.mrb[0].mxu0
        %v1461 = vpop.f32.mrb[0].mxu0
        %v1462 = vpop.f32.mrb[0].mxu0
        %1463 = vdwg.mxu0
        %1464 = vrot.lane.b32.xlu0 %v1222, 96
        %v1465 = vpop.permute.xlu0 %1464
        %v1467 = vsel %vm1225, %v1222, 0
        %v1470 = vsel %vm1225, %v1465, 0
        %1472 = vmatprep.subr.bf16.mxu0 0
        %1473 = vmatpush1.bf16.xpose.msra.mxu0 %v1470
        %1474 = vmatprep.subr.bf16.mxu0 0
        %1475 = vmatpush1.bf16.xpose.msra.mxu0 0
        %1476 = vmatprep.subr.bf16.mxu0 0
        %1477 = vmatpush1.bf16.xpose.msra.mxu0 0
        %1478 = vmatprep.subr.bf16.mxu0 0
        %1479 = vmatpush1.bf16.xpose.msra.mxu0 0
        %1480 = vmatprep.subr.bf16.mxu0 0
        %1481 = vmatpush1.bf16.xpose.msra.mxu0 0
        %1482 = vmatprep.subr.bf16.mxu0 0
        %1483 = vmatpush1.bf16.xpose.msra.mxu0 0
        %1484 = vmatprep.subr.bf16.mxu0 0
        %1485 = vmatpush1.bf16.xpose.msra.mxu0 0
        %1486 = vmatprep.subr.bf16.mxu0 0
        %1487 = vmatpush1.bf16.xpose.msra.mxu0 0
        %1488 = vmatprep.subr.bf16.mxu0 0
        %1489 = vmatpush1.bf16.xpose.msra.mxu0 0
        %1490 = vmatprep.subr.bf16.mxu0 0
        %1491 = vmatpush1.bf16.xpose.msra.mxu0 0
        %1492 = vmatprep.subr.bf16.mxu0 0
        %1493 = vmatpush1.bf16.xpose.msra.mxu0 0
        %1494 = vmatprep.subr.bf16.mxu0 0
        %1495 = vmatpush1.bf16.xpose.msra.mxu0 0
        %1496 = vmatprep.subr.bf16.mxu0 0
        %1497 = vmatpush1.bf16.xpose.msra.mxu0 0
        %1498 = vmatprep.subr.bf16.mxu0 0
        %1499 = vmatpush1.bf16.xpose.msra.mxu0 0
        %1500 = vmatprep.subr.bf16.mxu0 0
        %1501 = vmatpush1.bf16.xpose.msra.mxu0 0
        %1502 = vmatprep.subr.bf16.mxu0 0
        %1503 = vmatpush1.bf16.xpose.msra.mxu0 0
        %1504 = vmatprep.mubr.bf16.mxu0 0
        %1505 = vmatmul.mubr.bf16.gmra.mrb[0].mxu0 %v1467
        %v1506 = vpop.f32.mrb[0].mxu0
        %v1507 = vadd.f32 %v1207, %v1506
        %v1508 = vpop.f32.mrb[0].mxu0
        %v1509 = vpop.f32.mrb[0].mxu0
        %v1510 = vpop.f32.mrb[0].mxu0
        %1511 = vdwg.mxu0
        %v1512 = vsel %vm1225, %v1267, -inf
        %1513 = vmax.xlane.f32.xlu0 %v1512
        %v1514 = vpop.xlane.xlu0 %1513
        %v1515 = vsel %vm1225, %v1315, -inf
        %1516 = vmax.xlane.f32.xlu0 %v1515
        %v1517 = vpop.xlane.xlu0 %1516
        %v1518 = vsel %vm1225, %v1363, -inf
        %1519 = vmax.xlane.f32.xlu0 %v1518
        %v1520 = vpop.xlane.xlu0 %1519
        %v1521 = vsel %vm1225, %v1411, -inf
        %1522 = vmax.xlane.f32.xlu0 %v1521
        %v1523 = vpop.xlane.xlu0 %1522
        %v1524 = vsel %vm1225, %v1459, -inf
        %1525 = vmax.xlane.f32.xlu0 %v1524
        %v1526 = vpop.xlane.xlu0 %1525
        %v1527 = vsel %vm1225, %v1507, -inf
        %1528 = vmax.xlane.f32.xlu0 %v1527
        %v1529 = vpop.xlane.xlu0 %1528
        %v1530 = vsub.f32 %v1267, %v1514
        %v1531 = vsub.f32 %v1315, %v1517
        %v1532 = vsub.f32 %v1363, %v1520
        %v1533 = vsub.f32 %v1411, %v1523
        %v1534 = vsub.f32 %v1459, %v1526
        %v1535 = vsub.f32 %v1507, %v1529
        %v1536 = vmul.f32 %v1530, 1.442695
        %v1537 = vpow.pop %v1536
        %v1538 = vmul.f32 %v1531, 1.442695
        %v1539 = vpow.pop %v1538
        %v1540 = vmul.f32 %v1532, 1.442695
        %v1541 = vpow.pop %v1540
        %v1542 = vmul.f32 %v1533, 1.442695
        %v1543 = vpow.pop %v1542
        %v1544 = vmul.f32 %v1534, 1.442695
        %v1545 = vpow.pop %v1544
        %v1546 = vmul.f32 %v1535, 1.442695
        %v1547 = vpow.pop %v1546
        %v1548 = vsel %vm1225, %v1537, 0.0
        %1549 = vadd.xlane.f32.xlu0 %v1548
        %v1550 = vpop.xlane.xlu0 %1549
        %v1551 = vsel %vm1225, %v1539, 0.0
        %1552 = vadd.xlane.f32.xlu0 %v1551
        %v1553 = vpop.xlane.xlu0 %1552
        %v1554 = vsel %vm1225, %v1541, 0.0
        %1555 = vadd.xlane.f32.xlu0 %v1554
        %v1556 = vpop.xlane.xlu0 %1555
        %v1557 = vsel %vm1225, %v1543, 0.0
        %1558 = vadd.xlane.f32.xlu0 %v1557
        %v1559 = vpop.xlane.xlu0 %1558
        %v1560 = vsel %vm1225, %v1545, 0.0
        %1561 = vadd.xlane.f32.xlu0 %v1560
        %v1562 = vpop.xlane.xlu0 %1561
        %v1563 = vsel %vm1225, %v1547, 0.0
        %1564 = vadd.xlane.f32.xlu0 %v1563
        %v1565 = vpop.xlane.xlu0 %1564
        %v1566 = vrcp.pop %v1550
        %v1567 = vmul.f32 %v1537, %v1566
        %v1568 = vrcp.pop %v1553
        %v1569 = vmul.f32 %v1539, %v1568
        %v1570 = vrcp.pop %v1556
        %v1571 = vmul.f32 %v1541, %v1570
        %v1572 = vrcp.pop %v1559
        %v1573 = vmul.f32 %v1543, %v1572
        %v1574 = vrcp.pop %v1562
        %v1575 = vmul.f32 %v1545, %v1574
        %v1576 = vrcp.pop %v1565
        %v1577 = vmul.f32 %v1547, %v1576
        %v1578 = vpack.c.bf16 %v1567, %v1567
        %v1579 = vpack.c.bf16 %v1569, %v1569
        %v1580 = vpack.c.bf16 %v1571, %v1571
        %v1581 = vpack.c.bf16 %v1573, %v1573
        %v1582 = vpack.c.bf16 %v1575, %v1575
        %v1583 = vpack.c.bf16 %v1577, %v1577
        %1584 = vrot.lane.b32.xlu0 %v1217, 64
        %v1585 = vpop.permute.xlu0 %1584
        %v1587 = vsel %vm1225, %v1578, 0
        %vm1589 = vcmask 1043456
        %v1591 = vsel %vm1589, %v1585, 0
        %1593 = vmatprep.subr.bf16.mxu0 0
        %1594 = vmatpush1.bf16.msra.mxu0 %v1591
        %1595 = vmatprep.subr.bf16.mxu0 0
        %1596 = vmatpush1.bf16.msra.mxu0 0
        %1597 = vmatprep.subr.bf16.mxu0 0
        %1598 = vmatpush1.bf16.msra.mxu0 0
        %1599 = vmatprep.subr.bf16.mxu0 0
        %1600 = vmatpush1.bf16.msra.mxu0 0
        %1601 = vmatprep.subr.bf16.mxu0 0
        %1602 = vmatpush1.bf16.msra.mxu0 0
        %1603 = vmatprep.subr.bf16.mxu0 0
        %1604 = vmatpush1.bf16.msra.mxu0 0
        %1605 = vmatprep.subr.bf16.mxu0 0
        %1606 = vmatpush1.bf16.msra.mxu0 0
        %1607 = vmatprep.subr.bf16.mxu0 0
        %1608 = vmatpush1.bf16.msra.mxu0 0
        %1609 = vmatprep.subr.bf16.mxu0 0
        %1610 = vmatpush1.bf16.msra.mxu0 0
        %1611 = vmatprep.subr.bf16.mxu0 0
        %1612 = vmatpush1.bf16.msra.mxu0 0
        %1613 = vmatprep.subr.bf16.mxu0 0
        %1614 = vmatpush1.bf16.msra.mxu0 0
        %1615 = vmatprep.subr.bf16.mxu0 0
        %1616 = vmatpush1.bf16.msra.mxu0 0
        %1617 = vmatprep.subr.bf16.mxu0 0
        %1618 = vmatpush1.bf16.msra.mxu0 0
        %1619 = vmatprep.subr.bf16.mxu0 0
        %1620 = vmatpush1.bf16.msra.mxu0 0
        %1621 = vmatprep.subr.bf16.mxu0 0
        %1622 = vmatpush1.bf16.msra.mxu0 0
        %1623 = vmatprep.subr.bf16.mxu0 0
        %1624 = vmatpush1.bf16.msra.mxu0 0
        %1625 = vmatprep.mubr.bf16.mxu0 0
        %1626 = vmatmul.mubr.bf16.gmra.mrb[0].mxu0 %v1587
        %v1627 = vpop.f32.mrb[0].mxu0
        %v1628 = vadd.f32 0.0, %v1627
        %v1629 = vpop.f32.mrb[0].mxu0
        %v1630 = vpop.f32.mrb[0].mxu0
        %v1631 = vpop.f32.mrb[0].mxu0
        %1632 = vdwg.mxu0
        %1633 = vrot.lane.b32.xlu0 %v1218, 64
        %v1634 = vpop.permute.xlu0 %1633
        %v1636 = vsel %vm1225, %v1579, 0
        %v1639 = vsel %vm1589, %v1634, 0
        %1641 = vmatprep.subr.bf16.mxu0 0
        %1642 = vmatpush1.bf16.msra.mxu0 %v1639
        %1643 = vmatprep.subr.bf16.mxu0 0
        %1644 = vmatpush1.bf16.msra.mxu0 0
        %1645 = vmatprep.subr.bf16.mxu0 0
        %1646 = vmatpush1.bf16.msra.mxu0 0
        %1647 = vmatprep.subr.bf16.mxu0 0
        %1648 = vmatpush1.bf16.msra.mxu0 0
        %1649 = vmatprep.subr.bf16.mxu0 0
        %1650 = vmatpush1.bf16.msra.mxu0 0
        %1651 = vmatprep.subr.bf16.mxu0 0
        %1652 = vmatpush1.bf16.msra.mxu0 0
        %1653 = vmatprep.subr.bf16.mxu0 0
        %1654 = vmatpush1.bf16.msra.mxu0 0
        %1655 = vmatprep.subr.bf16.mxu0 0
        %1656 = vmatpush1.bf16.msra.mxu0 0
        %1657 = vmatprep.subr.bf16.mxu0 0
        %1658 = vmatpush1.bf16.msra.mxu0 0
        %1659 = vmatprep.subr.bf16.mxu0 0
        %1660 = vmatpush1.bf16.msra.mxu0 0
        %1661 = vmatprep.subr.bf16.mxu0 0
        %1662 = vmatpush1.bf16.msra.mxu0 0
        %1663 = vmatprep.subr.bf16.mxu0 0
        %1664 = vmatpush1.bf16.msra.mxu0 0
        %1665 = vmatprep.subr.bf16.mxu0 0
        %1666 = vmatpush1.bf16.msra.mxu0 0
        %1667 = vmatprep.subr.bf16.mxu0 0
        %1668 = vmatpush1.bf16.msra.mxu0 0
        %1669 = vmatprep.subr.bf16.mxu0 0
        %1670 = vmatpush1.bf16.msra.mxu0 0
        %1671 = vmatprep.subr.bf16.mxu0 0
        %1672 = vmatpush1.bf16.msra.mxu0 0
        %1673 = vmatprep.mubr.bf16.mxu0 0
        %1674 = vmatmul.mubr.bf16.gmra.mrb[0].mxu0 %v1636
        %v1675 = vpop.f32.mrb[0].mxu0
        %v1676 = vadd.f32 0.0, %v1675
        %v1677 = vpop.f32.mrb[0].mxu0
        %v1678 = vpop.f32.mrb[0].mxu0
        %v1679 = vpop.f32.mrb[0].mxu0
        %1680 = vdwg.mxu0
        %1681 = vrot.lane.b32.xlu0 %v1219, 64
        %v1682 = vpop.permute.xlu0 %1681
        %v1684 = vsel %vm1225, %v1580, 0
        %v1687 = vsel %vm1589, %v1682, 0
        %1689 = vmatprep.subr.bf16.mxu0 0
        %1690 = vmatpush1.bf16.msra.mxu0 %v1687
        %1691 = vmatprep.subr.bf16.mxu0 0
        %1692 = vmatpush1.bf16.msra.mxu0 0
        %1693 = vmatprep.subr.bf16.mxu0 0
        %1694 = vmatpush1.bf16.msra.mxu0 0
        %1695 = vmatprep.subr.bf16.mxu0 0
        %1696 = vmatpush1.bf16.msra.mxu0 0
        %1697 = vmatprep.subr.bf16.mxu0 0
        %1698 = vmatpush1.bf16.msra.mxu0 0
        %1699 = vmatprep.subr.bf16.mxu0 0
        %1700 = vmatpush1.bf16.msra.mxu0 0
        %1701 = vmatprep.subr.bf16.mxu0 0
        %1702 = vmatpush1.bf16.msra.mxu0 0
        %1703 = vmatprep.subr.bf16.mxu0 0
        %1704 = vmatpush1.bf16.msra.mxu0 0
        %1705 = vmatprep.subr.bf16.mxu0 0
        %1706 = vmatpush1.bf16.msra.mxu0 0
        %1707 = vmatprep.subr.bf16.mxu0 0
        %1708 = vmatpush1.bf16.msra.mxu0 0
        %1709 = vmatprep.subr.bf16.mxu0 0
        %1710 = vmatpush1.bf16.msra.mxu0 0
        %1711 = vmatprep.subr.bf16.mxu0 0
        %1712 = vmatpush1.bf16.msra.mxu0 0
        %1713 = vmatprep.subr.bf16.mxu0 0
        %1714 = vmatpush1.bf16.msra.mxu0 0
        %1715 = vmatprep.subr.bf16.mxu0 0
        %1716 = vmatpush1.bf16.msra.mxu0 0
        %1717 = vmatprep.subr.bf16.mxu0 0
        %1718 = vmatpush1.bf16.msra.mxu0 0
        %1719 = vmatprep.subr.bf16.mxu0 0
        %1720 = vmatpush1.bf16.msra.mxu0 0
        %1721 = vmatprep.mubr.bf16.mxu0 0
        %1722 = vmatmul.mubr.bf16.gmra.mrb[0].mxu0 %v1684
        %v1723 = vpop.f32.mrb[0].mxu0
        %v1724 = vadd.f32 0.0, %v1723
        %v1725 = vpop.f32.mrb[0].mxu0
        %v1726 = vpop.f32.mrb[0].mxu0
        %v1727 = vpop.f32.mrb[0].mxu0
        %1728 = vdwg.mxu0
        %1729 = vrot.lane.b32.xlu0 %v1220, 64
        %v1730 = vpop.permute.xlu0 %1729
        %v1732 = vsel %vm1225, %v1581, 0
        %v1735 = vsel %vm1589, %v1730, 0
        %1737 = vmatprep.subr.bf16.mxu0 0
        %1738 = vmatpush1.bf16.msra.mxu0 %v1735
        %1739 = vmatprep.subr.bf16.mxu0 0
        %1740 = vmatpush1.bf16.msra.mxu0 0
        %1741 = vmatprep.subr.bf16.mxu0 0
        %1742 = vmatpush1.bf16.msra.mxu0 0
        %1743 = vmatprep.subr.bf16.mxu0 0
        %1744 = vmatpush1.bf16.msra.mxu0 0
        %1745 = vmatprep.subr.bf16.mxu0 0
        %1746 = vmatpush1.bf16.msra.mxu0 0
        %1747 = vmatprep.subr.bf16.mxu0 0
        %1748 = vmatpush1.bf16.msra.mxu0 0
        %1749 = vmatprep.subr.bf16.mxu0 0
        %1750 = vmatpush1.bf16.msra.mxu0 0
        %1751 = vmatprep.subr.bf16.mxu0 0
        %1752 = vmatpush1.bf16.msra.mxu0 0
        %1753 = vmatprep.subr.bf16.mxu0 0
        %1754 = vmatpush1.bf16.msra.mxu0 0
        %1755 = vmatprep.subr.bf16.mxu0 0
        %1756 = vmatpush1.bf16.msra.mxu0 0
        %1757 = vmatprep.subr.bf16.mxu0 0
        %1758 = vmatpush1.bf16.msra.mxu0 0
        %1759 = vmatprep.subr.bf16.mxu0 0
        %1760 = vmatpush1.bf16.msra.mxu0 0
        %1761 = vmatprep.subr.bf16.mxu0 0
        %1762 = vmatpush1.bf16.msra.mxu0 0
        %1763 = vmatprep.subr.bf16.mxu0 0
        %1764 = vmatpush1.bf16.msra.mxu0 0
        %1765 = vmatprep.subr.bf16.mxu0 0
        %1766 = vmatpush1.bf16.msra.mxu0 0
        %1767 = vmatprep.subr.bf16.mxu0 0
        %1768 = vmatpush1.bf16.msra.mxu0 0
        %1769 = vmatprep.mubr.bf16.mxu0 0
        %1770 = vmatmul.mubr.bf16.gmra.mrb[0].mxu0 %v1732
        %v1771 = vpop.f32.mrb[0].mxu0
        %v1772 = vadd.f32 0.0, %v1771
        %v1773 = vpop.f32.mrb[0].mxu0
        %v1774 = vpop.f32.mrb[0].mxu0
        %v1775 = vpop.f32.mrb[0].mxu0
        %1776 = vdwg.mxu0
        %1777 = vrot.lane.b32.xlu0 %v1221, 64
        %v1778 = vpop.permute.xlu0 %1777
        %v1780 = vsel %vm1225, %v1582, 0
        %v1783 = vsel %vm1589, %v1778, 0
        %1785 = vmatprep.subr.bf16.mxu0 0
        %1786 = vmatpush1.bf16.msra.mxu0 %v1783
        %1787 = vmatprep.subr.bf16.mxu0 0
        %1788 = vmatpush1.bf16.msra.mxu0 0
        %1789 = vmatprep.subr.bf16.mxu0 0
        %1790 = vmatpush1.bf16.msra.mxu0 0
        %1791 = vmatprep.subr.bf16.mxu0 0
        %1792 = vmatpush1.bf16.msra.mxu0 0
        %1793 = vmatprep.subr.bf16.mxu0 0
        %1794 = vmatpush1.bf16.msra.mxu0 0
        %1795 = vmatprep.subr.bf16.mxu0 0
        %1796 = vmatpush1.bf16.msra.mxu0 0
        %1797 = vmatprep.subr.bf16.mxu0 0
        %1798 = vmatpush1.bf16.msra.mxu0 0
        %1799 = vmatprep.subr.bf16.mxu0 0
        %1800 = vmatpush1.bf16.msra.mxu0 0
        %1801 = vmatprep.subr.bf16.mxu0 0
        %1802 = vmatpush1.bf16.msra.mxu0 0
        %1803 = vmatprep.subr.bf16.mxu0 0
        %1804 = vmatpush1.bf16.msra.mxu0 0
        %1805 = vmatprep.subr.bf16.mxu0 0
        %1806 = vmatpush1.bf16.msra.mxu0 0
        %1807 = vmatprep.subr.bf16.mxu0 0
        %1808 = vmatpush1.bf16.msra.mxu0 0
        %1809 = vmatprep.subr.bf16.mxu0 0
        %1810 = vmatpush1.bf16.msra.mxu0 0
        %1811 = vmatprep.subr.bf16.mxu0 0
        %1812 = vmatpush1.bf16.msra.mxu0 0
        %1813 = vmatprep.subr.bf16.mxu0 0
        %1814 = vmatpush1.bf16.msra.mxu0 0
        %1815 = vmatprep.subr.bf16.mxu0 0
        %1816 = vmatpush1.bf16.msra.mxu0 0
        %1817 = vmatprep.mubr.bf16.mxu0 0
        %1818 = vmatmul.mubr.bf16.gmra.mrb[0].mxu0 %v1780
        %v1819 = vpop.f32.mrb[0].mxu0
        %v1820 = vadd.f32 0.0, %v1819
        %v1821 = vpop.f32.mrb[0].mxu0
        %v1822 = vpop.f32.mrb[0].mxu0
        %v1823 = vpop.f32.mrb[0].mxu0
        %1824 = vdwg.mxu0
        %1825 = vrot.lane.b32.xlu0 %v1222, 64
        %v1826 = vpop.permute.xlu0 %1825
        %v1828 = vsel %vm1225, %v1583, 0
        %v1831 = vsel %vm1589, %v1826, 0
        %1833 = vmatprep.subr.bf16.mxu0 0
        %1834 = vmatpush1.bf16.msra.mxu0 %v1831
        %1835 = vmatprep.subr.bf16.mxu0 0
        %1836 = vmatpush1.bf16.msra.mxu0 0
        %1837 = vmatprep.subr.bf16.mxu0 0
        %1838 = vmatpush1.bf16.msra.mxu0 0
        %1839 = vmatprep.subr.bf16.mxu0 0
        %1840 = vmatpush1.bf16.msra.mxu0 0
        %1841 = vmatprep.subr.bf16.mxu0 0
        %1842 = vmatpush1.bf16.msra.mxu0 0
        %1843 = vmatprep.subr.bf16.mxu0 0
        %1844 = vmatpush1.bf16.msra.mxu0 0
        %1845 = vmatprep.subr.bf16.mxu0 0
        %1846 = vmatpush1.bf16.msra.mxu0 0
        %1847 = vmatprep.subr.bf16.mxu0 0
        %1848 = vmatpush1.bf16.msra.mxu0 0
        %1849 = vmatprep.subr.bf16.mxu0 0
        %1850 = vmatpush1.bf16.msra.mxu0 0
        %1851 = vmatprep.subr.bf16.mxu0 0
        %1852 = vmatpush1.bf16.msra.mxu0 0
        %1853 = vmatprep.subr.bf16.mxu0 0
        %1854 = vmatpush1.bf16.msra.mxu0 0
        %1855 = vmatprep.subr.bf16.mxu0 0
        %1856 = vmatpush1.bf16.msra.mxu0 0
        %1857 = vmatprep.subr.bf16.mxu0 0
        %1858 = vmatpush1.bf16.msra.mxu0 0
        %1859 = vmatprep.subr.bf16.mxu0 0
        %1860 = vmatpush1.bf16.msra.mxu0 0
        %1861 = vmatprep.subr.bf16.mxu0 0
        %1862 = vmatpush1.bf16.msra.mxu0 0
        %1863 = vmatprep.subr.bf16.mxu0 0
        %1864 = vmatpush1.bf16.msra.mxu0 0
        %1865 = vmatprep.mubr.bf16.mxu0 0
        %1866 = vmatmul.mubr.bf16.gmra.mrb[0].mxu0 %v1828
        %v1867 = vpop.f32.mrb[0].mxu0
        %v1868 = vadd.f32 0.0, %v1867
        %v1869 = vpop.f32.mrb[0].mxu0
        %v1870 = vpop.f32.mrb[0].mxu0
        %v1871 = vpop.f32.mrb[0].mxu0
        %1872 = vdwg.mxu0
        %1873 = vrot.lane.b32.xlu0 %v1217, 120
        %v1874 = vpop.permute.xlu0 %1873
        %1875 = vrot.lane.b32.xlu0 %v1217, 88
        %v1876 = vpop.permute.xlu0 %1875
        %v1878 = vsel %vm1225, %v1874, 0
        %v1881 = vsel %vm1225, %v1876, 0
        %1883 = vmatprep.subr.bf16.mxu0 0
        %1884 = vmatpush1.bf16.xpose.msra.mxu0 %v1881
        %1885 = vmatprep.subr.bf16.mxu0 0
        %1886 = vmatpush1.bf16.xpose.msra.mxu0 0
        %1887 = vmatprep.subr.bf16.mxu0 0
        %1888 = vmatpush1.bf16.xpose.msra.mxu0 0
        %1889 = vmatprep.subr.bf16.mxu0 0
        %1890 = vmatpush1.bf16.xpose.msra.mxu0 0
        %1891 = vmatprep.subr.bf16.mxu0 0
        %1892 = vmatpush1.bf16.xpose.msra.mxu0 0
        %1893 = vmatprep.subr.bf16.mxu0 0
        %1894 = vmatpush1.bf16.xpose.msra.mxu0 0
        %1895 = vmatprep.subr.bf16.mxu0 0
        %1896 = vmatpush1.bf16.xpose.msra.mxu0 0
        %1897 = vmatprep.subr.bf16.mxu0 0
        %1898 = vmatpush1.bf16.xpose.msra.mxu0 0
        %1899 = vmatprep.subr.bf16.mxu0 0
        %1900 = vmatpush1.bf16.xpose.msra.mxu0 0
        %1901 = vmatprep.subr.bf16.mxu0 0
        %1902 = vmatpush1.bf16.xpose.msra.mxu0 0
        %1903 = vmatprep.subr.bf16.mxu0 0
        %1904 = vmatpush1.bf16.xpose.msra.mxu0 0
        %1905 = vmatprep.subr.bf16.mxu0 0
        %1906 = vmatpush1.bf16.xpose.msra.mxu0 0
        %1907 = vmatprep.subr.bf16.mxu0 0
        %1908 = vmatpush1.bf16.xpose.msra.mxu0 0
        %1909 = vmatprep.subr.bf16.mxu0 0
        %1910 = vmatpush1.bf16.xpose.msra.mxu0 0
        %1911 = vmatprep.subr.bf16.mxu0 0
        %1912 = vmatpush1.bf16.xpose.msra.mxu0 0
        %1913 = vmatprep.subr.bf16.mxu0 0
        %1914 = vmatpush1.bf16.xpose.msra.mxu0 0
        %1915 = vmatprep.mubr.bf16.mxu0 0
        %1916 = vmatmul.mubr.bf16.gmra.mrb[0].mxu0 %v1878
        %v1917 = vpop.f32.mrb[0].mxu0
        %v1918 = vadd.f32 %v1207, %v1917
        %v1919 = vpop.f32.mrb[0].mxu0
        %v1920 = vpop.f32.mrb[0].mxu0
        %v1921 = vpop.f32.mrb[0].mxu0
        %1922 = vdwg.mxu0
        %1923 = vrot.lane.b32.xlu0 %v1218, 120
        %v1924 = vpop.permute.xlu0 %1923
        %1925 = vrot.lane.b32.xlu0 %v1218, 88
        %v1926 = vpop.permute.xlu0 %1925
        %v1928 = vsel %vm1225, %v1924, 0
        %v1931 = vsel %vm1225, %v1926, 0
        %1933 = vmatprep.subr.bf16.mxu0 0
        %1934 = vmatpush1.bf16.xpose.msra.mxu0 %v1931
        %1935 = vmatprep.subr.bf16.mxu0 0
        %1936 = vmatpush1.bf16.xpose.msra.mxu0 0
        %1937 = vmatprep.subr.bf16.mxu0 0
        %1938 = vmatpush1.bf16.xpose.msra.mxu0 0
        %1939 = vmatprep.subr.bf16.mxu0 0
        %1940 = vmatpush1.bf16.xpose.msra.mxu0 0
        %1941 = vmatprep.subr.bf16.mxu0 0
        %1942 = vmatpush1.bf16.xpose.msra.mxu0 0
        %1943 = vmatprep.subr.bf16.mxu0 0
        %1944 = vmatpush1.bf16.xpose.msra.mxu0 0
        %1945 = vmatprep.subr.bf16.mxu0 0
        %1946 = vmatpush1.bf16.xpose.msra.mxu0 0
        %1947 = vmatprep.subr.bf16.mxu0 0
        %1948 = vmatpush1.bf16.xpose.msra.mxu0 0
        %1949 = vmatprep.subr.bf16.mxu0 0
        %1950 = vmatpush1.bf16.xpose.msra.mxu0 0
        %1951 = vmatprep.subr.bf16.mxu0 0
        %1952 = vmatpush1.bf16.xpose.msra.mxu0 0
        %1953 = vmatprep.subr.bf16.mxu0 0
        %1954 = vmatpush1.bf16.xpose.msra.mxu0 0
        %1955 = vmatprep.subr.bf16.mxu0 0
        %1956 = vmatpush1.bf16.xpose.msra.mxu0 0
        %1957 = vmatprep.subr.bf16.mxu0 0
        %1958 = vmatpush1.bf16.xpose.msra.mxu0 0
        %1959 = vmatprep.subr.bf16.mxu0 0
        %1960 = vmatpush1.bf16.xpose.msra.mxu0 0
        %1961 = vmatprep.subr.bf16.mxu0 0
        %1962 = vmatpush1.bf16.xpose.msra.mxu0 0
        %1963 = vmatprep.subr.bf16.mxu0 0
        %1964 = vmatpush1.bf16.xpose.msra.mxu0 0
        %1965 = vmatprep.mubr.bf16.mxu0 0
        %1966 = vmatmul.mubr.bf16.gmra.mrb[0].mxu0 %v1928
        %v1967 = vpop.f32.mrb[0].mxu0
        %v1968 = vadd.f32 %v1207, %v1967
        %v1969 = vpop.f32.mrb[0].mxu0
        %v1970 = vpop.f32.mrb[0].mxu0
        %v1971 = vpop.f32.mrb[0].mxu0
        %1972 = vdwg.mxu0
        %1973 = vrot.lane.b32.xlu0 %v1219, 120
        %v1974 = vpop.permute.xlu0 %1973
        %1975 = vrot.lane.b32.xlu0 %v1219, 88
        %v1976 = vpop.permute.xlu0 %1975
        %v1978 = vsel %vm1225, %v1974, 0
        %v1981 = vsel %vm1225, %v1976, 0
        %1983 = vmatprep.subr.bf16.mxu0 0
        %1984 = vmatpush1.bf16.xpose.msra.mxu0 %v1981
        %1985 = vmatprep.subr.bf16.mxu0 0
        %1986 = vmatpush1.bf16.xpose.msra.mxu0 0
        %1987 = vmatprep.subr.bf16.mxu0 0
        %1988 = vmatpush1.bf16.xpose.msra.mxu0 0
        %1989 = vmatprep.subr.bf16.mxu0 0
        %1990 = vmatpush1.bf16.xpose.msra.mxu0 0
        %1991 = vmatprep.subr.bf16.mxu0 0
        %1992 = vmatpush1.bf16.xpose.msra.mxu0 0
        %1993 = vmatprep.subr.bf16.mxu0 0
        %1994 = vmatpush1.bf16.xpose.msra.mxu0 0
        %1995 = vmatprep.subr.bf16.mxu0 0
        %1996 = vmatpush1.bf16.xpose.msra.mxu0 0
        %1997 = vmatprep.subr.bf16.mxu0 0
        %1998 = vmatpush1.bf16.xpose.msra.mxu0 0
        %1999 = vmatprep.subr.bf16.mxu0 0
        %2000 = vmatpush1.bf16.xpose.msra.mxu0 0
        %2001 = vmatprep.subr.bf16.mxu0 0
        %2002 = vmatpush1.bf16.xpose.msra.mxu0 0
        %2003 = vmatprep.subr.bf16.mxu0 0
        %2004 = vmatpush1.bf16.xpose.msra.mxu0 0
        %2005 = vmatprep.subr.bf16.mxu0 0
        %2006 = vmatpush1.bf16.xpose.msra.mxu0 0
        %2007 = vmatprep.subr.bf16.mxu0 0
        %2008 = vmatpush1.bf16.xpose.msra.mxu0 0
        %2009 = vmatprep.subr.bf16.mxu0 0
        %2010 = vmatpush1.bf16.xpose.msra.mxu0 0
        %2011 = vmatprep.subr.bf16.mxu0 0
        %2012 = vmatpush1.bf16.xpose.msra.mxu0 0
        %2013 = vmatprep.subr.bf16.mxu0 0
        %2014 = vmatpush1.bf16.xpose.msra.mxu0 0
        %2015 = vmatprep.mubr.bf16.mxu0 0
        %2016 = vmatmul.mubr.bf16.gmra.mrb[0].mxu0 %v1978
        %v2017 = vpop.f32.mrb[0].mxu0
        %v2018 = vadd.f32 %v1207, %v2017
        %v2019 = vpop.f32.mrb[0].mxu0
        %v2020 = vpop.f32.mrb[0].mxu0
        %v2021 = vpop.f32.mrb[0].mxu0
        %2022 = vdwg.mxu0
        %2023 = vrot.lane.b32.xlu0 %v1220, 120
        %v2024 = vpop.permute.xlu0 %2023
        %2025 = vrot.lane.b32.xlu0 %v1220, 88
        %v2026 = vpop.permute.xlu0 %2025
        %v2028 = vsel %vm1225, %v2024, 0
        %v2031 = vsel %vm1225, %v2026, 0
        %2033 = vmatprep.subr.bf16.mxu0 0
        %2034 = vmatpush1.bf16.xpose.msra.mxu0 %v2031
        %2035 = vmatprep.subr.bf16.mxu0 0
        %2036 = vmatpush1.bf16.xpose.msra.mxu0 0
        %2037 = vmatprep.subr.bf16.mxu0 0
        %2038 = vmatpush1.bf16.xpose.msra.mxu0 0
        %2039 = vmatprep.subr.bf16.mxu0 0
        %2040 = vmatpush1.bf16.xpose.msra.mxu0 0
        %2041 = vmatprep.subr.bf16.mxu0 0
        %2042 = vmatpush1.bf16.xpose.msra.mxu0 0
        %2043 = vmatprep.subr.bf16.mxu0 0
        %2044 = vmatpush1.bf16.xpose.msra.mxu0 0
        %2045 = vmatprep.subr.bf16.mxu0 0
        %2046 = vmatpush1.bf16.xpose.msra.mxu0 0
        %2047 = vmatprep.subr.bf16.mxu0 0
        %2048 = vmatpush1.bf16.xpose.msra.mxu0 0
        %2049 = vmatprep.subr.bf16.mxu0 0
        %2050 = vmatpush1.bf16.xpose.msra.mxu0 0
        %2051 = vmatprep.subr.bf16.mxu0 0
        %2052 = vmatpush1.bf16.xpose.msra.mxu0 0
        %2053 = vmatprep.subr.bf16.mxu0 0
        %2054 = vmatpush1.bf16.xpose.msra.mxu0 0
        %2055 = vmatprep.subr.bf16.mxu0 0
        %2056 = vmatpush1.bf16.xpose.msra.mxu0 0
        %2057 = vmatprep.subr.bf16.mxu0 0
        %2058 = vmatpush1.bf16.xpose.msra.mxu0 0
        %2059 = vmatprep.subr.bf16.mxu0 0
        %2060 = vmatpush1.bf16.xpose.msra.mxu0 0
        %2061 = vmatprep.subr.bf16.mxu0 0
        %2062 = vmatpush1.bf16.xpose.msra.mxu0 0
        %2063 = vmatprep.subr.bf16.mxu0 0
        %2064 = vmatpush1.bf16.xpose.msra.mxu0 0
        %2065 = vmatprep.mubr.bf16.mxu0 0
        %2066 = vmatmul.mubr.bf16.gmra.mrb[0].mxu0 %v2028
        %v2067 = vpop.f32.mrb[0].mxu0
        %v2068 = vadd.f32 %v1207, %v2067
        %v2069 = vpop.f32.mrb[0].mxu0
        %v2070 = vpop.f32.mrb[0].mxu0
        %v2071 = vpop.f32.mrb[0].mxu0
        %2072 = vdwg.mxu0
        %2073 = vrot.lane.b32.xlu0 %v1221, 120
        %v2074 = vpop.permute.xlu0 %2073
        %2075 = vrot.lane.b32.xlu0 %v1221, 88
        %v2076 = vpop.permute.xlu0 %2075
        %v2078 = vsel %vm1225, %v2074, 0
        %v2081 = vsel %vm1225, %v2076, 0
        %2083 = vmatprep.subr.bf16.mxu0 0
        %2084 = vmatpush1.bf16.xpose.msra.mxu0 %v2081
        %2085 = vmatprep.subr.bf16.mxu0 0
        %2086 = vmatpush1.bf16.xpose.msra.mxu0 0
        %2087 = vmatprep.subr.bf16.mxu0 0
        %2088 = vmatpush1.bf16.xpose.msra.mxu0 0
        %2089 = vmatprep.subr.bf16.mxu0 0
        %2090 = vmatpush1.bf16.xpose.msra.mxu0 0
        %2091 = vmatprep.subr.bf16.mxu0 0
        %2092 = vmatpush1.bf16.xpose.msra.mxu0 0
        %2093 = vmatprep.subr.bf16.mxu0 0
        %2094 = vmatpush1.bf16.xpose.msra.mxu0 0
        %2095 = vmatprep.subr.bf16.mxu0 0
        %2096 = vmatpush1.bf16.xpose.msra.mxu0 0
        %2097 = vmatprep.subr.bf16.mxu0 0
        %2098 = vmatpush1.bf16.xpose.msra.mxu0 0
        %2099 = vmatprep.subr.bf16.mxu0 0
        %2100 = vmatpush1.bf16.xpose.msra.mxu0 0
        %2101 = vmatprep.subr.bf16.mxu0 0
        %2102 = vmatpush1.bf16.xpose.msra.mxu0 0
        %2103 = vmatprep.subr.bf16.mxu0 0
        %2104 = vmatpush1.bf16.xpose.msra.mxu0 0
        %2105 = vmatprep.subr.bf16.mxu0 0
        %2106 = vmatpush1.bf16.xpose.msra.mxu0 0
        %2107 = vmatprep.subr.bf16.mxu0 0
        %2108 = vmatpush1.bf16.xpose.msra.mxu0 0
        %2109 = vmatprep.subr.bf16.mxu0 0
        %2110 = vmatpush1.bf16.xpose.msra.mxu0 0
        %2111 = vmatprep.subr.bf16.mxu0 0
        %2112 = vmatpush1.bf16.xpose.msra.mxu0 0
        %2113 = vmatprep.subr.bf16.mxu0 0
        %2114 = vmatpush1.bf16.xpose.msra.mxu0 0
        %2115 = vmatprep.mubr.bf16.mxu0 0
        %2116 = vmatmul.mubr.bf16.gmra.mrb[0].mxu0 %v2078
        %v2117 = vpop.f32.mrb[0].mxu0
        %v2118 = vadd.f32 %v1207, %v2117
        %v2119 = vpop.f32.mrb[0].mxu0
        %v2120 = vpop.f32.mrb[0].mxu0
        %v2121 = vpop.f32.mrb[0].mxu0
        %2122 = vdwg.mxu0
        %2123 = vrot.lane.b32.xlu0 %v1222, 120
        %v2124 = vpop.permute.xlu0 %2123
        %2125 = vrot.lane.b32.xlu0 %v1222, 88
        %v2126 = vpop.permute.xlu0 %2125
        %v2128 = vsel %vm1225, %v2124, 0
        %v2131 = vsel %vm1225, %v2126, 0
        %2133 = vmatprep.subr.bf16.mxu0 0
        %2134 = vmatpush1.bf16.xpose.msra.mxu0 %v2131
        %2135 = vmatprep.subr.bf16.mxu0 0
        %2136 = vmatpush1.bf16.xpose.msra.mxu0 0
        %2137 = vmatprep.subr.bf16.mxu0 0
        %2138 = vmatpush1.bf16.xpose.msra.mxu0 0
        %2139 = vmatprep.subr.bf16.mxu0 0
        %2140 = vmatpush1.bf16.xpose.msra.mxu0 0
        %2141 = vmatprep.subr.bf16.mxu0 0
        %2142 = vmatpush1.bf16.xpose.msra.mxu0 0
        %2143 = vmatprep.subr.bf16.mxu0 0
        %2144 = vmatpush1.bf16.xpose.msra.mxu0 0
        %2145 = vmatprep.subr.bf16.mxu0 0
        %2146 = vmatpush1.bf16.xpose.msra.mxu0 0
        %2147 = vmatprep.subr.bf16.mxu0 0
        %2148 = vmatpush1.bf16.xpose.msra.mxu0 0
        %2149 = vmatprep.subr.bf16.mxu0 0
        %2150 = vmatpush1.bf16.xpose.msra.mxu0 0
        %2151 = vmatprep.subr.bf16.mxu0 0
        %2152 = vmatpush1.bf16.xpose.msra.mxu0 0
        %2153 = vmatprep.subr.bf16.mxu0 0
        %2154 = vmatpush1.bf16.xpose.msra.mxu0 0
        %2155 = vmatprep.subr.bf16.mxu0 0
        %2156 = vmatpush1.bf16.xpose.msra.mxu0 0
        %2157 = vmatprep.subr.bf16.mxu0 0
        %2158 = vmatpush1.bf16.xpose.msra.mxu0 0
        %2159 = vmatprep.subr.bf16.mxu0 0
        %2160 = vmatpush1.bf16.xpose.msra.mxu0 0
        %2161 = vmatprep.subr.bf16.mxu0 0
        %2162 = vmatpush1.bf16.xpose.msra.mxu0 0
        %2163 = vmatprep.subr.bf16.mxu0 0
        %2164 = vmatpush1.bf16.xpose.msra.mxu0 0
        %2165 = vmatprep.mubr.bf16.mxu0 0
        %2166 = vmatmul.mubr.bf16.gmra.mrb[0].mxu0 %v2128
        %v2167 = vpop.f32.mrb[0].mxu0
        %v2168 = vadd.f32 %v1207, %v2167
        %v2169 = vpop.f32.mrb[0].mxu0
        %v2170 = vpop.f32.mrb[0].mxu0
        %v2171 = vpop.f32.mrb[0].mxu0
        %2172 = vdwg.mxu0
        %v2173 = vsel %vm1225, %v1918, -inf
        %2174 = vmax.xlane.f32.xlu0 %v2173
        %v2175 = vpop.xlane.xlu0 %2174
        %v2176 = vsel %vm1225, %v1968, -inf
        %2177 = vmax.xlane.f32.xlu0 %v2176
        %v2178 = vpop.xlane.xlu0 %2177
        %v2179 = vsel %vm1225, %v2018, -inf
        %2180 = vmax.xlane.f32.xlu0 %v2179
        %v2181 = vpop.xlane.xlu0 %2180
        %v2182 = vsel %vm1225, %v2068, -inf
        %2183 = vmax.xlane.f32.xlu0 %v2182
        %v2184 = vpop.xlane.xlu0 %2183
        %v2185 = vsel %vm1225, %v2118, -inf
        %2186 = vmax.xlane.f32.xlu0 %v2185
        %v2187 = vpop.xlane.xlu0 %2186
        %v2188 = vsel %vm1225, %v2168, -inf
        %2189 = vmax.xlane.f32.xlu0 %v2188
        %v2190 = vpop.xlane.xlu0 %2189
        %v2191 = vsub.f32 %v1918, %v2175
        %v2192 = vsub.f32 %v1968, %v2178
        %v2193 = vsub.f32 %v2018, %v2181
        %v2194 = vsub.f32 %v2068, %v2184
        %v2195 = vsub.f32 %v2118, %v2187
        %v2196 = vsub.f32 %v2168, %v2190
        %v2197 = vmul.f32 %v2191, 1.442695
        %v2198 = vpow.pop %v2197
        %v2199 = vmul.f32 %v2192, 1.442695
        %v2200 = vpow.pop %v2199
        %v2201 = vmul.f32 %v2193, 1.442695
        %v2202 = vpow.pop %v2201
        %v2203 = vmul.f32 %v2194, 1.442695
        %v2204 = vpow.pop %v2203
        %v2205 = vmul.f32 %v2195, 1.442695
        %v2206 = vpow.pop %v2205
        %v2207 = vmul.f32 %v2196, 1.442695
        %v2208 = vpow.pop %v2207
        %v2209 = vsel %vm1225, %v2198, 0.0
        %2210 = vadd.xlane.f32.xlu0 %v2209
        %v2211 = vpop.xlane.xlu0 %2210
        %v2212 = vsel %vm1225, %v2200, 0.0
        %2213 = vadd.xlane.f32.xlu0 %v2212
        %v2214 = vpop.xlane.xlu0 %2213
        %v2215 = vsel %vm1225, %v2202, 0.0
        %2216 = vadd.xlane.f32.xlu0 %v2215
        %v2217 = vpop.xlane.xlu0 %2216
        %v2218 = vsel %vm1225, %v2204, 0.0
        %2219 = vadd.xlane.f32.xlu0 %v2218
        %v2220 = vpop.xlane.xlu0 %2219
        %v2221 = vsel %vm1225, %v2206, 0.0
        %2222 = vadd.xlane.f32.xlu0 %v2221
        %v2223 = vpop.xlane.xlu0 %2222
        %v2224 = vsel %vm1225, %v2208, 0.0
        %2225 = vadd.xlane.f32.xlu0 %v2224
        %v2226 = vpop.xlane.xlu0 %2225
        %v2227 = vrcp.pop %v2211
        %v2228 = vmul.f32 %v2198, %v2227
        %v2229 = vrcp.pop %v2214
        %v2230 = vmul.f32 %v2200, %v2229
        %v2231 = vrcp.pop %v2217
        %v2232 = vmul.f32 %v2202, %v2231
        %v2233 = vrcp.pop %v2220
        %v2234 = vmul.f32 %v2204, %v2233
        %v2235 = vrcp.pop %v2223
        %v2236 = vmul.f32 %v2206, %v2235
        %v2237 = vrcp.pop %v2226
        %v2238 = vmul.f32 %v2208, %v2237
        %v2239 = vpack.c.bf16 %v2228, %v2228
        %v2240 = vpack.c.bf16 %v2230, %v2230
        %v2241 = vpack.c.bf16 %v2232, %v2232
        %v2242 = vpack.c.bf16 %v2234, %v2234
        %v2243 = vpack.c.bf16 %v2236, %v2236
        %v2244 = vpack.c.bf16 %v2238, %v2238
        %2245 = vrot.lane.b32.xlu0 %v1217, 56
        %v2246 = vpop.permute.xlu0 %2245
        %v2248 = vsel %vm1225, %v2239, 0
        %v2251 = vsel %vm1589, %v2246, 0
        %2253 = vmatprep.subr.bf16.mxu0 0
        %2254 = vmatpush1.bf16.msra.mxu0 %v2251
        %2255 = vmatprep.subr.bf16.mxu0 0
        %2256 = vmatpush1.bf16.msra.mxu0 0
        %2257 = vmatprep.subr.bf16.mxu0 0
        %2258 = vmatpush1.bf16.msra.mxu0 0
        %2259 = vmatprep.subr.bf16.mxu0 0
        %2260 = vmatpush1.bf16.msra.mxu0 0
        %2261 = vmatprep.subr.bf16.mxu0 0
        %2262 = vmatpush1.bf16.msra.mxu0 0
        %2263 = vmatprep.subr.bf16.mxu0 0
        %2264 = vmatpush1.bf16.msra.mxu0 0
        %2265 = vmatprep.subr.bf16.mxu0 0
        %2266 = vmatpush1.bf16.msra.mxu0 0
        %2267 = vmatprep.subr.bf16.mxu0 0
        %2268 = vmatpush1.bf16.msra.mxu0 0
        %2269 = vmatprep.subr.bf16.mxu0 0
        %2270 = vmatpush1.bf16.msra.mxu0 0
        %2271 = vmatprep.subr.bf16.mxu0 0
        %2272 = vmatpush1.bf16.msra.mxu0 0
        %2273 = vmatprep.subr.bf16.mxu0 0
        %2274 = vmatpush1.bf16.msra.mxu0 0
        %2275 = vmatprep.subr.bf16.mxu0 0
        %2276 = vmatpush1.bf16.msra.mxu0 0
        %2277 = vmatprep.subr.bf16.mxu0 0
        %2278 = vmatpush1.bf16.msra.mxu0 0
        %2279 = vmatprep.subr.bf16.mxu0 0
        %2280 = vmatpush1.bf16.msra.mxu0 0
        %2281 = vmatprep.subr.bf16.mxu0 0
        %2282 = vmatpush1.bf16.msra.mxu0 0
        %2283 = vmatprep.subr.bf16.mxu0 0
        %2284 = vmatpush1.bf16.msra.mxu0 0
        %2285 = vmatprep.mubr.bf16.mxu0 0
        %2286 = vmatmul.mubr.bf16.gmra.mrb[0].mxu0 %v2248
        %v2287 = vpop.f32.mrb[0].mxu0
        %v2288 = vadd.f32 0.0, %v2287
        %v2289 = vpop.f32.mrb[0].mxu0
        %v2290 = vpop.f32.mrb[0].mxu0
        %v2291 = vpop.f32.mrb[0].mxu0
        %2292 = vdwg.mxu0
        %2293 = vrot.lane.b32.xlu0 %v1218, 56
        %v2294 = vpop.permute.xlu0 %2293
        %v2296 = vsel %vm1225, %v2240, 0
        %v2299 = vsel %vm1589, %v2294, 0
        %2301 = vmatprep.subr.bf16.mxu0 0
        %2302 = vmatpush1.bf16.msra.mxu0 %v2299
        %2303 = vmatprep.subr.bf16.mxu0 0
        %2304 = vmatpush1.bf16.msra.mxu0 0
        %2305 = vmatprep.subr.bf16.mxu0 0
        %2306 = vmatpush1.bf16.msra.mxu0 0
        %2307 = vmatprep.subr.bf16.mxu0 0
        %2308 = vmatpush1.bf16.msra.mxu0 0
        %2309 = vmatprep.subr.bf16.mxu0 0
        %2310 = vmatpush1.bf16.msra.mxu0 0
        %2311 = vmatprep.subr.bf16.mxu0 0
        %2312 = vmatpush1.bf16.msra.mxu0 0
        %2313 = vmatprep.subr.bf16.mxu0 0
        %2314 = vmatpush1.bf16.msra.mxu0 0
        %2315 = vmatprep.subr.bf16.mxu0 0
        %2316 = vmatpush1.bf16.msra.mxu0 0
        %2317 = vmatprep.subr.bf16.mxu0 0
        %2318 = vmatpush1.bf16.msra.mxu0 0
        %2319 = vmatprep.subr.bf16.mxu0 0
        %2320 = vmatpush1.bf16.msra.mxu0 0
        %2321 = vmatprep.subr.bf16.mxu0 0
        %2322 = vmatpush1.bf16.msra.mxu0 0
        %2323 = vmatprep.subr.bf16.mxu0 0
        %2324 = vmatpush1.bf16.msra.mxu0 0
        %2325 = vmatprep.subr.bf16.mxu0 0
        %2326 = vmatpush1.bf16.msra.mxu0 0
        %2327 = vmatprep.subr.bf16.mxu0 0
        %2328 = vmatpush1.bf16.msra.mxu0 0
        %2329 = vmatprep.subr.bf16.mxu0 0
        %2330 = vmatpush1.bf16.msra.mxu0 0
        %2331 = vmatprep.subr.bf16.mxu0 0
        %2332 = vmatpush1.bf16.msra.mxu0 0
        %2333 = vmatprep.mubr.bf16.mxu0 0
        %2334 = vmatmul.mubr.bf16.gmra.mrb[0].mxu0 %v2296
        %v2335 = vpop.f32.mrb[0].mxu0
        %v2336 = vadd.f32 0.0, %v2335
        %v2337 = vpop.f32.mrb[0].mxu0
        %v2338 = vpop.f32.mrb[0].mxu0
        %v2339 = vpop.f32.mrb[0].mxu0
        %2340 = vdwg.mxu0
        %2341 = vrot.lane.b32.xlu0 %v1219, 56
        %v2342 = vpop.permute.xlu0 %2341
        %v2344 = vsel %vm1225, %v2241, 0
        %v2347 = vsel %vm1589, %v2342, 0
        %2349 = vmatprep.subr.bf16.mxu0 0
        %2350 = vmatpush1.bf16.msra.mxu0 %v2347
        %2351 = vmatprep.subr.bf16.mxu0 0
        %2352 = vmatpush1.bf16.msra.mxu0 0
        %2353 = vmatprep.subr.bf16.mxu0 0
        %2354 = vmatpush1.bf16.msra.mxu0 0
        %2355 = vmatprep.subr.bf16.mxu0 0
        %2356 = vmatpush1.bf16.msra.mxu0 0
        %2357 = vmatprep.subr.bf16.mxu0 0
        %2358 = vmatpush1.bf16.msra.mxu0 0
        %2359 = vmatprep.subr.bf16.mxu0 0
        %2360 = vmatpush1.bf16.msra.mxu0 0
        %2361 = vmatprep.subr.bf16.mxu0 0
        %2362 = vmatpush1.bf16.msra.mxu0 0
        %2363 = vmatprep.subr.bf16.mxu0 0
        %2364 = vmatpush1.bf16.msra.mxu0 0
        %2365 = vmatprep.subr.bf16.mxu0 0
        %2366 = vmatpush1.bf16.msra.mxu0 0
        %2367 = vmatprep.subr.bf16.mxu0 0
        %2368 = vmatpush1.bf16.msra.mxu0 0
        %2369 = vmatprep.subr.bf16.mxu0 0
        %2370 = vmatpush1.bf16.msra.mxu0 0
        %2371 = vmatprep.subr.bf16.mxu0 0
        %2372 = vmatpush1.bf16.msra.mxu0 0
        %2373 = vmatprep.subr.bf16.mxu0 0
        %2374 = vmatpush1.bf16.msra.mxu0 0
        %2375 = vmatprep.subr.bf16.mxu0 0
        %2376 = vmatpush1.bf16.msra.mxu0 0
        %2377 = vmatprep.subr.bf16.mxu0 0
        %2378 = vmatpush1.bf16.msra.mxu0 0
        %2379 = vmatprep.subr.bf16.mxu0 0
        %2380 = vmatpush1.bf16.msra.mxu0 0
        %2381 = vmatprep.mubr.bf16.mxu0 0
        %2382 = vmatmul.mubr.bf16.gmra.mrb[0].mxu0 %v2344
        %v2383 = vpop.f32.mrb[0].mxu0
        %v2384 = vadd.f32 0.0, %v2383
        %v2385 = vpop.f32.mrb[0].mxu0
        %v2386 = vpop.f32.mrb[0].mxu0
        %v2387 = vpop.f32.mrb[0].mxu0
        %2388 = vdwg.mxu0
        %2389 = vrot.lane.b32.xlu0 %v1220, 56
        %v2390 = vpop.permute.xlu0 %2389
        %v2392 = vsel %vm1225, %v2242, 0
        %v2395 = vsel %vm1589, %v2390, 0
        %2397 = vmatprep.subr.bf16.mxu0 0
        %2398 = vmatpush1.bf16.msra.mxu0 %v2395
        %2399 = vmatprep.subr.bf16.mxu0 0
        %2400 = vmatpush1.bf16.msra.mxu0 0
        %2401 = vmatprep.subr.bf16.mxu0 0
        %2402 = vmatpush1.bf16.msra.mxu0 0
        %2403 = vmatprep.subr.bf16.mxu0 0
        %2404 = vmatpush1.bf16.msra.mxu0 0
        %2405 = vmatprep.subr.bf16.mxu0 0
        %2406 = vmatpush1.bf16.msra.mxu0 0
        %2407 = vmatprep.subr.bf16.mxu0 0
        %2408 = vmatpush1.bf16.msra.mxu0 0
        %2409 = vmatprep.subr.bf16.mxu0 0
        %2410 = vmatpush1.bf16.msra.mxu0 0
        %2411 = vmatprep.subr.bf16.mxu0 0
        %2412 = vmatpush1.bf16.msra.mxu0 0
        %2413 = vmatprep.subr.bf16.mxu0 0
        %2414 = vmatpush1.bf16.msra.mxu0 0
        %2415 = vmatprep.subr.bf16.mxu0 0
        %2416 = vmatpush1.bf16.msra.mxu0 0
        %2417 = vmatprep.subr.bf16.mxu0 0
        %2418 = vmatpush1.bf16.msra.mxu0 0
        %2419 = vmatprep.subr.bf16.mxu0 0
        %2420 = vmatpush1.bf16.msra.mxu0 0
        %2421 = vmatprep.subr.bf16.mxu0 0
        %2422 = vmatpush1.bf16.msra.mxu0 0
        %2423 = vmatprep.subr.bf16.mxu0 0
        %2424 = vmatpush1.bf16.msra.mxu0 0
        %2425 = vmatprep.subr.bf16.mxu0 0
        %2426 = vmatpush1.bf16.msra.mxu0 0
        %2427 = vmatprep.subr.bf16.mxu0 0
        %2428 = vmatpush1.bf16.msra.mxu0 0
        %2429 = vmatprep.mubr.bf16.mxu0 0
        %2430 = vmatmul.mubr.bf16.gmra.mrb[0].mxu0 %v2392
        %v2431 = vpop.f32.mrb[0].mxu0
        %v2432 = vadd.f32 0.0, %v2431
        %v2433 = vpop.f32.mrb[0].mxu0
        %v2434 = vpop.f32.mrb[0].mxu0
        %v2435 = vpop.f32.mrb[0].mxu0
        %2436 = vdwg.mxu0
        %2437 = vrot.lane.b32.xlu0 %v1221, 56
        %v2438 = vpop.permute.xlu0 %2437
        %v2440 = vsel %vm1225, %v2243, 0
        %v2443 = vsel %vm1589, %v2438, 0
        %2445 = vmatprep.subr.bf16.mxu0 0
        %2446 = vmatpush1.bf16.msra.mxu0 %v2443
        %2447 = vmatprep.subr.bf16.mxu0 0
        %2448 = vmatpush1.bf16.msra.mxu0 0
        %2449 = vmatprep.subr.bf16.mxu0 0
        %2450 = vmatpush1.bf16.msra.mxu0 0
        %2451 = vmatprep.subr.bf16.mxu0 0
        %2452 = vmatpush1.bf16.msra.mxu0 0
        %2453 = vmatprep.subr.bf16.mxu0 0
        %2454 = vmatpush1.bf16.msra.mxu0 0
        %2455 = vmatprep.subr.bf16.mxu0 0
        %2456 = vmatpush1.bf16.msra.mxu0 0
        %2457 = vmatprep.subr.bf16.mxu0 0
        %2458 = vmatpush1.bf16.msra.mxu0 0
        %2459 = vmatprep.subr.bf16.mxu0 0
        %2460 = vmatpush1.bf16.msra.mxu0 0
        %2461 = vmatprep.subr.bf16.mxu0 0
        %2462 = vmatpush1.bf16.msra.mxu0 0
        %2463 = vmatprep.subr.bf16.mxu0 0
        %2464 = vmatpush1.bf16.msra.mxu0 0
        %2465 = vmatprep.subr.bf16.mxu0 0
        %2466 = vmatpush1.bf16.msra.mxu0 0
        %2467 = vmatprep.subr.bf16.mxu0 0
        %2468 = vmatpush1.bf16.msra.mxu0 0
        %2469 = vmatprep.subr.bf16.mxu0 0
        %2470 = vmatpush1.bf16.msra.mxu0 0
        %2471 = vmatprep.subr.bf16.mxu0 0
        %2472 = vmatpush1.bf16.msra.mxu0 0
        %2473 = vmatprep.subr.bf16.mxu0 0
        %2474 = vmatpush1.bf16.msra.mxu0 0
        %2475 = vmatprep.subr.bf16.mxu0 0
        %2476 = vmatpush1.bf16.msra.mxu0 0
        %2477 = vmatprep.mubr.bf16.mxu0 0
        %2478 = vmatmul.mubr.bf16.gmra.mrb[0].mxu0 %v2440
        %v2479 = vpop.f32.mrb[0].mxu0
        %v2480 = vadd.f32 0.0, %v2479
        %v2481 = vpop.f32.mrb[0].mxu0
        %v2482 = vpop.f32.mrb[0].mxu0
        %v2483 = vpop.f32.mrb[0].mxu0
        %2484 = vdwg.mxu0
        %2485 = vrot.lane.b32.xlu0 %v1222, 56
        %v2486 = vpop.permute.xlu0 %2485
        %v2488 = vsel %vm1225, %v2244, 0
        %v2491 = vsel %vm1589, %v2486, 0
        %2493 = vmatprep.subr.bf16.mxu0 0
        %2494 = vmatpush1.bf16.msra.mxu0 %v2491
        %2495 = vmatprep.subr.bf16.mxu0 0
        %2496 = vmatpush1.bf16.msra.mxu0 0
        %2497 = vmatprep.subr.bf16.mxu0 0
        %2498 = vmatpush1.bf16.msra.mxu0 0
        %2499 = vmatprep.subr.bf16.mxu0 0
        %2500 = vmatpush1.bf16.msra.mxu0 0
        %2501 = vmatprep.subr.bf16.mxu0 0
        %2502 = vmatpush1.bf16.msra.mxu0 0
        %2503 = vmatprep.subr.bf16.mxu0 0
        %2504 = vmatpush1.bf16.msra.mxu0 0
        %2505 = vmatprep.subr.bf16.mxu0 0
        %2506 = vmatpush1.bf16.msra.mxu0 0
        %2507 = vmatprep.subr.bf16.mxu0 0
        %2508 = vmatpush1.bf16.msra.mxu0 0
        %2509 = vmatprep.subr.bf16.mxu0 0
        %2510 = vmatpush1.bf16.msra.mxu0 0
        %2511 = vmatprep.subr.bf16.mxu0 0
        %2512 = vmatpush1.bf16.msra.mxu0 0
        %2513 = vmatprep.subr.bf16.mxu0 0
        %2514 = vmatpush1.bf16.msra.mxu0 0
        %2515 = vmatprep.subr.bf16.mxu0 0
        %2516 = vmatpush1.bf16.msra.mxu0 0
        %2517 = vmatprep.subr.bf16.mxu0 0
        %2518 = vmatpush1.bf16.msra.mxu0 0
        %2519 = vmatprep.subr.bf16.mxu0 0
        %2520 = vmatpush1.bf16.msra.mxu0 0
        %2521 = vmatprep.subr.bf16.mxu0 0
        %2522 = vmatpush1.bf16.msra.mxu0 0
        %2523 = vmatprep.subr.bf16.mxu0 0
        %2524 = vmatpush1.bf16.msra.mxu0 0
        %2525 = vmatprep.mubr.bf16.mxu0 0
        %2526 = vmatmul.mubr.bf16.gmra.mrb[0].mxu0 %v2488
        %v2527 = vpop.f32.mrb[0].mxu0
        %v2528 = vadd.f32 0.0, %v2527
        %v2529 = vpop.f32.mrb[0].mxu0
        %v2530 = vpop.f32.mrb[0].mxu0
        %v2531 = vpop.f32.mrb[0].mxu0
        %2532 = vdwg.mxu0
        %2533 = vrot.lane.b32.xlu0 %v1217, 112
        %v2534 = vpop.permute.xlu0 %2533
        %2535 = vrot.lane.b32.xlu0 %v1217, 80
        %v2536 = vpop.permute.xlu0 %2535
        %v2538 = vsel %vm1225, %v2534, 0
        %v2541 = vsel %vm1225, %v2536, 0
        %2543 = vmatprep.subr.bf16.mxu0 0
        %2544 = vmatpush1.bf16.xpose.msra.mxu0 %v2541
        %2545 = vmatprep.subr.bf16.mxu0 0
        %2546 = vmatpush1.bf16.xpose.msra.mxu0 0
        %2547 = vmatprep.subr.bf16.mxu0 0
        %2548 = vmatpush1.bf16.xpose.msra.mxu0 0
        %2549 = vmatprep.subr.bf16.mxu0 0
        %2550 = vmatpush1.bf16.xpose.msra.mxu0 0
        %2551 = vmatprep.subr.bf16.mxu0 0
        %2552 = vmatpush1.bf16.xpose.msra.mxu0 0
        %2553 = vmatprep.subr.bf16.mxu0 0
        %2554 = vmatpush1.bf16.xpose.msra.mxu0 0
        %2555 = vmatprep.subr.bf16.mxu0 0
        %2556 = vmatpush1.bf16.xpose.msra.mxu0 0
        %2557 = vmatprep.subr.bf16.mxu0 0
        %2558 = vmatpush1.bf16.xpose.msra.mxu0 0
        %2559 = vmatprep.subr.bf16.mxu0 0
        %2560 = vmatpush1.bf16.xpose.msra.mxu0 0
        %2561 = vmatprep.subr.bf16.mxu0 0
        %2562 = vmatpush1.bf16.xpose.msra.mxu0 0
        %2563 = vmatprep.subr.bf16.mxu0 0
        %2564 = vmatpush1.bf16.xpose.msra.mxu0 0
        %2565 = vmatprep.subr.bf16.mxu0 0
        %2566 = vmatpush1.bf16.xpose.msra.mxu0 0
        %2567 = vmatprep.subr.bf16.mxu0 0
        %2568 = vmatpush1.bf16.xpose.msra.mxu0 0
        %2569 = vmatprep.subr.bf16.mxu0 0
        %2570 = vmatpush1.bf16.xpose.msra.mxu0 0
        %2571 = vmatprep.subr.bf16.mxu0 0
        %2572 = vmatpush1.bf16.xpose.msra.mxu0 0
        %2573 = vmatprep.subr.bf16.mxu0 0
        %2574 = vmatpush1.bf16.xpose.msra.mxu0 0
        %2575 = vmatprep.mubr.bf16.mxu0 0
        %2576 = vmatmul.mubr.bf16.gmra.mrb[0].mxu0 %v2538
        %v2577 = vpop.f32.mrb[0].mxu0
        %v2578 = vadd.f32 %v1207, %v2577
        %v2579 = vpop.f32.mrb[0].mxu0
        %v2580 = vpop.f32.mrb[0].mxu0
        %v2581 = vpop.f32.mrb[0].mxu0
        %2582 = vdwg.mxu0
        %2583 = vrot.lane.b32.xlu0 %v1218, 112
        %v2584 = vpop.permute.xlu0 %2583
        %2585 = vrot.lane.b32.xlu0 %v1218, 80
        %v2586 = vpop.permute.xlu0 %2585
        %v2588 = vsel %vm1225, %v2584, 0
        %v2591 = vsel %vm1225, %v2586, 0
        %2593 = vmatprep.subr.bf16.mxu0 0
        %2594 = vmatpush1.bf16.xpose.msra.mxu0 %v2591
        %2595 = vmatprep.subr.bf16.mxu0 0
        %2596 = vmatpush1.bf16.xpose.msra.mxu0 0
        %2597 = vmatprep.subr.bf16.mxu0 0
        %2598 = vmatpush1.bf16.xpose.msra.mxu0 0
        %2599 = vmatprep.subr.bf16.mxu0 0
        %2600 = vmatpush1.bf16.xpose.msra.mxu0 0
        %2601 = vmatprep.subr.bf16.mxu0 0
        %2602 = vmatpush1.bf16.xpose.msra.mxu0 0
        %2603 = vmatprep.subr.bf16.mxu0 0
        %2604 = vmatpush1.bf16.xpose.msra.mxu0 0
        %2605 = vmatprep.subr.bf16.mxu0 0
        %2606 = vmatpush1.bf16.xpose.msra.mxu0 0
        %2607 = vmatprep.subr.bf16.mxu0 0
        %2608 = vmatpush1.bf16.xpose.msra.mxu0 0
        %2609 = vmatprep.subr.bf16.mxu0 0
        %2610 = vmatpush1.bf16.xpose.msra.mxu0 0
        %2611 = vmatprep.subr.bf16.mxu0 0
        %2612 = vmatpush1.bf16.xpose.msra.mxu0 0
        %2613 = vmatprep.subr.bf16.mxu0 0
        %2614 = vmatpush1.bf16.xpose.msra.mxu0 0
        %2615 = vmatprep.subr.bf16.mxu0 0
        %2616 = vmatpush1.bf16.xpose.msra.mxu0 0
        %2617 = vmatprep.subr.bf16.mxu0 0
        %2618 = vmatpush1.bf16.xpose.msra.mxu0 0
        %2619 = vmatprep.subr.bf16.mxu0 0
        %2620 = vmatpush1.bf16.xpose.msra.mxu0 0
        %2621 = vmatprep.subr.bf16.mxu0 0
        %2622 = vmatpush1.bf16.xpose.msra.mxu0 0
        %2623 = vmatprep.subr.bf16.mxu0 0
        %2624 = vmatpush1.bf16.xpose.msra.mxu0 0
        %2625 = vmatprep.mubr.bf16.mxu0 0
        %2626 = vmatmul.mubr.bf16.gmra.mrb[0].mxu0 %v2588
        %v2627 = vpop.f32.mrb[0].mxu0
        %v2628 = vadd.f32 %v1207, %v2627
        %v2629 = vpop.f32.mrb[0].mxu0
        %v2630 = vpop.f32.mrb[0].mxu0
        %v2631 = vpop.f32.mrb[0].mxu0
        %2632 = vdwg.mxu0
        %2633 = vrot.lane.b32.xlu0 %v1219, 112
        %v2634 = vpop.permute.xlu0 %2633
        %2635 = vrot.lane.b32.xlu0 %v1219, 80
        %v2636 = vpop.permute.xlu0 %2635
        %v2638 = vsel %vm1225, %v2634, 0
        %v2641 = vsel %vm1225, %v2636, 0
        %2643 = vmatprep.subr.bf16.mxu0 0
        %2644 = vmatpush1.bf16.xpose.msra.mxu0 %v2641
        %2645 = vmatprep.subr.bf16.mxu0 0
        %2646 = vmatpush1.bf16.xpose.msra.mxu0 0
        %2647 = vmatprep.subr.bf16.mxu0 0
        %2648 = vmatpush1.bf16.xpose.msra.mxu0 0
        %2649 = vmatprep.subr.bf16.mxu0 0
        %2650 = vmatpush1.bf16.xpose.msra.mxu0 0
        %2651 = vmatprep.subr.bf16.mxu0 0
        %2652 = vmatpush1.bf16.xpose.msra.mxu0 0
        %2653 = vmatprep.subr.bf16.mxu0 0
        %2654 = vmatpush1.bf16.xpose.msra.mxu0 0
        %2655 = vmatprep.subr.bf16.mxu0 0
        %2656 = vmatpush1.bf16.xpose.msra.mxu0 0
        %2657 = vmatprep.subr.bf16.mxu0 0
        %2658 = vmatpush1.bf16.xpose.msra.mxu0 0
        %2659 = vmatprep.subr.bf16.mxu0 0
        %2660 = vmatpush1.bf16.xpose.msra.mxu0 0
        %2661 = vmatprep.subr.bf16.mxu0 0
        %2662 = vmatpush1.bf16.xpose.msra.mxu0 0
        %2663 = vmatprep.subr.bf16.mxu0 0
        %2664 = vmatpush1.bf16.xpose.msra.mxu0 0
        %2665 = vmatprep.subr.bf16.mxu0 0
        %2666 = vmatpush1.bf16.xpose.msra.mxu0 0
        %2667 = vmatprep.subr.bf16.mxu0 0
        %2668 = vmatpush1.bf16.xpose.msra.mxu0 0
        %2669 = vmatprep.subr.bf16.mxu0 0
        %2670 = vmatpush1.bf16.xpose.msra.mxu0 0
        %2671 = vmatprep.subr.bf16.mxu0 0
        %2672 = vmatpush1.bf16.xpose.msra.mxu0 0
        %2673 = vmatprep.subr.bf16.mxu0 0
        %2674 = vmatpush1.bf16.xpose.msra.mxu0 0
        %2675 = vmatprep.mubr.bf16.mxu0 0
        %2676 = vmatmul.mubr.bf16.gmra.mrb[0].mxu0 %v2638
        %v2677 = vpop.f32.mrb[0].mxu0
        %v2678 = vadd.f32 %v1207, %v2677
        %v2679 = vpop.f32.mrb[0].mxu0
        %v2680 = vpop.f32.mrb[0].mxu0
        %v2681 = vpop.f32.mrb[0].mxu0
        %2682 = vdwg.mxu0
        %2683 = vrot.lane.b32.xlu0 %v1220, 112
        %v2684 = vpop.permute.xlu0 %2683
        %2685 = vrot.lane.b32.xlu0 %v1220, 80
        %v2686 = vpop.permute.xlu0 %2685
        %v2688 = vsel %vm1225, %v2684, 0
        %v2691 = vsel %vm1225, %v2686, 0
        %2693 = vmatprep.subr.bf16.mxu0 0
        %2694 = vmatpush1.bf16.xpose.msra.mxu0 %v2691
        %2695 = vmatprep.subr.bf16.mxu0 0
        %2696 = vmatpush1.bf16.xpose.msra.mxu0 0
        %2697 = vmatprep.subr.bf16.mxu0 0
        %2698 = vmatpush1.bf16.xpose.msra.mxu0 0
        %2699 = vmatprep.subr.bf16.mxu0 0
        %2700 = vmatpush1.bf16.xpose.msra.mxu0 0
        %2701 = vmatprep.subr.bf16.mxu0 0
        %2702 = vmatpush1.bf16.xpose.msra.mxu0 0
        %2703 = vmatprep.subr.bf16.mxu0 0
        %2704 = vmatpush1.bf16.xpose.msra.mxu0 0
        %2705 = vmatprep.subr.bf16.mxu0 0
        %2706 = vmatpush1.bf16.xpose.msra.mxu0 0
        %2707 = vmatprep.subr.bf16.mxu0 0
        %2708 = vmatpush1.bf16.xpose.msra.mxu0 0
        %2709 = vmatprep.subr.bf16.mxu0 0
        %2710 = vmatpush1.bf16.xpose.msra.mxu0 0
        %2711 = vmatprep.subr.bf16.mxu0 0
        %2712 = vmatpush1.bf16.xpose.msra.mxu0 0
        %2713 = vmatprep.subr.bf16.mxu0 0
        %2714 = vmatpush1.bf16.xpose.msra.mxu0 0
        %2715 = vmatprep.subr.bf16.mxu0 0
        %2716 = vmatpush1.bf16.xpose.msra.mxu0 0
        %2717 = vmatprep.subr.bf16.mxu0 0
        %2718 = vmatpush1.bf16.xpose.msra.mxu0 0
        %2719 = vmatprep.subr.bf16.mxu0 0
        %2720 = vmatpush1.bf16.xpose.msra.mxu0 0
        %2721 = vmatprep.subr.bf16.mxu0 0
        %2722 = vmatpush1.bf16.xpose.msra.mxu0 0
        %2723 = vmatprep.subr.bf16.mxu0 0
        %2724 = vmatpush1.bf16.xpose.msra.mxu0 0
        %2725 = vmatprep.mubr.bf16.mxu0 0
        %2726 = vmatmul.mubr.bf16.gmra.mrb[0].mxu0 %v2688
        %v2727 = vpop.f32.mrb[0].mxu0
        %v2728 = vadd.f32 %v1207, %v2727
        %v2729 = vpop.f32.mrb[0].mxu0
        %v2730 = vpop.f32.mrb[0].mxu0
        %v2731 = vpop.f32.mrb[0].mxu0
        %2732 = vdwg.mxu0
        %2733 = vrot.lane.b32.xlu0 %v1221, 112
        %v2734 = vpop.permute.xlu0 %2733
        %2735 = vrot.lane.b32.xlu0 %v1221, 80
        %v2736 = vpop.permute.xlu0 %2735
        %v2738 = vsel %vm1225, %v2734, 0
        %v2741 = vsel %vm1225, %v2736, 0
        %2743 = vmatprep.subr.bf16.mxu0 0
        %2744 = vmatpush1.bf16.xpose.msra.mxu0 %v2741
        %2745 = vmatprep.subr.bf16.mxu0 0
        %2746 = vmatpush1.bf16.xpose.msra.mxu0 0
        %2747 = vmatprep.subr.bf16.mxu0 0
        %2748 = vmatpush1.bf16.xpose.msra.mxu0 0
        %2749 = vmatprep.subr.bf16.mxu0 0
        %2750 = vmatpush1.bf16.xpose.msra.mxu0 0
        %2751 = vmatprep.subr.bf16.mxu0 0
        %2752 = vmatpush1.bf16.xpose.msra.mxu0 0
        %2753 = vmatprep.subr.bf16.mxu0 0
        %2754 = vmatpush1.bf16.xpose.msra.mxu0 0
        %2755 = vmatprep.subr.bf16.mxu0 0
        %2756 = vmatpush1.bf16.xpose.msra.mxu0 0
        %2757 = vmatprep.subr.bf16.mxu0 0
        %2758 = vmatpush1.bf16.xpose.msra.mxu0 0
        %2759 = vmatprep.subr.bf16.mxu0 0
        %2760 = vmatpush1.bf16.xpose.msra.mxu0 0
        %2761 = vmatprep.subr.bf16.mxu0 0
        %2762 = vmatpush1.bf16.xpose.msra.mxu0 0
        %2763 = vmatprep.subr.bf16.mxu0 0
        %2764 = vmatpush1.bf16.xpose.msra.mxu0 0
        %2765 = vmatprep.subr.bf16.mxu0 0
        %2766 = vmatpush1.bf16.xpose.msra.mxu0 0
        %2767 = vmatprep.subr.bf16.mxu0 0
        %2768 = vmatpush1.bf16.xpose.msra.mxu0 0
        %2769 = vmatprep.subr.bf16.mxu0 0
        %2770 = vmatpush1.bf16.xpose.msra.mxu0 0
        %2771 = vmatprep.subr.bf16.mxu0 0
        %2772 = vmatpush1.bf16.xpose.msra.mxu0 0
        %2773 = vmatprep.subr.bf16.mxu0 0
        %2774 = vmatpush1.bf16.xpose.msra.mxu0 0
        %2775 = vmatprep.mubr.bf16.mxu0 0
        %2776 = vmatmul.mubr.bf16.gmra.mrb[0].mxu0 %v2738
        %v2777 = vpop.f32.mrb[0].mxu0
        %v2778 = vadd.f32 %v1207, %v2777
        %v2779 = vpop.f32.mrb[0].mxu0
        %v2780 = vpop.f32.mrb[0].mxu0
        %v2781 = vpop.f32.mrb[0].mxu0
        %2782 = vdwg.mxu0
        %2783 = vrot.lane.b32.xlu0 %v1222, 112
        %v2784 = vpop.permute.xlu0 %2783
        %2785 = vrot.lane.b32.xlu0 %v1222, 80
        %v2786 = vpop.permute.xlu0 %2785
        %v2788 = vsel %vm1225, %v2784, 0
        %v2791 = vsel %vm1225, %v2786, 0
        %2793 = vmatprep.subr.bf16.mxu0 0
        %2794 = vmatpush1.bf16.xpose.msra.mxu0 %v2791
        %2795 = vmatprep.subr.bf16.mxu0 0
        %2796 = vmatpush1.bf16.xpose.msra.mxu0 0
        %2797 = vmatprep.subr.bf16.mxu0 0
        %2798 = vmatpush1.bf16.xpose.msra.mxu0 0
        %2799 = vmatprep.subr.bf16.mxu0 0
        %2800 = vmatpush1.bf16.xpose.msra.mxu0 0
        %2801 = vmatprep.subr.bf16.mxu0 0
        %2802 = vmatpush1.bf16.xpose.msra.mxu0 0
        %2803 = vmatprep.subr.bf16.mxu0 0
        %2804 = vmatpush1.bf16.xpose.msra.mxu0 0
        %2805 = vmatprep.subr.bf16.mxu0 0
        %2806 = vmatpush1.bf16.xpose.msra.mxu0 0
        %2807 = vmatprep.subr.bf16.mxu0 0
        %2808 = vmatpush1.bf16.xpose.msra.mxu0 0
        %2809 = vmatprep.subr.bf16.mxu0 0
        %2810 = vmatpush1.bf16.xpose.msra.mxu0 0
        %2811 = vmatprep.subr.bf16.mxu0 0
        %2812 = vmatpush1.bf16.xpose.msra.mxu0 0
        %2813 = vmatprep.subr.bf16.mxu0 0
        %2814 = vmatpush1.bf16.xpose.msra.mxu0 0
        %2815 = vmatprep.subr.bf16.mxu0 0
        %2816 = vmatpush1.bf16.xpose.msra.mxu0 0
        %2817 = vmatprep.subr.bf16.mxu0 0
        %2818 = vmatpush1.bf16.xpose.msra.mxu0 0
        %2819 = vmatprep.subr.bf16.mxu0 0
        %2820 = vmatpush1.bf16.xpose.msra.mxu0 0
        %2821 = vmatprep.subr.bf16.mxu0 0
        %2822 = vmatpush1.bf16.xpose.msra.mxu0 0
        %2823 = vmatprep.subr.bf16.mxu0 0
        %2824 = vmatpush1.bf16.xpose.msra.mxu0 0
        %2825 = vmatprep.mubr.bf16.mxu0 0
        %2826 = vmatmul.mubr.bf16.gmra.mrb[0].mxu0 %v2788
        %v2827 = vpop.f32.mrb[0].mxu0
        %v2828 = vadd.f32 %v1207, %v2827
        %v2829 = vpop.f32.mrb[0].mxu0
        %v2830 = vpop.f32.mrb[0].mxu0
        %v2831 = vpop.f32.mrb[0].mxu0
        %2832 = vdwg.mxu0
        %v2833 = vsel %vm1225, %v2578, -inf
        %2834 = vmax.xlane.f32.xlu0 %v2833
        %v2835 = vpop.xlane.xlu0 %2834
        %v2836 = vsel %vm1225, %v2628, -inf
        %2837 = vmax.xlane.f32.xlu0 %v2836
        %v2838 = vpop.xlane.xlu0 %2837
        %v2839 = vsel %vm1225, %v2678, -inf
        %2840 = vmax.xlane.f32.xlu0 %v2839
        %v2841 = vpop.xlane.xlu0 %2840
        %v2842 = vsel %vm1225, %v2728, -inf
        %2843 = vmax.xlane.f32.xlu0 %v2842
        %v2844 = vpop.xlane.xlu0 %2843
        %v2845 = vsel %vm1225, %v2778, -inf
        %2846 = vmax.xlane.f32.xlu0 %v2845
        %v2847 = vpop.xlane.xlu0 %2846
        %v2848 = vsel %vm1225, %v2828, -inf
        %2849 = vmax.xlane.f32.xlu0 %v2848
        %v2850 = vpop.xlane.xlu0 %2849
        %v2851 = vsub.f32 %v2578, %v2835
        %v2852 = vsub.f32 %v2628, %v2838
        %v2853 = vsub.f32 %v2678, %v2841
        %v2854 = vsub.f32 %v2728, %v2844
        %v2855 = vsub.f32 %v2778, %v2847
        %v2856 = vsub.f32 %v2828, %v2850
        %v2857 = vmul.f32 %v2851, 1.442695
        %v2858 = vpow.pop %v2857
        %v2859 = vmul.f32 %v2852, 1.442695
        %v2860 = vpow.pop %v2859
        %v2861 = vmul.f32 %v2853, 1.442695
        %v2862 = vpow.pop %v2861
        %v2863 = vmul.f32 %v2854, 1.442695
        %v2864 = vpow.pop %v2863
        %v2865 = vmul.f32 %v2855, 1.442695
        %v2866 = vpow.pop %v2865
        %v2867 = vmul.f32 %v2856, 1.442695
        %v2868 = vpow.pop %v2867
        %v2869 = vsel %vm1225, %v2858, 0.0
        %2870 = vadd.xlane.f32.xlu0 %v2869
        %v2871 = vpop.xlane.xlu0 %2870
        %v2872 = vsel %vm1225, %v2860, 0.0
        %2873 = vadd.xlane.f32.xlu0 %v2872
        %v2874 = vpop.xlane.xlu0 %2873
        %v2875 = vsel %vm1225, %v2862, 0.0
        %2876 = vadd.xlane.f32.xlu0 %v2875
        %v2877 = vpop.xlane.xlu0 %2876
        %v2878 = vsel %vm1225, %v2864, 0.0
        %2879 = vadd.xlane.f32.xlu0 %v2878
        %v2880 = vpop.xlane.xlu0 %2879
        %v2881 = vsel %vm1225, %v2866, 0.0
        %2882 = vadd.xlane.f32.xlu0 %v2881
        %v2883 = vpop.xlane.xlu0 %2882
        %v2884 = vsel %vm1225, %v2868, 0.0
        %2885 = vadd.xlane.f32.xlu0 %v2884
        %v2886 = vpop.xlane.xlu0 %2885
        %v2887 = vrcp.pop %v2871
        %v2888 = vmul.f32 %v2858, %v2887
        %v2889 = vrcp.pop %v2874
        %v2890 = vmul.f32 %v2860, %v2889
        %v2891 = vrcp.pop %v2877
        %v2892 = vmul.f32 %v2862, %v2891
        %v2893 = vrcp.pop %v2880
        %v2894 = vmul.f32 %v2864, %v2893
        %v2895 = vrcp.pop %v2883
        %v2896 = vmul.f32 %v2866, %v2895
        %v2897 = vrcp.pop %v2886
        %v2898 = vmul.f32 %v2868, %v2897
        %v2899 = vpack.c.bf16 %v2888, %v2888
        %v2900 = vpack.c.bf16 %v2890, %v2890
        %v2901 = vpack.c.bf16 %v2892, %v2892
        %v2902 = vpack.c.bf16 %v2894, %v2894
        %v2903 = vpack.c.bf16 %v2896, %v2896
        %v2904 = vpack.c.bf16 %v2898, %v2898
        %2905 = vrot.lane.b32.xlu0 %v1217, 48
        %v2906 = vpop.permute.xlu0 %2905
        %v2908 = vsel %vm1225, %v2899, 0
        %v2911 = vsel %vm1589, %v2906, 0
        %2913 = vmatprep.subr.bf16.mxu0 0
        %2914 = vmatpush1.bf16.msra.mxu0 %v2911
        %2915 = vmatprep.subr.bf16.mxu0 0
        %2916 = vmatpush1.bf16.msra.mxu0 0
        %2917 = vmatprep.subr.bf16.mxu0 0
        %2918 = vmatpush1.bf16.msra.mxu0 0
        %2919 = vmatprep.subr.bf16.mxu0 0
        %2920 = vmatpush1.bf16.msra.mxu0 0
        %2921 = vmatprep.subr.bf16.mxu0 0
        %2922 = vmatpush1.bf16.msra.mxu0 0
        %2923 = vmatprep.subr.bf16.mxu0 0
        %2924 = vmatpush1.bf16.msra.mxu0 0
        %2925 = vmatprep.subr.bf16.mxu0 0
        %2926 = vmatpush1.bf16.msra.mxu0 0
        %2927 = vmatprep.subr.bf16.mxu0 0
        %2928 = vmatpush1.bf16.msra.mxu0 0
        %2929 = vmatprep.subr.bf16.mxu0 0
        %2930 = vmatpush1.bf16.msra.mxu0 0
        %2931 = vmatprep.subr.bf16.mxu0 0
        %2932 = vmatpush1.bf16.msra.mxu0 0
        %2933 = vmatprep.subr.bf16.mxu0 0
        %2934 = vmatpush1.bf16.msra.mxu0 0
        %2935 = vmatprep.subr.bf16.mxu0 0
        %2936 = vmatpush1.bf16.msra.mxu0 0
        %2937 = vmatprep.subr.bf16.mxu0 0
        %2938 = vmatpush1.bf16.msra.mxu0 0
        %2939 = vmatprep.subr.bf16.mxu0 0
        %2940 = vmatpush1.bf16.msra.mxu0 0
        %2941 = vmatprep.subr.bf16.mxu0 0
        %2942 = vmatpush1.bf16.msra.mxu0 0
        %2943 = vmatprep.subr.bf16.mxu0 0
        %2944 = vmatpush1.bf16.msra.mxu0 0
        %2945 = vmatprep.mubr.bf16.mxu0 0
        %2946 = vmatmul.mubr.bf16.gmra.mrb[0].mxu0 %v2908
        %v2947 = vpop.f32.mrb[0].mxu0
        %v2948 = vadd.f32 0.0, %v2947
        %v2949 = vpop.f32.mrb[0].mxu0
        %v2950 = vpop.f32.mrb[0].mxu0
        %v2951 = vpop.f32.mrb[0].mxu0
        %2952 = vdwg.mxu0
        %2953 = vrot.lane.b32.xlu0 %v1218, 48
        %v2954 = vpop.permute.xlu0 %2953
        %v2956 = vsel %vm1225, %v2900, 0
        %v2959 = vsel %vm1589, %v2954, 0
        %2961 = vmatprep.subr.bf16.mxu0 0
        %2962 = vmatpush1.bf16.msra.mxu0 %v2959
        %2963 = vmatprep.subr.bf16.mxu0 0
        %2964 = vmatpush1.bf16.msra.mxu0 0
        %2965 = vmatprep.subr.bf16.mxu0 0
        %2966 = vmatpush1.bf16.msra.mxu0 0
        %2967 = vmatprep.subr.bf16.mxu0 0
        %2968 = vmatpush1.bf16.msra.mxu0 0
        %2969 = vmatprep.subr.bf16.mxu0 0
        %2970 = vmatpush1.bf16.msra.mxu0 0
        %2971 = vmatprep.subr.bf16.mxu0 0
        %2972 = vmatpush1.bf16.msra.mxu0 0
        %2973 = vmatprep.subr.bf16.mxu0 0
        %2974 = vmatpush1.bf16.msra.mxu0 0
        %2975 = vmatprep.subr.bf16.mxu0 0
        %2976 = vmatpush1.bf16.msra.mxu0 0
        %2977 = vmatprep.subr.bf16.mxu0 0
        %2978 = vmatpush1.bf16.msra.mxu0 0
        %2979 = vmatprep.subr.bf16.mxu0 0
        %2980 = vmatpush1.bf16.msra.mxu0 0
        %2981 = vmatprep.subr.bf16.mxu0 0
        %2982 = vmatpush1.bf16.msra.mxu0 0
        %2983 = vmatprep.subr.bf16.mxu0 0
        %2984 = vmatpush1.bf16.msra.mxu0 0
        %2985 = vmatprep.subr.bf16.mxu0 0
        %2986 = vmatpush1.bf16.msra.mxu0 0
        %2987 = vmatprep.subr.bf16.mxu0 0
        %2988 = vmatpush1.bf16.msra.mxu0 0
        %2989 = vmatprep.subr.bf16.mxu0 0
        %2990 = vmatpush1.bf16.msra.mxu0 0
        %2991 = vmatprep.subr.bf16.mxu0 0
        %2992 = vmatpush1.bf16.msra.mxu0 0
        %2993 = vmatprep.mubr.bf16.mxu0 0
        %2994 = vmatmul.mubr.bf16.gmra.mrb[0].mxu0 %v2956
        %v2995 = vpop.f32.mrb[0].mxu0
        %v2996 = vadd.f32 0.0, %v2995
        %v2997 = vpop.f32.mrb[0].mxu0
        %v2998 = vpop.f32.mrb[0].mxu0
        %v2999 = vpop.f32.mrb[0].mxu0
        %3000 = vdwg.mxu0
        %3001 = vrot.lane.b32.xlu0 %v1219, 48
        %v3002 = vpop.permute.xlu0 %3001
        %v3004 = vsel %vm1225, %v2901, 0
        %v3007 = vsel %vm1589, %v3002, 0
        %3009 = vmatprep.subr.bf16.mxu0 0
        %3010 = vmatpush1.bf16.msra.mxu0 %v3007
        %3011 = vmatprep.subr.bf16.mxu0 0
        %3012 = vmatpush1.bf16.msra.mxu0 0
        %3013 = vmatprep.subr.bf16.mxu0 0
        %3014 = vmatpush1.bf16.msra.mxu0 0
        %3015 = vmatprep.subr.bf16.mxu0 0
        %3016 = vmatpush1.bf16.msra.mxu0 0
        %3017 = vmatprep.subr.bf16.mxu0 0
        %3018 = vmatpush1.bf16.msra.mxu0 0
        %3019 = vmatprep.subr.bf16.mxu0 0
        %3020 = vmatpush1.bf16.msra.mxu0 0
        %3021 = vmatprep.subr.bf16.mxu0 0
        %3022 = vmatpush1.bf16.msra.mxu0 0
        %3023 = vmatprep.subr.bf16.mxu0 0
        %3024 = vmatpush1.bf16.msra.mxu0 0
        %3025 = vmatprep.subr.bf16.mxu0 0
        %3026 = vmatpush1.bf16.msra.mxu0 0
        %3027 = vmatprep.subr.bf16.mxu0 0
        %3028 = vmatpush1.bf16.msra.mxu0 0
        %3029 = vmatprep.subr.bf16.mxu0 0
        %3030 = vmatpush1.bf16.msra.mxu0 0
        %3031 = vmatprep.subr.bf16.mxu0 0
        %3032 = vmatpush1.bf16.msra.mxu0 0
        %3033 = vmatprep.subr.bf16.mxu0 0
        %3034 = vmatpush1.bf16.msra.mxu0 0
        %3035 = vmatprep.subr.bf16.mxu0 0
        %3036 = vmatpush1.bf16.msra.mxu0 0
        %3037 = vmatprep.subr.bf16.mxu0 0
        %3038 = vmatpush1.bf16.msra.mxu0 0
        %3039 = vmatprep.subr.bf16.mxu0 0
        %3040 = vmatpush1.bf16.msra.mxu0 0
        %3041 = vmatprep.mubr.bf16.mxu0 0
        %3042 = vmatmul.mubr.bf16.gmra.mrb[0].mxu0 %v3004
        %v3043 = vpop.f32.mrb[0].mxu0
        %v3044 = vadd.f32 0.0, %v3043
        %v3045 = vpop.f32.mrb[0].mxu0
        %v3046 = vpop.f32.mrb[0].mxu0
        %v3047 = vpop.f32.mrb[0].mxu0
        %3048 = vdwg.mxu0
        %3049 = vrot.lane.b32.xlu0 %v1220, 48
        %v3050 = vpop.permute.xlu0 %3049
        %v3052 = vsel %vm1225, %v2902, 0
        %v3055 = vsel %vm1589, %v3050, 0
        %3057 = vmatprep.subr.bf16.mxu0 0
        %3058 = vmatpush1.bf16.msra.mxu0 %v3055
        %3059 = vmatprep.subr.bf16.mxu0 0
        %3060 = vmatpush1.bf16.msra.mxu0 0
        %3061 = vmatprep.subr.bf16.mxu0 0
        %3062 = vmatpush1.bf16.msra.mxu0 0
        %3063 = vmatprep.subr.bf16.mxu0 0
        %3064 = vmatpush1.bf16.msra.mxu0 0
        %3065 = vmatprep.subr.bf16.mxu0 0
        %3066 = vmatpush1.bf16.msra.mxu0 0
        %3067 = vmatprep.subr.bf16.mxu0 0
        %3068 = vmatpush1.bf16.msra.mxu0 0
        %3069 = vmatprep.subr.bf16.mxu0 0
        %3070 = vmatpush1.bf16.msra.mxu0 0
        %3071 = vmatprep.subr.bf16.mxu0 0
        %3072 = vmatpush1.bf16.msra.mxu0 0
        %3073 = vmatprep.subr.bf16.mxu0 0
        %3074 = vmatpush1.bf16.msra.mxu0 0
        %3075 = vmatprep.subr.bf16.mxu0 0
        %3076 = vmatpush1.bf16.msra.mxu0 0
        %3077 = vmatprep.subr.bf16.mxu0 0
        %3078 = vmatpush1.bf16.msra.mxu0 0
        %3079 = vmatprep.subr.bf16.mxu0 0
        %3080 = vmatpush1.bf16.msra.mxu0 0
        %3081 = vmatprep.subr.bf16.mxu0 0
        %3082 = vmatpush1.bf16.msra.mxu0 0
        %3083 = vmatprep.subr.bf16.mxu0 0
        %3084 = vmatpush1.bf16.msra.mxu0 0
        %3085 = vmatprep.subr.bf16.mxu0 0
        %3086 = vmatpush1.bf16.msra.mxu0 0
        %3087 = vmatprep.subr.bf16.mxu0 0
        %3088 = vmatpush1.bf16.msra.mxu0 0
        %3089 = vmatprep.mubr.bf16.mxu0 0
        %3090 = vmatmul.mubr.bf16.gmra.mrb[0].mxu0 %v3052
        %v3091 = vpop.f32.mrb[0].mxu0
        %v3092 = vadd.f32 0.0, %v3091
        %v3093 = vpop.f32.mrb[0].mxu0
        %v3094 = vpop.f32.mrb[0].mxu0
        %v3095 = vpop.f32.mrb[0].mxu0
        %3096 = vdwg.mxu0
        %3097 = vrot.lane.b32.xlu0 %v1221, 48
        %v3098 = vpop.permute.xlu0 %3097
        %v3100 = vsel %vm1225, %v2903, 0
        %v3103 = vsel %vm1589, %v3098, 0
        %3105 = vmatprep.subr.bf16.mxu0 0
        %3106 = vmatpush1.bf16.msra.mxu0 %v3103
        %3107 = vmatprep.subr.bf16.mxu0 0
        %3108 = vmatpush1.bf16.msra.mxu0 0
        %3109 = vmatprep.subr.bf16.mxu0 0
        %3110 = vmatpush1.bf16.msra.mxu0 0
        %3111 = vmatprep.subr.bf16.mxu0 0
        %3112 = vmatpush1.bf16.msra.mxu0 0
        %3113 = vmatprep.subr.bf16.mxu0 0
        %3114 = vmatpush1.bf16.msra.mxu0 0
        %3115 = vmatprep.subr.bf16.mxu0 0
        %3116 = vmatpush1.bf16.msra.mxu0 0
        %3117 = vmatprep.subr.bf16.mxu0 0
        %3118 = vmatpush1.bf16.msra.mxu0 0
        %3119 = vmatprep.subr.bf16.mxu0 0
        %3120 = vmatpush1.bf16.msra.mxu0 0
        %3121 = vmatprep.subr.bf16.mxu0 0
        %3122 = vmatpush1.bf16.msra.mxu0 0
        %3123 = vmatprep.subr.bf16.mxu0 0
        %3124 = vmatpush1.bf16.msra.mxu0 0
        %3125 = vmatprep.subr.bf16.mxu0 0
        %3126 = vmatpush1.bf16.msra.mxu0 0
        %3127 = vmatprep.subr.bf16.mxu0 0
        %3128 = vmatpush1.bf16.msra.mxu0 0
        %3129 = vmatprep.subr.bf16.mxu0 0
        %3130 = vmatpush1.bf16.msra.mxu0 0
        %3131 = vmatprep.subr.bf16.mxu0 0
        %3132 = vmatpush1.bf16.msra.mxu0 0
        %3133 = vmatprep.subr.bf16.mxu0 0
        %3134 = vmatpush1.bf16.msra.mxu0 0
        %3135 = vmatprep.subr.bf16.mxu0 0
        %3136 = vmatpush1.bf16.msra.mxu0 0
        %3137 = vmatprep.mubr.bf16.mxu0 0
        %3138 = vmatmul.mubr.bf16.gmra.mrb[0].mxu0 %v3100
        %v3139 = vpop.f32.mrb[0].mxu0
        %v3140 = vadd.f32 0.0, %v3139
        %v3141 = vpop.f32.mrb[0].mxu0
        %v3142 = vpop.f32.mrb[0].mxu0
        %v3143 = vpop.f32.mrb[0].mxu0
        %3144 = vdwg.mxu0
        %3145 = vrot.lane.b32.xlu0 %v1222, 48
        %v3146 = vpop.permute.xlu0 %3145
        %v3148 = vsel %vm1225, %v2904, 0
        %v3151 = vsel %vm1589, %v3146, 0
        %3153 = vmatprep.subr.bf16.mxu0 0
        %3154 = vmatpush1.bf16.msra.mxu0 %v3151
        %3155 = vmatprep.subr.bf16.mxu0 0
        %3156 = vmatpush1.bf16.msra.mxu0 0
        %3157 = vmatprep.subr.bf16.mxu0 0
        %3158 = vmatpush1.bf16.msra.mxu0 0
        %3159 = vmatprep.subr.bf16.mxu0 0
        %3160 = vmatpush1.bf16.msra.mxu0 0
        %3161 = vmatprep.subr.bf16.mxu0 0
        %3162 = vmatpush1.bf16.msra.mxu0 0
        %3163 = vmatprep.subr.bf16.mxu0 0
        %3164 = vmatpush1.bf16.msra.mxu0 0
        %3165 = vmatprep.subr.bf16.mxu0 0
        %3166 = vmatpush1.bf16.msra.mxu0 0
        %3167 = vmatprep.subr.bf16.mxu0 0
        %3168 = vmatpush1.bf16.msra.mxu0 0
        %3169 = vmatprep.subr.bf16.mxu0 0
        %3170 = vmatpush1.bf16.msra.mxu0 0
        %3171 = vmatprep.subr.bf16.mxu0 0
        %3172 = vmatpush1.bf16.msra.mxu0 0
        %3173 = vmatprep.subr.bf16.mxu0 0
        %3174 = vmatpush1.bf16.msra.mxu0 0
        %3175 = vmatprep.subr.bf16.mxu0 0
        %3176 = vmatpush1.bf16.msra.mxu0 0
        %3177 = vmatprep.subr.bf16.mxu0 0
        %3178 = vmatpush1.bf16.msra.mxu0 0
        %3179 = vmatprep.subr.bf16.mxu0 0
        %3180 = vmatpush1.bf16.msra.mxu0 0
        %3181 = vmatprep.subr.bf16.mxu0 0
        %3182 = vmatpush1.bf16.msra.mxu0 0
        %3183 = vmatprep.subr.bf16.mxu0 0
        %3184 = vmatpush1.bf16.msra.mxu0 0
        %3185 = vmatprep.mubr.bf16.mxu0 0
        %3186 = vmatmul.mubr.bf16.gmra.mrb[0].mxu0 %v3148
        %v3187 = vpop.f32.mrb[0].mxu0
        %v3188 = vadd.f32 0.0, %v3187
        %v3189 = vpop.f32.mrb[0].mxu0
        %v3190 = vpop.f32.mrb[0].mxu0
        %v3191 = vpop.f32.mrb[0].mxu0
        %3192 = vdwg.mxu0
        %3193 = vrot.lane.b32.xlu0 %v1217, 104
        %v3194 = vpop.permute.xlu0 %3193
        %3195 = vrot.lane.b32.xlu0 %v1217, 72
        %v3196 = vpop.permute.xlu0 %3195
        %v3198 = vsel %vm1225, %v3194, 0
        %v3201 = vsel %vm1225, %v3196, 0
        %3203 = vmatprep.subr.bf16.mxu0 0
        %3204 = vmatpush1.bf16.xpose.msra.mxu0 %v3201
        %3205 = vmatprep.subr.bf16.mxu0 0
        %3206 = vmatpush1.bf16.xpose.msra.mxu0 0
        %3207 = vmatprep.subr.bf16.mxu0 0
        %3208 = vmatpush1.bf16.xpose.msra.mxu0 0
        %3209 = vmatprep.subr.bf16.mxu0 0
        %3210 = vmatpush1.bf16.xpose.msra.mxu0 0
        %3211 = vmatprep.subr.bf16.mxu0 0
        %3212 = vmatpush1.bf16.xpose.msra.mxu0 0
        %3213 = vmatprep.subr.bf16.mxu0 0
        %3214 = vmatpush1.bf16.xpose.msra.mxu0 0
        %3215 = vmatprep.subr.bf16.mxu0 0
        %3216 = vmatpush1.bf16.xpose.msra.mxu0 0
        %3217 = vmatprep.subr.bf16.mxu0 0
        %3218 = vmatpush1.bf16.xpose.msra.mxu0 0
        %3219 = vmatprep.subr.bf16.mxu0 0
        %3220 = vmatpush1.bf16.xpose.msra.mxu0 0
        %3221 = vmatprep.subr.bf16.mxu0 0
        %3222 = vmatpush1.bf16.xpose.msra.mxu0 0
        %3223 = vmatprep.subr.bf16.mxu0 0
        %3224 = vmatpush1.bf16.xpose.msra.mxu0 0
        %3225 = vmatprep.subr.bf16.mxu0 0
        %3226 = vmatpush1.bf16.xpose.msra.mxu0 0
        %3227 = vmatprep.subr.bf16.mxu0 0
        %3228 = vmatpush1.bf16.xpose.msra.mxu0 0
        %3229 = vmatprep.subr.bf16.mxu0 0
        %3230 = vmatpush1.bf16.xpose.msra.mxu0 0
        %3231 = vmatprep.subr.bf16.mxu0 0
        %3232 = vmatpush1.bf16.xpose.msra.mxu0 0
        %3233 = vmatprep.subr.bf16.mxu0 0
        %3234 = vmatpush1.bf16.xpose.msra.mxu0 0
        %3235 = vmatprep.mubr.bf16.mxu0 0
        %3236 = vmatmul.mubr.bf16.gmra.mrb[0].mxu0 %v3198
        %v3237 = vpop.f32.mrb[0].mxu0
        %v3238 = vadd.f32 %v1207, %v3237
        %v3239 = vpop.f32.mrb[0].mxu0
        %v3240 = vpop.f32.mrb[0].mxu0
        %v3241 = vpop.f32.mrb[0].mxu0
        %3242 = vdwg.mxu0
        %3243 = vrot.lane.b32.xlu0 %v1218, 104
        %v3244 = vpop.permute.xlu0 %3243
        %3245 = vrot.lane.b32.xlu0 %v1218, 72
        %v3246 = vpop.permute.xlu0 %3245
        %v3248 = vsel %vm1225, %v3244, 0
        %v3251 = vsel %vm1225, %v3246, 0
        %3253 = vmatprep.subr.bf16.mxu0 0
        %3254 = vmatpush1.bf16.xpose.msra.mxu0 %v3251
        %3255 = vmatprep.subr.bf16.mxu0 0
        %3256 = vmatpush1.bf16.xpose.msra.mxu0 0
        %3257 = vmatprep.subr.bf16.mxu0 0
        %3258 = vmatpush1.bf16.xpose.msra.mxu0 0
        %3259 = vmatprep.subr.bf16.mxu0 0
        %3260 = vmatpush1.bf16.xpose.msra.mxu0 0
        %3261 = vmatprep.subr.bf16.mxu0 0
        %3262 = vmatpush1.bf16.xpose.msra.mxu0 0
        %3263 = vmatprep.subr.bf16.mxu0 0
        %3264 = vmatpush1.bf16.xpose.msra.mxu0 0
        %3265 = vmatprep.subr.bf16.mxu0 0
        %3266 = vmatpush1.bf16.xpose.msra.mxu0 0
        %3267 = vmatprep.subr.bf16.mxu0 0
        %3268 = vmatpush1.bf16.xpose.msra.mxu0 0
        %3269 = vmatprep.subr.bf16.mxu0 0
        %3270 = vmatpush1.bf16.xpose.msra.mxu0 0
        %3271 = vmatprep.subr.bf16.mxu0 0
        %3272 = vmatpush1.bf16.xpose.msra.mxu0 0
        %3273 = vmatprep.subr.bf16.mxu0 0
        %3274 = vmatpush1.bf16.xpose.msra.mxu0 0
        %3275 = vmatprep.subr.bf16.mxu0 0
        %3276 = vmatpush1.bf16.xpose.msra.mxu0 0
        %3277 = vmatprep.subr.bf16.mxu0 0
        %3278 = vmatpush1.bf16.xpose.msra.mxu0 0
        %3279 = vmatprep.subr.bf16.mxu0 0
        %3280 = vmatpush1.bf16.xpose.msra.mxu0 0
        %3281 = vmatprep.subr.bf16.mxu0 0
        %3282 = vmatpush1.bf16.xpose.msra.mxu0 0
        %3283 = vmatprep.subr.bf16.mxu0 0
        %3284 = vmatpush1.bf16.xpose.msra.mxu0 0
        %3285 = vmatprep.mubr.bf16.mxu0 0
        %3286 = vmatmul.mubr.bf16.gmra.mrb[0].mxu0 %v3248
        %v3287 = vpop.f32.mrb[0].mxu0
        %v3288 = vadd.f32 %v1207, %v3287
        %v3289 = vpop.f32.mrb[0].mxu0
        %v3290 = vpop.f32.mrb[0].mxu0
        %v3291 = vpop.f32.mrb[0].mxu0
        %3292 = vdwg.mxu0
        %3293 = vrot.lane.b32.xlu0 %v1219, 104
        %v3294 = vpop.permute.xlu0 %3293
        %3295 = vrot.lane.b32.xlu0 %v1219, 72
        %v3296 = vpop.permute.xlu0 %3295
        %v3298 = vsel %vm1225, %v3294, 0
        %v3301 = vsel %vm1225, %v3296, 0
        %3303 = vmatprep.subr.bf16.mxu0 0
        %3304 = vmatpush1.bf16.xpose.msra.mxu0 %v3301
        %3305 = vmatprep.subr.bf16.mxu0 0
        %3306 = vmatpush1.bf16.xpose.msra.mxu0 0
        %3307 = vmatprep.subr.bf16.mxu0 0
        %3308 = vmatpush1.bf16.xpose.msra.mxu0 0
        %3309 = vmatprep.subr.bf16.mxu0 0
        %3310 = vmatpush1.bf16.xpose.msra.mxu0 0
        %3311 = vmatprep.subr.bf16.mxu0 0
        %3312 = vmatpush1.bf16.xpose.msra.mxu0 0
        %3313 = vmatprep.subr.bf16.mxu0 0
        %3314 = vmatpush1.bf16.xpose.msra.mxu0 0
        %3315 = vmatprep.subr.bf16.mxu0 0
        %3316 = vmatpush1.bf16.xpose.msra.mxu0 0
        %3317 = vmatprep.subr.bf16.mxu0 0
        %3318 = vmatpush1.bf16.xpose.msra.mxu0 0
        %3319 = vmatprep.subr.bf16.mxu0 0
        %3320 = vmatpush1.bf16.xpose.msra.mxu0 0
        %3321 = vmatprep.subr.bf16.mxu0 0
        %3322 = vmatpush1.bf16.xpose.msra.mxu0 0
        %3323 = vmatprep.subr.bf16.mxu0 0
        %3324 = vmatpush1.bf16.xpose.msra.mxu0 0
        %3325 = vmatprep.subr.bf16.mxu0 0
        %3326 = vmatpush1.bf16.xpose.msra.mxu0 0
        %3327 = vmatprep.subr.bf16.mxu0 0
        %3328 = vmatpush1.bf16.xpose.msra.mxu0 0
        %3329 = vmatprep.subr.bf16.mxu0 0
        %3330 = vmatpush1.bf16.xpose.msra.mxu0 0
        %3331 = vmatprep.subr.bf16.mxu0 0
        %3332 = vmatpush1.bf16.xpose.msra.mxu0 0
        %3333 = vmatprep.subr.bf16.mxu0 0
        %3334 = vmatpush1.bf16.xpose.msra.mxu0 0
        %3335 = vmatprep.mubr.bf16.mxu0 0
        %3336 = vmatmul.mubr.bf16.gmra.mrb[0].mxu0 %v3298
        %v3337 = vpop.f32.mrb[0].mxu0
        %v3338 = vadd.f32 %v1207, %v3337
        %v3339 = vpop.f32.mrb[0].mxu0
        %v3340 = vpop.f32.mrb[0].mxu0
        %v3341 = vpop.f32.mrb[0].mxu0
        %3342 = vdwg.mxu0
        %3343 = vrot.lane.b32.xlu0 %v1220, 104
        %v3344 = vpop.permute.xlu0 %3343
        %3345 = vrot.lane.b32.xlu0 %v1220, 72
        %v3346 = vpop.permute.xlu0 %3345
        %v3348 = vsel %vm1225, %v3344, 0
        %v3351 = vsel %vm1225, %v3346, 0
        %3353 = vmatprep.subr.bf16.mxu0 0
        %3354 = vmatpush1.bf16.xpose.msra.mxu0 %v3351
        %3355 = vmatprep.subr.bf16.mxu0 0
        %3356 = vmatpush1.bf16.xpose.msra.mxu0 0
        %3357 = vmatprep.subr.bf16.mxu0 0
        %3358 = vmatpush1.bf16.xpose.msra.mxu0 0
        %3359 = vmatprep.subr.bf16.mxu0 0
        %3360 = vmatpush1.bf16.xpose.msra.mxu0 0
        %3361 = vmatprep.subr.bf16.mxu0 0
        %3362 = vmatpush1.bf16.xpose.msra.mxu0 0
        %3363 = vmatprep.subr.bf16.mxu0 0
        %3364 = vmatpush1.bf16.xpose.msra.mxu0 0
        %3365 = vmatprep.subr.bf16.mxu0 0
        %3366 = vmatpush1.bf16.xpose.msra.mxu0 0
        %3367 = vmatprep.subr.bf16.mxu0 0
        %3368 = vmatpush1.bf16.xpose.msra.mxu0 0
        %3369 = vmatprep.subr.bf16.mxu0 0
        %3370 = vmatpush1.bf16.xpose.msra.mxu0 0
        %3371 = vmatprep.subr.bf16.mxu0 0
        %3372 = vmatpush1.bf16.xpose.msra.mxu0 0
        %3373 = vmatprep.subr.bf16.mxu0 0
        %3374 = vmatpush1.bf16.xpose.msra.mxu0 0
        %3375 = vmatprep.subr.bf16.mxu0 0
        %3376 = vmatpush1.bf16.xpose.msra.mxu0 0
        %3377 = vmatprep.subr.bf16.mxu0 0
        %3378 = vmatpush1.bf16.xpose.msra.mxu0 0
        %3379 = vmatprep.subr.bf16.mxu0 0
        %3380 = vmatpush1.bf16.xpose.msra.mxu0 0
        %3381 = vmatprep.subr.bf16.mxu0 0
        %3382 = vmatpush1.bf16.xpose.msra.mxu0 0
        %3383 = vmatprep.subr.bf16.mxu0 0
        %3384 = vmatpush1.bf16.xpose.msra.mxu0 0
        %3385 = vmatprep.mubr.bf16.mxu0 0
        %3386 = vmatmul.mubr.bf16.gmra.mrb[0].mxu0 %v3348
        %v3387 = vpop.f32.mrb[0].mxu0
        %v3388 = vadd.f32 %v1207, %v3387
        %v3389 = vpop.f32.mrb[0].mxu0
        %v3390 = vpop.f32.mrb[0].mxu0
        %v3391 = vpop.f32.mrb[0].mxu0
        %3392 = vdwg.mxu0
        %3393 = vrot.lane.b32.xlu0 %v1221, 104
        %v3394 = vpop.permute.xlu0 %3393
        %3395 = vrot.lane.b32.xlu0 %v1221, 72
        %v3396 = vpop.permute.xlu0 %3395
        %v3398 = vsel %vm1225, %v3394, 0
        %v3401 = vsel %vm1225, %v3396, 0
        %3403 = vmatprep.subr.bf16.mxu0 0
        %3404 = vmatpush1.bf16.xpose.msra.mxu0 %v3401
        %3405 = vmatprep.subr.bf16.mxu0 0
        %3406 = vmatpush1.bf16.xpose.msra.mxu0 0
        %3407 = vmatprep.subr.bf16.mxu0 0
        %3408 = vmatpush1.bf16.xpose.msra.mxu0 0
        %3409 = vmatprep.subr.bf16.mxu0 0
        %3410 = vmatpush1.bf16.xpose.msra.mxu0 0
        %3411 = vmatprep.subr.bf16.mxu0 0
        %3412 = vmatpush1.bf16.xpose.msra.mxu0 0
        %3413 = vmatprep.subr.bf16.mxu0 0
        %3414 = vmatpush1.bf16.xpose.msra.mxu0 0
        %3415 = vmatprep.subr.bf16.mxu0 0
        %3416 = vmatpush1.bf16.xpose.msra.mxu0 0
        %3417 = vmatprep.subr.bf16.mxu0 0
        %3418 = vmatpush1.bf16.xpose.msra.mxu0 0
        %3419 = vmatprep.subr.bf16.mxu0 0
        %3420 = vmatpush1.bf16.xpose.msra.mxu0 0
        %3421 = vmatprep.subr.bf16.mxu0 0
        %3422 = vmatpush1.bf16.xpose.msra.mxu0 0
        %3423 = vmatprep.subr.bf16.mxu0 0
        %3424 = vmatpush1.bf16.xpose.msra.mxu0 0
        %3425 = vmatprep.subr.bf16.mxu0 0
        %3426 = vmatpush1.bf16.xpose.msra.mxu0 0
        %3427 = vmatprep.subr.bf16.mxu0 0
        %3428 = vmatpush1.bf16.xpose.msra.mxu0 0
        %3429 = vmatprep.subr.bf16.mxu0 0
        %3430 = vmatpush1.bf16.xpose.msra.mxu0 0
        %3431 = vmatprep.subr.bf16.mxu0 0
        %3432 = vmatpush1.bf16.xpose.msra.mxu0 0
        %3433 = vmatprep.subr.bf16.mxu0 0
        %3434 = vmatpush1.bf16.xpose.msra.mxu0 0
        %3435 = vmatprep.mubr.bf16.mxu0 0
        %3436 = vmatmul.mubr.bf16.gmra.mrb[0].mxu0 %v3398
        %v3437 = vpop.f32.mrb[0].mxu0
        %v3438 = vadd.f32 %v1207, %v3437
        %v3439 = vpop.f32.mrb[0].mxu0
        %v3440 = vpop.f32.mrb[0].mxu0
        %v3441 = vpop.f32.mrb[0].mxu0
        %3442 = vdwg.mxu0
        %3443 = vrot.lane.b32.xlu0 %v1222, 104
        %v3444 = vpop.permute.xlu0 %3443
        %3445 = vrot.lane.b32.xlu0 %v1222, 72
        %v3446 = vpop.permute.xlu0 %3445
        %v3448 = vsel %vm1225, %v3444, 0
        %v3451 = vsel %vm1225, %v3446, 0
        %3453 = vmatprep.subr.bf16.mxu0 0
        %3454 = vmatpush1.bf16.xpose.msra.mxu0 %v3451
        %3455 = vmatprep.subr.bf16.mxu0 0
        %3456 = vmatpush1.bf16.xpose.msra.mxu0 0
        %3457 = vmatprep.subr.bf16.mxu0 0
        %3458 = vmatpush1.bf16.xpose.msra.mxu0 0
        %3459 = vmatprep.subr.bf16.mxu0 0
        %3460 = vmatpush1.bf16.xpose.msra.mxu0 0
        %3461 = vmatprep.subr.bf16.mxu0 0
        %3462 = vmatpush1.bf16.xpose.msra.mxu0 0
        %3463 = vmatprep.subr.bf16.mxu0 0
        %3464 = vmatpush1.bf16.xpose.msra.mxu0 0
        %3465 = vmatprep.subr.bf16.mxu0 0
        %3466 = vmatpush1.bf16.xpose.msra.mxu0 0
        %3467 = vmatprep.subr.bf16.mxu0 0
        %3468 = vmatpush1.bf16.xpose.msra.mxu0 0
        %3469 = vmatprep.subr.bf16.mxu0 0
        %3470 = vmatpush1.bf16.xpose.msra.mxu0 0
        %3471 = vmatprep.subr.bf16.mxu0 0
        %3472 = vmatpush1.bf16.xpose.msra.mxu0 0
        %3473 = vmatprep.subr.bf16.mxu0 0
        %3474 = vmatpush1.bf16.xpose.msra.mxu0 0
        %3475 = vmatprep.subr.bf16.mxu0 0
        %3476 = vmatpush1.bf16.xpose.msra.mxu0 0
        %3477 = vmatprep.subr.bf16.mxu0 0
        %3478 = vmatpush1.bf16.xpose.msra.mxu0 0
        %3479 = vmatprep.subr.bf16.mxu0 0
        %3480 = vmatpush1.bf16.xpose.msra.mxu0 0
        %3481 = vmatprep.subr.bf16.mxu0 0
        %3482 = vmatpush1.bf16.xpose.msra.mxu0 0
        %3483 = vmatprep.subr.bf16.mxu0 0
        %3484 = vmatpush1.bf16.xpose.msra.mxu0 0
        %3485 = vmatprep.mubr.bf16.mxu0 0
        %3486 = vmatmul.mubr.bf16.gmra.mrb[0].mxu0 %v3448
        %v3487 = vpop.f32.mrb[0].mxu0
        %v3488 = vadd.f32 %v1207, %v3487
        %v3489 = vpop.f32.mrb[0].mxu0
        %v3490 = vpop.f32.mrb[0].mxu0
        %v3491 = vpop.f32.mrb[0].mxu0
        %3492 = vdwg.mxu0
        %v3493 = vsel %vm1225, %v3238, -inf
        %3494 = vmax.xlane.f32.xlu0 %v3493
        %v3495 = vpop.xlane.xlu0 %3494
        %v3496 = vsel %vm1225, %v3288, -inf
        %3497 = vmax.xlane.f32.xlu0 %v3496
        %v3498 = vpop.xlane.xlu0 %3497
        %v3499 = vsel %vm1225, %v3338, -inf
        %3500 = vmax.xlane.f32.xlu0 %v3499
        %v3501 = vpop.xlane.xlu0 %3500
        %v3502 = vsel %vm1225, %v3388, -inf
        %3503 = vmax.xlane.f32.xlu0 %v3502
        %v3504 = vpop.xlane.xlu0 %3503
        %v3505 = vsel %vm1225, %v3438, -inf
        %3506 = vmax.xlane.f32.xlu0 %v3505
        %v3507 = vpop.xlane.xlu0 %3506
        %v3508 = vsel %vm1225, %v3488, -inf
        %3509 = vmax.xlane.f32.xlu0 %v3508
        %v3510 = vpop.xlane.xlu0 %3509
        %v3511 = vsub.f32 %v3238, %v3495
        %v3512 = vsub.f32 %v3288, %v3498
        %v3513 = vsub.f32 %v3338, %v3501
        %v3514 = vsub.f32 %v3388, %v3504
        %v3515 = vsub.f32 %v3438, %v3507
        %v3516 = vsub.f32 %v3488, %v3510
        %v3517 = vmul.f32 %v3511, 1.442695
        %v3518 = vpow.pop %v3517
        %v3519 = vmul.f32 %v3512, 1.442695
        %v3520 = vpow.pop %v3519
        %v3521 = vmul.f32 %v3513, 1.442695
        %v3522 = vpow.pop %v3521
        %v3523 = vmul.f32 %v3514, 1.442695
        %v3524 = vpow.pop %v3523
        %v3525 = vmul.f32 %v3515, 1.442695
        %v3526 = vpow.pop %v3525
        %v3527 = vmul.f32 %v3516, 1.442695
        %v3528 = vpow.pop %v3527
        %v3529 = vsel %vm1225, %v3518, 0.0
        %3530 = vadd.xlane.f32.xlu0 %v3529
        %v3531 = vpop.xlane.xlu0 %3530
        %v3532 = vsel %vm1225, %v3520, 0.0
        %3533 = vadd.xlane.f32.xlu0 %v3532
        %v3534 = vpop.xlane.xlu0 %3533
        %v3535 = vsel %vm1225, %v3522, 0.0
        %3536 = vadd.xlane.f32.xlu0 %v3535
        %v3537 = vpop.xlane.xlu0 %3536
        %v3538 = vsel %vm1225, %v3524, 0.0
        %3539 = vadd.xlane.f32.xlu0 %v3538
        %v3540 = vpop.xlane.xlu0 %3539
        %v3541 = vsel %vm1225, %v3526, 0.0
        %3542 = vadd.xlane.f32.xlu0 %v3541
        %v3543 = vpop.xlane.xlu0 %3542
        %v3544 = vsel %vm1225, %v3528, 0.0
        %3545 = vadd.xlane.f32.xlu0 %v3544
        %v3546 = vpop.xlane.xlu0 %3545
        %v3547 = vrcp.pop %v3531
        %v3548 = vmul.f32 %v3518, %v3547
        %v3549 = vrcp.pop %v3534
        %v3550 = vmul.f32 %v3520, %v3549
        %v3551 = vrcp.pop %v3537
        %v3552 = vmul.f32 %v3522, %v3551
        %v3553 = vrcp.pop %v3540
        %v3554 = vmul.f32 %v3524, %v3553
        %v3555 = vrcp.pop %v3543
        %v3556 = vmul.f32 %v3526, %v3555
        %v3557 = vrcp.pop %v3546
        %v3558 = vmul.f32 %v3528, %v3557
        %v3559 = vpack.c.bf16 %v3548, %v3548
        %v3560 = vpack.c.bf16 %v3550, %v3550
        %v3561 = vpack.c.bf16 %v3552, %v3552
        %v3562 = vpack.c.bf16 %v3554, %v3554
        %v3563 = vpack.c.bf16 %v3556, %v3556
        %v3564 = vpack.c.bf16 %v3558, %v3558
        %3565 = vrot.lane.b32.xlu0 %v1217, 40
        %v3566 = vpop.permute.xlu0 %3565
        %v3568 = vsel %vm1225, %v3559, 0
        %v3571 = vsel %vm1589, %v3566, 0
        %3573 = vmatprep.subr.bf16.mxu0 0
        %3574 = vmatpush1.bf16.msra.mxu0 %v3571
        %3575 = vmatprep.subr.bf16.mxu0 0
        %3576 = vmatpush1.bf16.msra.mxu0 0
        %3577 = vmatprep.subr.bf16.mxu0 0
        %3578 = vmatpush1.bf16.msra.mxu0 0
        %3579 = vmatprep.subr.bf16.mxu0 0
        %3580 = vmatpush1.bf16.msra.mxu0 0
        %3581 = vmatprep.subr.bf16.mxu0 0
        %3582 = vmatpush1.bf16.msra.mxu0 0
        %3583 = vmatprep.subr.bf16.mxu0 0
        %3584 = vmatpush1.bf16.msra.mxu0 0
        %3585 = vmatprep.subr.bf16.mxu0 0
        %3586 = vmatpush1.bf16.msra.mxu0 0
        %3587 = vmatprep.subr.bf16.mxu0 0
        %3588 = vmatpush1.bf16.msra.mxu0 0
        %3589 = vmatprep.subr.bf16.mxu0 0
        %3590 = vmatpush1.bf16.msra.mxu0 0
        %3591 = vmatprep.subr.bf16.mxu0 0
        %3592 = vmatpush1.bf16.msra.mxu0 0
        %3593 = vmatprep.subr.bf16.mxu0 0
        %3594 = vmatpush1.bf16.msra.mxu0 0
        %3595 = vmatprep.subr.bf16.mxu0 0
        %3596 = vmatpush1.bf16.msra.mxu0 0
        %3597 = vmatprep.subr.bf16.mxu0 0
        %3598 = vmatpush1.bf16.msra.mxu0 0
        %3599 = vmatprep.subr.bf16.mxu0 0
        %3600 = vmatpush1.bf16.msra.mxu0 0
        %3601 = vmatprep.subr.bf16.mxu0 0
        %3602 = vmatpush1.bf16.msra.mxu0 0
        %3603 = vmatprep.subr.bf16.mxu0 0
        %3604 = vmatpush1.bf16.msra.mxu0 0
        %3605 = vmatprep.mubr.bf16.mxu0 0
        %3606 = vmatmul.mubr.bf16.gmra.mrb[0].mxu0 %v3568
        %v3607 = vpop.f32.mrb[0].mxu0
        %v3608 = vadd.f32 0.0, %v3607
        %v3609 = vpop.f32.mrb[0].mxu0
        %v3610 = vpop.f32.mrb[0].mxu0
        %v3611 = vpop.f32.mrb[0].mxu0
        %3612 = vdwg.mxu0
        %3613 = vrot.lane.b32.xlu0 %v1218, 40
        %v3614 = vpop.permute.xlu0 %3613
        %v3616 = vsel %vm1225, %v3560, 0
        %v3619 = vsel %vm1589, %v3614, 0
        %3621 = vmatprep.subr.bf16.mxu0 0
        %3622 = vmatpush1.bf16.msra.mxu0 %v3619
        %3623 = vmatprep.subr.bf16.mxu0 0
        %3624 = vmatpush1.bf16.msra.mxu0 0
        %3625 = vmatprep.subr.bf16.mxu0 0
        %3626 = vmatpush1.bf16.msra.mxu0 0
        %3627 = vmatprep.subr.bf16.mxu0 0
        %3628 = vmatpush1.bf16.msra.mxu0 0
        %3629 = vmatprep.subr.bf16.mxu0 0
        %3630 = vmatpush1.bf16.msra.mxu0 0
        %3631 = vmatprep.subr.bf16.mxu0 0
        %3632 = vmatpush1.bf16.msra.mxu0 0
        %3633 = vmatprep.subr.bf16.mxu0 0
        %3634 = vmatpush1.bf16.msra.mxu0 0
        %3635 = vmatprep.subr.bf16.mxu0 0
        %3636 = vmatpush1.bf16.msra.mxu0 0
        %3637 = vmatprep.subr.bf16.mxu0 0
        %3638 = vmatpush1.bf16.msra.mxu0 0
        %3639 = vmatprep.subr.bf16.mxu0 0
        %3640 = vmatpush1.bf16.msra.mxu0 0
        %3641 = vmatprep.subr.bf16.mxu0 0
        %3642 = vmatpush1.bf16.msra.mxu0 0
        %3643 = vmatprep.subr.bf16.mxu0 0
        %3644 = vmatpush1.bf16.msra.mxu0 0
        %3645 = vmatprep.subr.bf16.mxu0 0
        %3646 = vmatpush1.bf16.msra.mxu0 0
        %3647 = vmatprep.subr.bf16.mxu0 0
        %3648 = vmatpush1.bf16.msra.mxu0 0
        %3649 = vmatprep.subr.bf16.mxu0 0
        %3650 = vmatpush1.bf16.msra.mxu0 0
        %3651 = vmatprep.subr.bf16.mxu0 0
        %3652 = vmatpush1.bf16.msra.mxu0 0
        %3653 = vmatprep.mubr.bf16.mxu0 0
        %3654 = vmatmul.mubr.bf16.gmra.mrb[0].mxu0 %v3616
        %v3655 = vpop.f32.mrb[0].mxu0
        %v3656 = vadd.f32 0.0, %v3655
        %v3657 = vpop.f32.mrb[0].mxu0
        %v3658 = vpop.f32.mrb[0].mxu0
        %v3659 = vpop.f32.mrb[0].mxu0
        %3660 = vdwg.mxu0
        %3661 = vrot.lane.b32.xlu0 %v1219, 40
        %v3662 = vpop.permute.xlu0 %3661
        %v3664 = vsel %vm1225, %v3561, 0
        %v3667 = vsel %vm1589, %v3662, 0
        %3669 = vmatprep.subr.bf16.mxu0 0
        %3670 = vmatpush1.bf16.msra.mxu0 %v3667
        %3671 = vmatprep.subr.bf16.mxu0 0
        %3672 = vmatpush1.bf16.msra.mxu0 0
        %3673 = vmatprep.subr.bf16.mxu0 0
        %3674 = vmatpush1.bf16.msra.mxu0 0
        %3675 = vmatprep.subr.bf16.mxu0 0
        %3676 = vmatpush1.bf16.msra.mxu0 0
        %3677 = vmatprep.subr.bf16.mxu0 0
        %3678 = vmatpush1.bf16.msra.mxu0 0
        %3679 = vmatprep.subr.bf16.mxu0 0
        %3680 = vmatpush1.bf16.msra.mxu0 0
        %3681 = vmatprep.subr.bf16.mxu0 0
        %3682 = vmatpush1.bf16.msra.mxu0 0
        %3683 = vmatprep.subr.bf16.mxu0 0
        %3684 = vmatpush1.bf16.msra.mxu0 0
        %3685 = vmatprep.subr.bf16.mxu0 0
        %3686 = vmatpush1.bf16.msra.mxu0 0
        %3687 = vmatprep.subr.bf16.mxu0 0
        %3688 = vmatpush1.bf16.msra.mxu0 0
        %3689 = vmatprep.subr.bf16.mxu0 0
        %3690 = vmatpush1.bf16.msra.mxu0 0
        %3691 = vmatprep.subr.bf16.mxu0 0
        %3692 = vmatpush1.bf16.msra.mxu0 0
        %3693 = vmatprep.subr.bf16.mxu0 0
        %3694 = vmatpush1.bf16.msra.mxu0 0
        %3695 = vmatprep.subr.bf16.mxu0 0
        %3696 = vmatpush1.bf16.msra.mxu0 0
        %3697 = vmatprep.subr.bf16.mxu0 0
        %3698 = vmatpush1.bf16.msra.mxu0 0
        %3699 = vmatprep.subr.bf16.mxu0 0
        %3700 = vmatpush1.bf16.msra.mxu0 0
        %3701 = vmatprep.mubr.bf16.mxu0 0
        %3702 = vmatmul.mubr.bf16.gmra.mrb[0].mxu0 %v3664
        %v3703 = vpop.f32.mrb[0].mxu0
        %v3704 = vadd.f32 0.0, %v3703
        %v3705 = vpop.f32.mrb[0].mxu0
        %v3706 = vpop.f32.mrb[0].mxu0
        %v3707 = vpop.f32.mrb[0].mxu0
        %3708 = vdwg.mxu0
        %3709 = vrot.lane.b32.xlu0 %v1220, 40
        %v3710 = vpop.permute.xlu0 %3709
        %v3712 = vsel %vm1225, %v3562, 0
        %v3715 = vsel %vm1589, %v3710, 0
        %3717 = vmatprep.subr.bf16.mxu0 0
        %3718 = vmatpush1.bf16.msra.mxu0 %v3715
        %3719 = vmatprep.subr.bf16.mxu0 0
        %3720 = vmatpush1.bf16.msra.mxu0 0
        %3721 = vmatprep.subr.bf16.mxu0 0
        %3722 = vmatpush1.bf16.msra.mxu0 0
        %3723 = vmatprep.subr.bf16.mxu0 0
        %3724 = vmatpush1.bf16.msra.mxu0 0
        %3725 = vmatprep.subr.bf16.mxu0 0
        %3726 = vmatpush1.bf16.msra.mxu0 0
        %3727 = vmatprep.subr.bf16.mxu0 0
        %3728 = vmatpush1.bf16.msra.mxu0 0
        %3729 = vmatprep.subr.bf16.mxu0 0
        %3730 = vmatpush1.bf16.msra.mxu0 0
        %3731 = vmatprep.subr.bf16.mxu0 0
        %3732 = vmatpush1.bf16.msra.mxu0 0
        %3733 = vmatprep.subr.bf16.mxu0 0
        %3734 = vmatpush1.bf16.msra.mxu0 0
        %3735 = vmatprep.subr.bf16.mxu0 0
        %3736 = vmatpush1.bf16.msra.mxu0 0
        %3737 = vmatprep.subr.bf16.mxu0 0
        %3738 = vmatpush1.bf16.msra.mxu0 0
        %3739 = vmatprep.subr.bf16.mxu0 0
        %3740 = vmatpush1.bf16.msra.mxu0 0
        %3741 = vmatprep.subr.bf16.mxu0 0
        %3742 = vmatpush1.bf16.msra.mxu0 0
        %3743 = vmatprep.subr.bf16.mxu0 0
        %3744 = vmatpush1.bf16.msra.mxu0 0
        %3745 = vmatprep.subr.bf16.mxu0 0
        %3746 = vmatpush1.bf16.msra.mxu0 0
        %3747 = vmatprep.subr.bf16.mxu0 0
        %3748 = vmatpush1.bf16.msra.mxu0 0
        %3749 = vmatprep.mubr.bf16.mxu0 0
        %3750 = vmatmul.mubr.bf16.gmra.mrb[0].mxu0 %v3712
        %v3751 = vpop.f32.mrb[0].mxu0
        %v3752 = vadd.f32 0.0, %v3751
        %v3753 = vpop.f32.mrb[0].mxu0
        %v3754 = vpop.f32.mrb[0].mxu0
        %v3755 = vpop.f32.mrb[0].mxu0
        %3756 = vdwg.mxu0
        %3757 = vrot.lane.b32.xlu0 %v1221, 40
        %v3758 = vpop.permute.xlu0 %3757
        %v3760 = vsel %vm1225, %v3563, 0
        %v3763 = vsel %vm1589, %v3758, 0
        %3765 = vmatprep.subr.bf16.mxu0 0
        %3766 = vmatpush1.bf16.msra.mxu0 %v3763
        %3767 = vmatprep.subr.bf16.mxu0 0
        %3768 = vmatpush1.bf16.msra.mxu0 0
        %3769 = vmatprep.subr.bf16.mxu0 0
        %3770 = vmatpush1.bf16.msra.mxu0 0
        %3771 = vmatprep.subr.bf16.mxu0 0
        %3772 = vmatpush1.bf16.msra.mxu0 0
        %3773 = vmatprep.subr.bf16.mxu0 0
        %3774 = vmatpush1.bf16.msra.mxu0 0
        %3775 = vmatprep.subr.bf16.mxu0 0
        %3776 = vmatpush1.bf16.msra.mxu0 0
        %3777 = vmatprep.subr.bf16.mxu0 0
        %3778 = vmatpush1.bf16.msra.mxu0 0
        %3779 = vmatprep.subr.bf16.mxu0 0
        %3780 = vmatpush1.bf16.msra.mxu0 0
        %3781 = vmatprep.subr.bf16.mxu0 0
        %3782 = vmatpush1.bf16.msra.mxu0 0
        %3783 = vmatprep.subr.bf16.mxu0 0
        %3784 = vmatpush1.bf16.msra.mxu0 0
        %3785 = vmatprep.subr.bf16.mxu0 0
        %3786 = vmatpush1.bf16.msra.mxu0 0
        %3787 = vmatprep.subr.bf16.mxu0 0
        %3788 = vmatpush1.bf16.msra.mxu0 0
        %3789 = vmatprep.subr.bf16.mxu0 0
        %3790 = vmatpush1.bf16.msra.mxu0 0
        %3791 = vmatprep.subr.bf16.mxu0 0
        %3792 = vmatpush1.bf16.msra.mxu0 0
        %3793 = vmatprep.subr.bf16.mxu0 0
        %3794 = vmatpush1.bf16.msra.mxu0 0
        %3795 = vmatprep.subr.bf16.mxu0 0
        %3796 = vmatpush1.bf16.msra.mxu0 0
        %3797 = vmatprep.mubr.bf16.mxu0 0
        %3798 = vmatmul.mubr.bf16.gmra.mrb[0].mxu0 %v3760
        %v3799 = vpop.f32.mrb[0].mxu0
        %v3800 = vadd.f32 0.0, %v3799
        %v3801 = vpop.f32.mrb[0].mxu0
        %v3802 = vpop.f32.mrb[0].mxu0
        %v3803 = vpop.f32.mrb[0].mxu0
        %3804 = vdwg.mxu0
        %3805 = vrot.lane.b32.xlu0 %v1222, 40
        %v3806 = vpop.permute.xlu0 %3805
        %v3808 = vsel %vm1225, %v3564, 0
        %v3811 = vsel %vm1589, %v3806, 0
        %3813 = vmatprep.subr.bf16.mxu0 0
        %3814 = vmatpush1.bf16.msra.mxu0 %v3811
        %3815 = vmatprep.subr.bf16.mxu0 0
        %3816 = vmatpush1.bf16.msra.mxu0 0
        %3817 = vmatprep.subr.bf16.mxu0 0
        %3818 = vmatpush1.bf16.msra.mxu0 0
        %3819 = vmatprep.subr.bf16.mxu0 0
        %3820 = vmatpush1.bf16.msra.mxu0 0
        %3821 = vmatprep.subr.bf16.mxu0 0
        %3822 = vmatpush1.bf16.msra.mxu0 0
        %3823 = vmatprep.subr.bf16.mxu0 0
        %3824 = vmatpush1.bf16.msra.mxu0 0
        %3825 = vmatprep.subr.bf16.mxu0 0
        %3826 = vmatpush1.bf16.msra.mxu0 0
        %3827 = vmatprep.subr.bf16.mxu0 0
        %3828 = vmatpush1.bf16.msra.mxu0 0
        %3829 = vmatprep.subr.bf16.mxu0 0
        %3830 = vmatpush1.bf16.msra.mxu0 0
        %3831 = vmatprep.subr.bf16.mxu0 0
        %3832 = vmatpush1.bf16.msra.mxu0 0
        %3833 = vmatprep.subr.bf16.mxu0 0
        %3834 = vmatpush1.bf16.msra.mxu0 0
        %3835 = vmatprep.subr.bf16.mxu0 0
        %3836 = vmatpush1.bf16.msra.mxu0 0
        %3837 = vmatprep.subr.bf16.mxu0 0
        %3838 = vmatpush1.bf16.msra.mxu0 0
        %3839 = vmatprep.subr.bf16.mxu0 0
        %3840 = vmatpush1.bf16.msra.mxu0 0
        %3841 = vmatprep.subr.bf16.mxu0 0
        %3842 = vmatpush1.bf16.msra.mxu0 0
        %3843 = vmatprep.subr.bf16.mxu0 0
        %3844 = vmatpush1.bf16.msra.mxu0 0
        %3845 = vmatprep.mubr.bf16.mxu0 0
        %3846 = vmatmul.mubr.bf16.gmra.mrb[0].mxu0 %v3808
        %v3847 = vpop.f32.mrb[0].mxu0
        %v3848 = vadd.f32 0.0, %v3847
        %v3849 = vpop.f32.mrb[0].mxu0
        %v3850 = vpop.f32.mrb[0].mxu0
        %v3851 = vpop.f32.mrb[0].mxu0
        %3852 = vdwg.mxu0
        %3859 = vrot.lane.b32.xlu0 %v2288, 8
        %v3860 = vpop.permute.xlu0 %3859
        %3861 = vrot.lane.b32.xlu0 %v2336, 8
        %v3862 = vpop.permute.xlu0 %3861
        %3863 = vrot.lane.b32.xlu0 %v2384, 8
        %v3864 = vpop.permute.xlu0 %3863
        %3865 = vrot.lane.b32.xlu0 %v2432, 8
        %v3866 = vpop.permute.xlu0 %3865
        %3867 = vrot.lane.b32.xlu0 %v2480, 8
        %v3868 = vpop.permute.xlu0 %3867
        %3869 = vrot.lane.b32.xlu0 %v2528, 8
        %v3870 = vpop.permute.xlu0 %3869
        %3883 = vrot.lane.b32.xlu0 %v2948, 16
        %v3884 = vpop.permute.xlu0 %3883
        %3885 = vrot.lane.b32.xlu0 %v2996, 16
        %v3886 = vpop.permute.xlu0 %3885
        %3887 = vrot.lane.b32.xlu0 %v3044, 16
        %v3888 = vpop.permute.xlu0 %3887
        %3889 = vrot.lane.b32.xlu0 %v3092, 16
        %v3890 = vpop.permute.xlu0 %3889
        %3891 = vrot.lane.b32.xlu0 %v3140, 16
        %v3892 = vpop.permute.xlu0 %3891
        %3893 = vrot.lane.b32.xlu0 %v3188, 16
        %v3894 = vpop.permute.xlu0 %3893
        %3907 = vrot.lane.b32.xlu0 %v3608, 24
        %v3908 = vpop.permute.xlu0 %3907
        %3909 = vrot.lane.b32.xlu0 %v3656, 24
        %v3910 = vpop.permute.xlu0 %3909
        %3911 = vrot.lane.b32.xlu0 %v3704, 24
        %v3912 = vpop.permute.xlu0 %3911
        %3913 = vrot.lane.b32.xlu0 %v3752, 24
        %v3914 = vpop.permute.xlu0 %3913
        %3915 = vrot.lane.b32.xlu0 %v3800, 24
        %v3916 = vpop.permute.xlu0 %3915
        %3917 = vrot.lane.b32.xlu0 %v3848, 24
        %v3918 = vpop.permute.xlu0 %3917
        %v3925 = vsel %vm1225, %v1628, %v3860
        %v3926 = vsel %vm1225, %v1676, %v3862
        %v3927 = vsel %vm1225, %v1724, %v3864
        %v3928 = vsel %vm1225, %v1772, %v3866
        %v3929 = vsel %vm1225, %v1820, %v3868
        %v3930 = vsel %vm1225, %v1868, %v3870
        %vm3931 = vcmask 130048
        %v3932 = vsel %vm3931, %v3925, %v3884
        %v3933 = vsel %vm3931, %v3926, %v3886
        %v3934 = vsel %vm3931, %v3927, %v3888
        %v3935 = vsel %vm3931, %v3928, %v3890
        %v3936 = vsel %vm3931, %v3929, %v3892
        %v3937 = vsel %vm3931, %v3930, %v3894
        %vm3938 = vcmask 195584
        %v3939 = vsel %vm3938, %v3932, %v3908
        %v3940 = vsel %vm3938, %v3933, %v3910
        %v3941 = vsel %vm3938, %v3934, %v3912
        %v3942 = vsel %vm3938, %v3935, %v3914
        %v3943 = vsel %vm3938, %v3936, %v3916
        %v3944 = vsel %vm3938, %v3937, %v3918
        %v3945 = vpack.c.bf16 %v3940, %v3939
        %v3946 = vpack.c.bf16 %v3942, %v3941
        %v3947 = vpack.c.bf16 %v3944, %v3943
        %v3948 = vld [vmem:[%s819] sm:$0xf]
        %v3949 = vld [vmem:[%s819 + $0x4] sm:$0xf]
        %v3950 = vld [vmem:[%s819 + $0x8] sm:$0xf]
        %v3951 = vld [vmem:[%s819 + $0xc] sm:$0xf]
        %v3952 = vld [vmem:[%s827] sm:$0x1]
        %v3954 = vlaneseq
        %v3955 = vshrl.u32 %v3954, 7
        %v3956 = vsub.s32 0, %v3955
        %v3957 = vrot.slane %v3952, %v3956
        %v3963 = vunpack.c.l.b16 %v3948
        %v3964 = vunpack.c.l.b16 %v3949
        %v3965 = vunpack.c.l.b16 %v3950
        %v3966 = vunpack.c.l.b16 %v3951
        %v3967 = vpack.c.b16 %v3964, %v3963
        %v3968 = vpack.c.b16 %v3966, %v3965
        %v3972 = vsel %vm1008, %v3945, 0
        %v3975 = vsel %vm1008, %v3946, 0
        %v3978 = vsel %vm1008, %v3947, 0
        %3980 = vmatprep.subr.bf16.mxu0 0
        %3981 = vmatpush1.bf16.msra.mxu0 %v3967
        %3982 = vmatprep.subr.bf16.mxu0 0
        %3983 = vmatpush1.bf16.msra.mxu0 %v3968
        %3984 = vmatprep.subr.bf16.mxu0 0
        %3985 = vmatpush1.bf16.msra.mxu0 0
        %3986 = vmatprep.subr.bf16.mxu0 0
        %3987 = vmatpush1.bf16.msra.mxu0 0
        %3988 = vmatprep.subr.bf16.mxu0 0
        %3989 = vmatpush1.bf16.msra.mxu0 0
        %3990 = vmatprep.subr.bf16.mxu0 0
        %3991 = vmatpush1.bf16.msra.mxu0 0
        %3992 = vmatprep.subr.bf16.mxu0 0
        %3993 = vmatpush1.bf16.msra.mxu0 0
        %3994 = vmatprep.subr.bf16.mxu0 0
        %3995 = vmatpush1.bf16.msra.mxu0 0
        %3996 = vmatprep.subr.bf16.mxu0 0
        %3997 = vmatpush1.bf16.msra.mxu0 0
        %3998 = vmatprep.subr.bf16.mxu0 0
        %3999 = vmatpush1.bf16.msra.mxu0 0
        %4000 = vmatprep.subr.bf16.mxu0 0
        %4001 = vmatpush1.bf16.msra.mxu0 0
        %4002 = vmatprep.subr.bf16.mxu0 0
        %4003 = vmatpush1.bf16.msra.mxu0 0
        %4004 = vmatprep.subr.bf16.mxu0 0
        %4005 = vmatpush1.bf16.msra.mxu0 0
        %4006 = vmatprep.subr.bf16.mxu0 0
        %4007 = vmatpush1.bf16.msra.mxu0 0
        %4008 = vmatprep.subr.bf16.mxu0 0
        %4009 = vmatpush1.bf16.msra.mxu0 0
        %4010 = vmatprep.subr.bf16.mxu0 0
        %4011 = vmatpush1.bf16.msra.mxu0 0
        %4012 = vmatprep.mubr.bf16.mxu0 0
        %4013 = vmatmul.mubr.bf16.gmra.mrb[0].mxu0 %v3972
        %v4014 = vpop.f32.mrb[0].mxu0
        %v4015 = vadd.f32 %v3957, %v4014
        %v4016 = vpop.f32.mrb[0].mxu0
        %v4017 = vpop.f32.mrb[0].mxu0
        %v4018 = vadd.f32 %v3957, %v4017
        %v4019 = vpop.f32.mrb[0].mxu0
        %4020 = vmatprep.mubr.bf16.mxu0 0
        %4021 = vmatmul.mubr.bf16.gmra.mrb[0].mxu0 %v3975
        %v4022 = vpop.f32.mrb[0].mxu0
        %v4023 = vadd.f32 %v3957, %v4022
        %v4024 = vpop.f32.mrb[0].mxu0
        %v4025 = vpop.f32.mrb[0].mxu0
        %v4026 = vadd.f32 %v3957, %v4025
        %v4027 = vpop.f32.mrb[0].mxu0
        %4028 = vmatprep.mubr.bf16.mxu0 0
        %4029 = vmatmul.mubr.bf16.gmra.mrb[0].mxu0 %v3978
        %v4030 = vpop.f32.mrb[0].mxu0
        %v4031 = vadd.f32 %v3957, %v4030
        %v4032 = vpop.f32.mrb[0].mxu0
        %v4033 = vpop.f32.mrb[0].mxu0
        %v4034 = vadd.f32 %v3957, %v4033
        %v4035 = vpop.f32.mrb[0].mxu0
        %4036 = vdwg.mxu0
        %v4037 = vadd.f32 %v1000, %v4015
        %v4038 = vadd.f32 %v1001, %v4018
        %v4039 = vadd.f32 %v1002, %v4023
        %v4040 = vadd.f32 %v1003, %v4026
        %v4041 = vadd.f32 %v1004, %v4031
        %v4042 = vadd.f32 %v1005, %v4034
        %v4043 = vld [vmem:[%s835] sm:$0x1]
        %v4044 = vld [vmem:[%s843] sm:$0x1]
        %v4045 = vsel %vm1008, %v4037, 0.0
        %4046 = vadd.xlane.f32.xlu0 %v4045
        %v4047 = vpop.xlane.xlu0 %4046
        %v4048 = vsel %vm1008, %v4038, 0.0
        %4049 = vadd.xlane.f32.xlu0 %v4048
        %v4050 = vpop.xlane.xlu0 %4049
        %v4051 = vsel %vm1008, %v4039, 0.0
        %4052 = vadd.xlane.f32.xlu0 %v4051
        %v4053 = vpop.xlane.xlu0 %4052
        %v4054 = vsel %vm1008, %v4040, 0.0
        %4055 = vadd.xlane.f32.xlu0 %v4054
        %v4056 = vpop.xlane.xlu0 %4055
        %v4057 = vsel %vm1008, %v4041, 0.0
        %4058 = vadd.xlane.f32.xlu0 %v4057
        %v4059 = vpop.xlane.xlu0 %4058
        %v4060 = vsel %vm1008, %v4042, 0.0
        %4061 = vadd.xlane.f32.xlu0 %v4060
        %v4062 = vpop.xlane.xlu0 %4061
        %v4063 = vmul.f32 %v4047, %v1027
        %v4064 = vmul.f32 %v4050, %v1027
        %v4065 = vmul.f32 %v4053, %v1027
        %v4066 = vmul.f32 %v4056, %v1027
        %v4067 = vmul.f32 %v4059, %v1027
        %v4068 = vmul.f32 %v4062, %v1027
        %v4069 = vsub.f32 %v4037, %v4063
        %v4070 = vsub.f32 %v4038, %v4064
        %v4071 = vsub.f32 %v4039, %v4065
        %v4072 = vsub.f32 %v4040, %v4066
        %v4073 = vsub.f32 %v4041, %v4067
        %v4074 = vsub.f32 %v4042, %v4068
        %v4075 = vmul.f32 %v4069, %v4069
        %v4076 = vmul.f32 %v4070, %v4070
        %v4077 = vmul.f32 %v4071, %v4071
        %v4078 = vmul.f32 %v4072, %v4072
        %v4079 = vmul.f32 %v4073, %v4073
        %v4080 = vmul.f32 %v4074, %v4074
        %v4081 = vsel %vm1008, %v4075, 0.0
        %4082 = vadd.xlane.f32.xlu0 %v4081
        %v4083 = vpop.xlane.xlu0 %4082
        %v4084 = vsel %vm1008, %v4076, 0.0
        %4085 = vadd.xlane.f32.xlu0 %v4084
        %v4086 = vpop.xlane.xlu0 %4085
        %v4087 = vsel %vm1008, %v4077, 0.0
        %4088 = vadd.xlane.f32.xlu0 %v4087
        %v4089 = vpop.xlane.xlu0 %4088
        %v4090 = vsel %vm1008, %v4078, 0.0
        %4091 = vadd.xlane.f32.xlu0 %v4090
        %v4092 = vpop.xlane.xlu0 %4091
        %v4093 = vsel %vm1008, %v4079, 0.0
        %4094 = vadd.xlane.f32.xlu0 %v4093
        %v4095 = vpop.xlane.xlu0 %4094
        %v4096 = vsel %vm1008, %v4080, 0.0
        %4097 = vadd.xlane.f32.xlu0 %v4096
        %v4098 = vpop.xlane.xlu0 %4097
        %v4099 = vmul.f32 %v4083, %v1027
        %v4100 = vmul.f32 %v4086, %v1027
        %v4101 = vmul.f32 %v4089, %v1027
        %v4102 = vmul.f32 %v4092, %v1027
        %v4103 = vmul.f32 %v4095, %v1027
        %v4104 = vmul.f32 %v4098, %v1027
        %v4105 = vadd.f32 %v4099, 1e-05
        %v4106 = vadd.f32 %v4100, 1e-05
        %v4107 = vadd.f32 %v4101, 1e-05
        %v4108 = vadd.f32 %v4102, 1e-05
        %v4109 = vadd.f32 %v4103, 1e-05
        %v4110 = vadd.f32 %v4104, 1e-05
        %v4111 = vrsqrt.pop %v4105
        %v4112 = vrsqrt.pop %v4106
        %v4113 = vrsqrt.pop %v4107
        %v4114 = vrsqrt.pop %v4108
        %v4115 = vrsqrt.pop %v4109
        %v4116 = vrsqrt.pop %v4110
        %v4117 = vmul.f32 %v4069, %v4111
        %v4118 = vmul.f32 %v4070, %v4112
        %v4119 = vmul.f32 %v4071, %v4113
        %v4120 = vmul.f32 %v4072, %v4114
        %v4121 = vmul.f32 %v4073, %v4115
        %v4122 = vmul.f32 %v4074, %v4116
        %v4124 = vlaneseq
        %v4125 = vshrl.u32 %v4124, 7
        %v4126 = vsub.s32 0, %v4125
        %v4127 = vrot.slane %v4043, %v4126
        %v4129 = vmul.f32 %v4117, %v4127
        %v4130 = vmul.f32 %v4118, %v4127
        %v4131 = vmul.f32 %v4119, %v4127
        %v4132 = vmul.f32 %v4120, %v4127
        %v4133 = vmul.f32 %v4121, %v4127
        %v4134 = vmul.f32 %v4122, %v4127
        %v4136 = vlaneseq
        %v4137 = vshrl.u32 %v4136, 7
        %v4138 = vsub.s32 0, %v4137
        %v4139 = vrot.slane %v4044, %v4138
        %v4141 = vadd.f32 %v4129, %v4139
        %v4142 = vadd.f32 %v4130, %v4139
        %v4143 = vadd.f32 %v4131, %v4139
        %v4144 = vadd.f32 %v4132, %v4139
        %v4145 = vadd.f32 %v4133, %v4139
        %v4146 = vadd.f32 %v4134, %v4139
        %v4147 = vpack.c.bf16 %v4142, %v4141
        %v4148 = vpack.c.bf16 %v4144, %v4143
        %v4149 = vpack.c.bf16 %v4146, %v4145
        %v4150 = vld [vmem:[%s852] sm:$0xf]
        %v4151 = vld [vmem:[%s852 + $0x4] sm:$0xf]
        %v4152 = vld [vmem:[%s852 + $0x8] sm:$0xf]
        %v4153 = vld [vmem:[%s852 + $0xc] sm:$0xf]
        %v4154 = vld [vmem:[%s860] sm:$0x1]
        %v4156 = vlaneseq
        %v4157 = vshrl.u32 %v4156, 7
        %v4158 = vsub.s32 0, %v4157
        %v4159 = vrot.slane %v4154, %v4158
        %v4165 = vunpack.c.l.b16 %v4150
        %v4166 = vunpack.c.l.b16 %v4151
        %v4167 = vunpack.c.l.b16 %v4152
        %v4168 = vunpack.c.l.b16 %v4153
        %v4169 = vpack.c.b16 %v4166, %v4165
        %v4170 = vpack.c.b16 %v4168, %v4167
        %v4174 = vsel %vm1008, %v4147, 0
        %v4177 = vsel %vm1008, %v4148, 0
        %v4180 = vsel %vm1008, %v4149, 0
        %4182 = vmatprep.subr.bf16.mxu0 0
        %4183 = vmatpush1.bf16.msra.mxu0 %v4169
        %4184 = vmatprep.subr.bf16.mxu0 0
        %4185 = vmatpush1.bf16.msra.mxu0 %v4170
        %4186 = vmatprep.subr.bf16.mxu0 0
        %4187 = vmatpush1.bf16.msra.mxu0 0
        %4188 = vmatprep.subr.bf16.mxu0 0
        %4189 = vmatpush1.bf16.msra.mxu0 0
        %4190 = vmatprep.subr.bf16.mxu0 0
        %4191 = vmatpush1.bf16.msra.mxu0 0
        %4192 = vmatprep.subr.bf16.mxu0 0
        %4193 = vmatpush1.bf16.msra.mxu0 0
        %4194 = vmatprep.subr.bf16.mxu0 0
        %4195 = vmatpush1.bf16.msra.mxu0 0
        %4196 = vmatprep.subr.bf16.mxu0 0
        %4197 = vmatpush1.bf16.msra.mxu0 0
        %4198 = vmatprep.subr.bf16.mxu0 0
        %4199 = vmatpush1.bf16.msra.mxu0 0
        %4200 = vmatprep.subr.bf16.mxu0 0
        %4201 = vmatpush1.bf16.msra.mxu0 0
        %4202 = vmatprep.subr.bf16.mxu0 0
        %4203 = vmatpush1.bf16.msra.mxu0 0
        %4204 = vmatprep.subr.bf16.mxu0 0
        %4205 = vmatpush1.bf16.msra.mxu0 0
        %4206 = vmatprep.subr.bf16.mxu0 0
        %4207 = vmatpush1.bf16.msra.mxu0 0
        %4208 = vmatprep.subr.bf16.mxu0 0
        %4209 = vmatpush1.bf16.msra.mxu0 0
        %4210 = vmatprep.subr.bf16.mxu0 0
        %4211 = vmatpush1.bf16.msra.mxu0 0
        %4212 = vmatprep.subr.bf16.mxu0 0
        %4213 = vmatpush1.bf16.msra.mxu0 0
        %4214 = vmatprep.mubr.bf16.mxu0 0
        %4215 = vmatmul.mubr.bf16.gmra.mrb[0].mxu0 %v4174
        %v4216 = vpop.f32.mrb[0].mxu0
        %v4217 = vadd.f32 %v4159, %v4216
        %v4218 = vpop.f32.mrb[0].mxu0
        %v4219 = vpop.f32.mrb[0].mxu0
        %v4220 = vadd.f32 %v4159, %v4219
        %v4221 = vpop.f32.mrb[0].mxu0
        %4222 = vmatprep.mubr.bf16.mxu0 0
        %4223 = vmatmul.mubr.bf16.gmra.mrb[0].mxu0 %v4177
        %v4224 = vpop.f32.mrb[0].mxu0
        %v4225 = vadd.f32 %v4159, %v4224
        %v4226 = vpop.f32.mrb[0].mxu0
        %v4227 = vpop.f32.mrb[0].mxu0
        %v4228 = vadd.f32 %v4159, %v4227
        %v4229 = vpop.f32.mrb[0].mxu0
        %4230 = vmatprep.mubr.bf16.mxu0 0
        %4231 = vmatmul.mubr.bf16.gmra.mrb[0].mxu0 %v4180
        %v4232 = vpop.f32.mrb[0].mxu0
        %v4233 = vadd.f32 %v4159, %v4232
        %v4234 = vpop.f32.mrb[0].mxu0
        %v4235 = vpop.f32.mrb[0].mxu0
        %v4236 = vadd.f32 %v4159, %v4235
        %v4237 = vpop.f32.mrb[0].mxu0
        %4238 = vdwg.mxu0
        %v4239 = vmul.f32 %v4217, %v4217
        %v4240 = vmul.f32 %v4220, %v4220
        %v4241 = vmul.f32 %v4225, %v4225
        %v4242 = vmul.f32 %v4228, %v4228
        %v4243 = vmul.f32 %v4233, %v4233
        %v4244 = vmul.f32 %v4236, %v4236
        %v4245 = vmul.f32 %v4217, %v4239
        %v4246 = vmul.f32 %v4220, %v4240
        %v4247 = vmul.f32 %v4225, %v4241
        %v4248 = vmul.f32 %v4228, %v4242
        %v4249 = vmul.f32 %v4233, %v4243
        %v4250 = vmul.f32 %v4236, %v4244
        %v4251 = vmul.f32 %v4245, 0.044715
        %v4252 = vmul.f32 %v4246, 0.044715
        %v4253 = vmul.f32 %v4247, 0.044715
        %v4254 = vmul.f32 %v4248, 0.044715
        %v4255 = vmul.f32 %v4249, 0.044715
        %v4256 = vmul.f32 %v4250, 0.044715
        %v4257 = vadd.f32 %v4217, %v4251
        %v4258 = vadd.f32 %v4220, %v4252
        %v4259 = vadd.f32 %v4225, %v4253
        %v4260 = vadd.f32 %v4228, %v4254
        %v4261 = vadd.f32 %v4233, %v4255
        %v4262 = vadd.f32 %v4236, %v4256
        %v4263 = vmul.f32 %v4257, 0.7978846
        %v4264 = vmul.f32 %v4258, 0.7978846
        %v4265 = vmul.f32 %v4259, 0.7978846
        %v4266 = vmul.f32 %v4260, 0.7978846
        %v4267 = vmul.f32 %v4261, 0.7978846
        %v4268 = vmul.f32 %v4262, 0.7978846
        %v4269 = vtanh.pop %v4263
        %v4270 = vtanh.pop %v4264
        %v4271 = vtanh.pop %v4265
        %v4272 = vtanh.pop %v4266
        %v4273 = vtanh.pop %v4267
        %v4274 = vtanh.pop %v4268
        %v4275 = vadd.f32 %v4269, 1.0
        %v4276 = vadd.f32 %v4270, 1.0
        %v4277 = vadd.f32 %v4271, 1.0
        %v4278 = vadd.f32 %v4272, 1.0
        %v4279 = vadd.f32 %v4273, 1.0
        %v4280 = vadd.f32 %v4274, 1.0
        %v4281 = vmul.f32 %v4275, 0.5
        %v4282 = vmul.f32 %v4276, 0.5
        %v4283 = vmul.f32 %v4277, 0.5
        %v4284 = vmul.f32 %v4278, 0.5
        %v4285 = vmul.f32 %v4279, 0.5
        %v4286 = vmul.f32 %v4280, 0.5
        %v4287 = vmul.f32 %v4217, %v4281
        %v4288 = vmul.f32 %v4220, %v4282
        %v4289 = vmul.f32 %v4225, %v4283
        %v4290 = vmul.f32 %v4228, %v4284
        %v4291 = vmul.f32 %v4233, %v4285
        %v4292 = vmul.f32 %v4236, %v4286
        %v4293 = vpack.c.bf16 %v4288, %v4287
        %v4294 = vpack.c.bf16 %v4290, %v4289
        %v4295 = vpack.c.bf16 %v4292, %v4291
        %v4296 = vld [vmem:[%s869] sm:$0xf]
        %v4297 = vld [vmem:[%s869 + $0x4] sm:$0xf]
        %v4298 = vld [vmem:[%s869 + $0x8] sm:$0xf]
        %v4299 = vld [vmem:[%s869 + $0xc] sm:$0xf]
        %v4300 = vld [vmem:[%s869 + $0x10] sm:$0xf]
        %v4301 = vld [vmem:[%s869 + $0x14] sm:$0xf]
        %v4302 = vld [vmem:[%s869 + $0x18] sm:$0xf]
        %v4303 = vld [vmem:[%s869 + $0x1c] sm:$0xf]
        %v4304 = vld [vmem:[%s869 + $0x20] sm:$0xf]
        %v4305 = vld [vmem:[%s869 + $0x24] sm:$0xf]
        %v4306 = vld [vmem:[%s869 + $0x28] sm:$0xf]
        %v4307 = vld [vmem:[%s869 + $0x2c] sm:$0xf]
        %v4308 = vld [vmem:[%s869 + $0x30] sm:$0xf]
        %v4309 = vld [vmem:[%s869 + $0x34] sm:$0xf]
        %v4310 = vld [vmem:[%s869 + $0x38] sm:$0xf]
        %v4311 = vld [vmem:[%s869 + $0x3c] sm:$0xf]
        %v4312 = vld [vmem:[%s877] sm:$0x1]
        %v4314 = vlaneseq
        %v4315 = vshrl.u32 %v4314, 7
        %v4316 = vsub.s32 0, %v4315
        %v4317 = vrot.slane %v4312, %v4316
        %v4335 = vunpack.c.l.b16 %v4296
        %v4336 = vunpack.c.l.b16 %v4297
        %v4337 = vunpack.c.l.b16 %v4298
        %v4338 = vunpack.c.l.b16 %v4299
        %v4339 = vunpack.c.l.b16 %v4300
        %v4340 = vunpack.c.l.b16 %v4301
        %v4341 = vunpack.c.l.b16 %v4302
        %v4342 = vunpack.c.l.b16 %v4303
        %v4343 = vunpack.c.l.b16 %v4304
        %v4344 = vunpack.c.l.b16 %v4305
        %v4345 = vunpack.c.l.b16 %v4306
        %v4346 = vunpack.c.l.b16 %v4307
        %v4347 = vunpack.c.l.b16 %v4308
        %v4348 = vunpack.c.l.b16 %v4309
        %v4349 = vunpack.c.l.b16 %v4310
        %v4350 = vunpack.c.l.b16 %v4311
        %v4351 = vpack.c.b16 %v4336, %v4335
        %v4352 = vpack.c.b16 %v4338, %v4337
        %v4353 = vpack.c.b16 %v4340, %v4339
        %v4354 = vpack.c.b16 %v4342, %v4341
        %v4355 = vpack.c.b16 %v4344, %v4343
        %v4356 = vpack.c.b16 %v4346, %v4345
        %v4357 = vpack.c.b16 %v4348, %v4347
        %v4358 = vpack.c.b16 %v4350, %v4349
        %4367 = vmatprep.subr.bf16.mxu0 0
        %4368 = vmatpush1.bf16.msra.mxu0 %v4351
        %4369 = vmatprep.subr.bf16.mxu0 0
        %4370 = vmatpush1.bf16.msra.mxu0 %v4352
        %4371 = vmatprep.subr.bf16.mxu0 0
        %4372 = vmatpush1.bf16.msra.mxu0 %v4353
        %4373 = vmatprep.subr.bf16.mxu0 0
        %4374 = vmatpush1.bf16.msra.mxu0 %v4354
        %4375 = vmatprep.subr.bf16.mxu0 0
        %4376 = vmatpush1.bf16.msra.mxu0 %v4355
        %4377 = vmatprep.subr.bf16.mxu0 0
        %4378 = vmatpush1.bf16.msra.mxu0 %v4356
        %4379 = vmatprep.subr.bf16.mxu0 0
        %4380 = vmatpush1.bf16.msra.mxu0 %v4357
        %4381 = vmatprep.subr.bf16.mxu0 0
        %4382 = vmatpush1.bf16.msra.mxu0 %v4358
        %4383 = vmatprep.subr.bf16.mxu0 0
        %4384 = vmatpush1.bf16.msra.mxu0 0
        %4385 = vmatprep.subr.bf16.mxu0 0
        %4386 = vmatpush1.bf16.msra.mxu0 0
        %4387 = vmatprep.subr.bf16.mxu0 0
        %4388 = vmatpush1.bf16.msra.mxu0 0
        %4389 = vmatprep.subr.bf16.mxu0 0
        %4390 = vmatpush1.bf16.msra.mxu0 0
        %4391 = vmatprep.subr.bf16.mxu0 0
        %4392 = vmatpush1.bf16.msra.mxu0 0
        %4393 = vmatprep.subr.bf16.mxu0 0
        %4394 = vmatpush1.bf16.msra.mxu0 0
        %4395 = vmatprep.subr.bf16.mxu0 0
        %4396 = vmatpush1.bf16.msra.mxu0 0
        %4397 = vmatprep.subr.bf16.mxu0 0
        %4398 = vmatpush1.bf16.msra.mxu0 0
        %4399 = vmatprep.mubr.bf16.mxu0 0
        %4400 = vmatmul.mubr.bf16.gmra.mrb[0].mxu0 %v4293
        %v4401 = vpop.f32.mrb[0].mxu0
        %v4402 = vadd.f32 %v4317, %v4401
        %v4403 = vpop.f32.mrb[0].mxu0
        %v4404 = vpop.f32.mrb[0].mxu0
        %v4405 = vadd.f32 %v4317, %v4404
        %v4406 = vpop.f32.mrb[0].mxu0
        %4407 = vmatprep.mubr.bf16.mxu0 0
        %4408 = vmatmul.mubr.bf16.gmra.mrb[0].mxu0 %v4294
        %v4409 = vpop.f32.mrb[0].mxu0
        %v4410 = vadd.f32 %v4317, %v4409
        %v4411 = vpop.f32.mrb[0].mxu0
        %v4412 = vpop.f32.mrb[0].mxu0
        %v4413 = vadd.f32 %v4317, %v4412
        %v4414 = vpop.f32.mrb[0].mxu0
        %4415 = vmatprep.mubr.bf16.mxu0 0
        %4416 = vmatmul.mubr.bf16.gmra.mrb[0].mxu0 %v4295
        %v4417 = vpop.f32.mrb[0].mxu0
        %v4418 = vadd.f32 %v4317, %v4417
        %v4419 = vpop.f32.mrb[0].mxu0
        %v4420 = vpop.f32.mrb[0].mxu0
        %v4421 = vadd.f32 %v4317, %v4420
        %v4422 = vpop.f32.mrb[0].mxu0
        %4423 = vdwg.mxu0
        %v4424 = vadd.f32 %v4037, %v4402
        %v4425 = vadd.f32 %v4038, %v4405
        %v4426 = vadd.f32 %v4039, %v4410
        %v4427 = vadd.f32 %v4040, %v4413
        %v4428 = vadd.f32 %v4041, %v4418
        %v4429 = vadd.f32 %v4042, %v4421
        %4430 = vst.msk [vmem:[#allocation2] sm:$0xff] %vm1008, %v4424
        %4431 = vst.msk [vmem:[#allocation2 + $0x8] sm:$0xff] %vm1008, %v4425
        %4432 = vst.msk [vmem:[#allocation2 + $0x10] sm:$0xff] %vm1008, %v4426
        %4433 = vst.msk [vmem:[#allocation2 + $0x18] sm:$0xff] %vm1008, %v4427
        %4434 = vst.msk [vmem:[#allocation2 + $0x20] sm:$0xff] %vm1008, %v4428
        %4435 = vst.msk [vmem:[#allocation2 + $0x28] sm:$0xff] %vm1008, %v4429
        %p4436 = scmp.eq.s32.totalorder %s54, 1
        // Predicated region
        $region153: #{tpu_custom_call.1} parent=83 // pred_check
          %p4437 = pneg %p4436
        $region154: #{tpu_custom_call.1} parent=83 // pred_check_branch
          %4439 = sbr.rel (%p4437) target = $region156
        $region155: #{tpu_custom_call.1} parent=83 // pred_region
          %v4440 = vld [vmem:[#allocation24] sm:$0x1]
          %v4441 = vld [vmem:[#allocation26] sm:$0x1]
          %v4442 = vsel %vm1008, %v4424, 0.0
          %4443 = vadd.xlane.f32.xlu0 %v4442
          %v4444 = vpop.xlane.xlu0 %4443
          %v4445 = vsel %vm1008, %v4425, 0.0
          %4446 = vadd.xlane.f32.xlu0 %v4445
          %v4447 = vpop.xlane.xlu0 %4446
          %v4448 = vsel %vm1008, %v4426, 0.0
          %4449 = vadd.xlane.f32.xlu0 %v4448
          %v4450 = vpop.xlane.xlu0 %4449
          %v4451 = vsel %vm1008, %v4427, 0.0
          %4452 = vadd.xlane.f32.xlu0 %v4451
          %v4453 = vpop.xlane.xlu0 %4452
          %v4454 = vsel %vm1008, %v4428, 0.0
          %4455 = vadd.xlane.f32.xlu0 %v4454
          %v4456 = vpop.xlane.xlu0 %4455
          %v4457 = vsel %vm1008, %v4429, 0.0
          %4458 = vadd.xlane.f32.xlu0 %v4457
          %v4459 = vpop.xlane.xlu0 %4458
          %v4460 = vmul.f32 %v4444, %v1027
          %v4461 = vmul.f32 %v4447, %v1027
          %v4462 = vmul.f32 %v4450, %v1027
          %v4463 = vmul.f32 %v4453, %v1027
          %v4464 = vmul.f32 %v4456, %v1027
          %v4465 = vmul.f32 %v4459, %v1027
          %v4466 = vsub.f32 %v4424, %v4460
          %v4467 = vsub.f32 %v4425, %v4461
          %v4468 = vsub.f32 %v4426, %v4462
          %v4469 = vsub.f32 %v4427, %v4463
          %v4470 = vsub.f32 %v4428, %v4464
          %v4471 = vsub.f32 %v4429, %v4465
          %v4472 = vmul.f32 %v4466, %v4466
          %v4473 = vmul.f32 %v4467, %v4467
          %v4474 = vmul.f32 %v4468, %v4468
          %v4475 = vmul.f32 %v4469, %v4469
          %v4476 = vmul.f32 %v4470, %v4470
          %v4477 = vmul.f32 %v4471, %v4471
          %v4478 = vsel %vm1008, %v4472, 0.0
          %4479 = vadd.xlane.f32.xlu0 %v4478
          %v4480 = vpop.xlane.xlu0 %4479
          %v4481 = vsel %vm1008, %v4473, 0.0
          %4482 = vadd.xlane.f32.xlu0 %v4481
          %v4483 = vpop.xlane.xlu0 %4482
          %v4484 = vsel %vm1008, %v4474, 0.0
          %4485 = vadd.xlane.f32.xlu0 %v4484
          %v4486 = vpop.xlane.xlu0 %4485
          %v4487 = vsel %vm1008, %v4475, 0.0
          %4488 = vadd.xlane.f32.xlu0 %v4487
          %v4489 = vpop.xlane.xlu0 %4488
          %v4490 = vsel %vm1008, %v4476, 0.0
          %4491 = vadd.xlane.f32.xlu0 %v4490
          %v4492 = vpop.xlane.xlu0 %4491
          %v4493 = vsel %vm1008, %v4477, 0.0
          %4494 = vadd.xlane.f32.xlu0 %v4493
          %v4495 = vpop.xlane.xlu0 %4494
          %v4496 = vmul.f32 %v4480, %v1027
          %v4497 = vmul.f32 %v4483, %v1027
          %v4498 = vmul.f32 %v4486, %v1027
          %v4499 = vmul.f32 %v4489, %v1027
          %v4500 = vmul.f32 %v4492, %v1027
          %v4501 = vmul.f32 %v4495, %v1027
          %v4502 = vadd.f32 %v4496, 1e-05
          %v4503 = vadd.f32 %v4497, 1e-05
          %v4504 = vadd.f32 %v4498, 1e-05
          %v4505 = vadd.f32 %v4499, 1e-05
          %v4506 = vadd.f32 %v4500, 1e-05
          %v4507 = vadd.f32 %v4501, 1e-05
          %v4508 = vrsqrt.pop %v4502
          %v4509 = vrsqrt.pop %v4503
          %v4510 = vrsqrt.pop %v4504
          %v4511 = vrsqrt.pop %v4505
          %v4512 = vrsqrt.pop %v4506
          %v4513 = vrsqrt.pop %v4507
          %v4514 = vmul.f32 %v4466, %v4508
          %v4515 = vmul.f32 %v4467, %v4509
          %v4516 = vmul.f32 %v4468, %v4510
          %v4517 = vmul.f32 %v4469, %v4511
          %v4518 = vmul.f32 %v4470, %v4512
          %v4519 = vmul.f32 %v4471, %v4513
          %v4521 = vlaneseq
          %v4522 = vshrl.u32 %v4521, 7
          %v4523 = vsub.s32 0, %v4522
          %v4524 = vrot.slane %v4440, %v4523
          %v4526 = vmul.f32 %v4514, %v4524
          %v4527 = vmul.f32 %v4515, %v4524
          %v4528 = vmul.f32 %v4516, %v4524
          %v4529 = vmul.f32 %v4517, %v4524
          %v4530 = vmul.f32 %v4518, %v4524
          %v4531 = vmul.f32 %v4519, %v4524
          %v4533 = vlaneseq
          %v4534 = vshrl.u32 %v4533, 7
          %v4535 = vsub.s32 0, %v4534
          %v4536 = vrot.slane %v4441, %v4535
          %v4538 = vadd.f32 %v4526, %v4536
          %v4539 = vadd.f32 %v4527, %v4536
          %v4540 = vadd.f32 %v4528, %v4536
          %v4541 = vadd.f32 %v4529, %v4536
          %v4542 = vadd.f32 %v4530, %v4536
          %v4543 = vadd.f32 %v4531, %v4536
          %4544 = vst.msk [vmem:[#allocation29] sm:$0xff] %vm1008, %v4538
          %4545 = vst.msk [vmem:[#allocation29 + $0x8] sm:$0xff] %vm1008, %v4539
          %4546 = vst.msk [vmem:[#allocation29 + $0x10] sm:$0xff] %vm1008, %v4540
          %4547 = vst.msk [vmem:[#allocation29 + $0x18] sm:$0xff] %vm1008, %v4541
          %4548 = vst.msk [vmem:[#allocation29 + $0x20] sm:$0xff] %vm1008, %v4542
          %4549 = vst.msk [vmem:[#allocation29 + $0x28] sm:$0xff] %vm1008, %v4543
        $region156: #{tpu_custom_call.1} parent=83 // pred_fallthru
          _
        // Predicated region
        $region157: #{tpu_custom_call.1} parent=83 // pred_check
          %p4550 = pneg %p480
        $region158: #{tpu_custom_call.1} parent=83 // pred_check_branch
          %4552 = sbr.rel (%p4550) target = $region160
        $region159: #{tpu_custom_call.1} parent=83 // pred_region
          %s4553 = smul.u32 6, %s53
          %s4555 = ssub.s32 768, 768
          %4556 = vsyncadd [#allocation5], %s4555
          %s4557 = smul.addr %s4553, 128
          %s4558 = scalar_lea.hbm %s16, %s4557
          %s4559 = sshll.u32 [#allocation29], 4
          %s4560 = int_to_ptr.vmem [resolvable:$true] %s4559
          %4565 = dma.vmem_to_hbm [thread:$0]  %s4560, 768, %s4558, [#allocation5], 128, 128, 8
        $region160: #{tpu_custom_call.1} parent=83 // pred_fallthru
          _
        // Predicated region
        $region161: #{tpu_custom_call.1} parent=83 // pred_check
          %p4566 = pneg %p480
        $region162: #{tpu_custom_call.1} parent=83 // pred_check_branch
          %4568 = sbr.rel (%p4566) target = $region164
        $region163: #{tpu_custom_call.1} parent=83 // pred_region
          %4569 = dma.done [#allocation5], 768
        $region164: #{tpu_custom_call.1} parent=83 // pred_fallthru
          _
      $region84: #{tpu_custom_call.1} parent=5 // pred_fallthru
        _
      %p4570 = scmp.le.s32.totalorder 2, %s44
      // Predicated region
      $region165: #{tpu_custom_call.1} parent=5 // pred_check
        %p4571 = pneg %p4570
      $region166: #{tpu_custom_call.1} parent=5 // pred_check_branch
        %4573 = sbr.rel (%p4571) target = $region168
      $region167: #{tpu_custom_call.1} parent=5 // pred_region
        %s4574 = ssub.s32 %s44, 2
      $region168: #{tpu_custom_call.1} parent=5 // pred_fallthru
        _
    $region6: #{tpu_custom_call.1} parent=1 // loop_footer
      %s48 = sadd.s32 1, %s44
    $region7: #{tpu_custom_call.1} parent=1 // loop_footer_branch
      %43 = sbr.rel target = $region3
    $region8: #{tpu_custom_call.1} parent=1 // loop_exit
      _
    %4575 = vsyncpa [#allocation4], 1
    %s4576 = scalar_lea.sflag [#allocation4], 1
    %4577 = vsyncpa %s4576, 1
    %4578 = vsyncpa [#allocation7], 1
    %s4579 = scalar_lea.sflag [#allocation7], 1
    %4580 = vsyncpa %s4579, 1
    %4581 = vsyncpa [#allocation10], 1
    %s4582 = scalar_lea.sflag [#allocation10], 1
    %4583 = vsyncpa %s4582, 1
    %4584 = vsyncpa [#allocation13], 1
    %s4585 = scalar_lea.sflag [#allocation13], 1
    %4586 = vsyncpa %s4585, 1
    %4587 = vsyncpa [#allocation16], 1
    %s4588 = scalar_lea.sflag [#allocation16], 1
    %4589 = vsyncpa %s4588, 1
    %4590 = vsyncpa [#allocation19], 1
    %s4591 = scalar_lea.sflag [#allocation19], 1
    %4592 = vsyncpa %s4591, 1
    %4593 = vsyncpa [#allocation22], 1
    %s4594 = scalar_lea.sflag [#allocation22], 1
    %4595 = vsyncpa %s4594, 1
    %4596 = vsyncpa [#allocation25], 1
    %4597 = vsyncpa [#allocation28], 1
    %4598 = vsyncpa [#allocation5], 1
    %s4599 = scalar_lea.sflag [#allocation5], 1
    %4600 = vsyncpa %s4599, 1

</llo_original>
